<compile_context>
chip_gen: v7x
topology: tpu7x:2x2x1
jax: 0.10.0
libtpu: 0.0.40
codegen_flags: <defaults>
</compile_context>

<pallas_src>
import functools

import jax
import jax.numpy as jnp
from jax.experimental import pallas as pl
from jax.experimental.pallas import tpu as pltpu


# ---------------------------------------------------------------------------
# Deterministic parameter init (mirrors nn.init.orthogonal_ + zero bias)
# ---------------------------------------------------------------------------
def orthogonal(key, shape, gain=1.0, dtype=jnp.float32):
    """Orthogonal init for a (out_features, in_features) weight, PyTorch-style."""
    rows, cols = shape
    n_big, n_small = max(rows, cols), min(rows, cols)
    a = jax.random.normal(key, (n_big, n_small), dtype=jnp.float32)
    q, r = jnp.linalg.qr(a)
    d = jnp.sign(jnp.diagonal(r))          # sign correction (as torch does)
    q = q * d[None, :]
    if rows < cols:
        q = q.T
    return (gain * q[:rows, :cols]).astype(dtype)


def make_critic_params(key, state_dim, hidden_width):
    k1, k2, k3 = jax.random.split(key, 3)
    # PyTorch Linear weight is (out, in); store fc1/fc2 transposed -> x @ W.
    w1 = orthogonal(k1, (hidden_width, state_dim)).T      # (state_dim, hidden)
    w2 = orthogonal(k2, (hidden_width, hidden_width)).T   # (hidden, hidden)
    w3 = orthogonal(k3, (1, hidden_width))                 # (1, hidden) row
    b1 = jnp.zeros((1, hidden_width), jnp.float32)
    b2 = jnp.zeros((1, hidden_width), jnp.float32)
    b3 = jnp.zeros((1,), jnp.float32)                       # scalar, lives in SMEM
    return w1, b1, w2, b2, w3, b3


# ---------------------------------------------------------------------------
# Pallas kernel: one batch tile of the 3-layer MLP
# ---------------------------------------------------------------------------
def critic_kernel(x_ref, w1_ref, b1_ref, w2_ref, b2_ref, w3_ref, b3_ref, o_ref,
                  *, compute_dtype, use_tanh):
    act = jnp.tanh if use_tanh else (lambda a: jnp.maximum(a, 0.0))

    x = x_ref[...].astype(compute_dtype)                          # (TB, S)

    # fc1 + act : MXU matmul with f32 accumulation, bias/activation in f32.
    h1 = act(jnp.dot(x, w1_ref[...],
                     preferred_element_type=jnp.float32) + b1_ref[...])   # (TB, H)

    # fc2 + act
    h2 = act(jnp.dot(h1.astype(compute_dtype), w2_ref[...],
                     preferred_element_type=jnp.float32) + b2_ref[...])   # (TB, H)

    # fc3: (TB,H)@(H,1) would waste the MXU -> VPU multiply + lane reduction.
    v = jnp.sum(h2 * w3_ref[...], axis=-1) + b3_ref[0]            # (TB,)

    o_ref[...] = v[None, :].astype(o_ref.dtype)                   # (1, TB) lane-dense


# ---------------------------------------------------------------------------
# Wrapper
# ---------------------------------------------------------------------------
@functools.partial(jax.jit,
                   static_argnames=("compute_dtype", "block_b", "use_tanh"))
def critic_forward(s, w1, b1, w2, b2, w3, b3, *,
                   compute_dtype=jnp.bfloat16, block_b=512, use_tanh=True):
    batch, state_dim = s.shape
    hidden = w1.shape[1]

    num_tiles = pl.cdiv(batch, block_b)
    b_pad = num_tiles * block_b
    if b_pad != batch:
        # Pad the tail tile with zeros (results sliced off below).
        s = jnp.pad(s, ((0, b_pad - batch), (0, 0)))

    # One-time cast of the matmul weights to the MXU operand dtype.
    w1c = w1.astype(compute_dtype)
    w2c = w2.astype(compute_dtype)

    itemsize = jnp.dtype(compute_dtype).itemsize
    cost = pl.CostEstimate(
        flops=int(2 * b_pad * (state_dim * hidden + hidden * hidden + hidden)),
        transcendentals=int(2 * b_pad * hidden) if use_tanh else 0,
        bytes_accessed=int(b_pad * state_dim * 4 + b_pad * 4
                           + (w1c.size + w2c.size) * itemsize
                           + (b1.size + b2.size + w3.size + b3.size) * 4),
    )

    kernel = functools.partial(critic_kernel,
                               compute_dtype=compute_dtype, use_tanh=use_tanh)

    out = pl.pallas_call(
        kernel,
        grid=(num_tiles,),
        in_specs=[
            pl.BlockSpec((block_b, state_dim), lambda i: (i, 0)),   # x tiles (streamed)
            pl.BlockSpec((state_dim, hidden), lambda i: (0, 0)),    # w1 (resident)
            pl.BlockSpec((1, hidden), lambda i: (0, 0)),            # b1 (resident)
            pl.BlockSpec((hidden, hidden), lambda i: (0, 0)),       # w2 (resident)
            pl.BlockSpec((1, hidden), lambda i: (0, 0)),            # b2 (resident)
            pl.BlockSpec((1, hidden), lambda i: (0, 0)),            # w3 row (resident)
            pl.BlockSpec(memory_space=pltpu.MemorySpace.SMEM),      # b3 scalar
        ],
        out_specs=pl.BlockSpec((1, block_b), lambda i: (i, 0)),
        out_shape=jax.ShapeDtypeStruct((num_tiles, block_b), jnp.float32),
        compiler_params=pltpu.CompilerParams(
            dimension_semantics=("parallel",)),                     # 2 TCs on v7x
        cost_estimate=cost,
    )(s, w1c, b1, w2c, b2, w3, b3)

    # (num_tiles, TB) lane-dense slab -> (batch, 1) values.
    return out.reshape(-1)[:batch].reshape(batch, 1)


# ---------------------------------------------------------------------------
# Pure-JAX reference for sanity checking
# ---------------------------------------------------------------------------
def critic_ref(s, w1, b1, w2, b2, w3, b3):
    h1 = jnp.tanh(s @ w1 + b1)
    h2 = jnp.tanh(h1 @ w2 + b2)
    return h2 @ w3.T + b3[None, :]


if __name__ == "__main__":
    # Small shapes consistent with the module: state_dim=4, hidden_width=32, batch=2.
    state_dim, hidden_width, batch = 4, 32, 2

    key = jax.random.PRNGKey(0)
    key_params, key_x = jax.random.split(key)

    params = make_critic_params(key_params, state_dim, hidden_width)
    s = jax.random.normal(key_x, (batch, state_dim), dtype=jnp.float32)

    v_ref = critic_ref(s, *params)

    # Full-precision path: matches the f32 reference tightly.
    v_f32 = jax.block_until_ready(
        critic_forward(s, *params, compute_dtype=jnp.float32))
    assert v_f32.shape == (batch, 1)
    assert jnp.allclose(v_f32, v_ref, atol=1e-5, rtol=1e-5)

    # bf16 MXU-operand path (f32 accumulate / f32 tanh) for v6e / v7x.
    v_bf16 = jax.block_until_ready(
        critic_forward(s, *params, compute_dtype=jnp.bfloat16))
    assert v_bf16.shape == (batch, 1)
    assert jnp.allclose(v_bf16, v_ref, atol=2e-2, rtol=2e-2)

    print("KERNEL_OK")
</pallas_src>

<mosaic_0001>
module attributes {stable_mosaic.version = 11 : i64} {
  func.func @critic_kernel(%arg0: i32, %arg1: memref<512x4xf32, #tpu.memory_space<vmem>>, %arg2: memref<4x32xf32, #tpu.memory_space<vmem>>, %arg3: memref<1x32xf32, #tpu.memory_space<vmem>>, %arg4: memref<32x32xf32, #tpu.memory_space<vmem>>, %arg5: memref<1x32xf32, #tpu.memory_space<vmem>>, %arg6: memref<1x32xf32, #tpu.memory_space<vmem>>, %arg7: memref<1xf32, #tpu.memory_space<smem>>, %arg8: memref<1x512xf32, #tpu.memory_space<vmem>>) attributes {dimension_semantics = [#tpu.dimension_semantics<parallel>], iteration_bounds = array<i64: 1>, scalar_prefetch = 0 : i64, scratch_operands = 0 : i64, tpu.core_type = #tpu.core_type<tc>, window_params = [{transform_indices = @transform_0, window_bounds = array<i64: 512, 4>}, {pipeline_mode = #tpu.pipeline_mode<synchronous>, transform_indices = @transform_1, window_bounds = array<i64: 4, 32>}, {pipeline_mode = #tpu.pipeline_mode<synchronous>, transform_indices = @transform_2, window_bounds = array<i64: 1, 32>}, {pipeline_mode = #tpu.pipeline_mode<synchronous>, transform_indices = @transform_3, window_bounds = array<i64: 32, 32>}, {pipeline_mode = #tpu.pipeline_mode<synchronous>, transform_indices = @transform_4, window_bounds = array<i64: 1, 32>}, {pipeline_mode = #tpu.pipeline_mode<synchronous>, transform_indices = @transform_5, window_bounds = array<i64: 1, 32>}, {transform_indices = @transform_6, window_bounds = array<i64: 1>}, {transform_indices = @transform_7, window_bounds = array<i64: 1, 512>}]} {
    %c0 = arith.constant 0 : index
    %c0_0 = arith.constant 0 : index
    %0 = vector.load %arg1[%c0, %c0_0] : memref<512x4xf32, #tpu.memory_space<vmem>>, vector<512x4xf32>
    %c0_1 = arith.constant 0 : index
    %c0_2 = arith.constant 0 : index
    %1 = vector.load %arg2[%c0_1, %c0_2] : memref<4x32xf32, #tpu.memory_space<vmem>>, vector<4x32xf32>
    %cst = arith.constant dense<0.000000e+00> : vector<512x32xf32>
    %2 = tpu.matmul %0, %1, %cst {dimension_numbers = #tpu.dot_dimension_numbers<[1], [0], [0], [1], [0, 0, 1, 1], [], []>} : vector<512x4xf32>, vector<4x32xf32>, vector<512x32xf32> -> vector<512x32xf32>
    %c0_3 = arith.constant 0 : index
    %c0_4 = arith.constant 0 : index
    %3 = vector.load %arg3[%c0_3, %c0_4] : memref<1x32xf32, #tpu.memory_space<vmem>>, vector<1x32xf32>
    %4 = vector.broadcast %3 : vector<1x32xf32> to vector<512x32xf32>
    %5 = arith.addf %2, %4 : vector<512x32xf32>
    %6 = math.tanh %5 : vector<512x32xf32>
    %c0_5 = arith.constant 0 : index
    %c0_6 = arith.constant 0 : index
    %7 = vector.load %arg4[%c0_5, %c0_6] : memref<32x32xf32, #tpu.memory_space<vmem>>, vector<32x32xf32>
    %cst_7 = arith.constant dense<0.000000e+00> : vector<512x32xf32>
    %8 = tpu.matmul %6, %7, %cst_7 {dimension_numbers = #tpu.dot_dimension_numbers<[1], [0], [0], [1], [0, 0, 1, 1], [], []>} : vector<512x32xf32>, vector<32x32xf32>, vector<512x32xf32> -> vector<512x32xf32>
    %c0_8 = arith.constant 0 : index
    %c0_9 = arith.constant 0 : index
    %9 = vector.load %arg5[%c0_8, %c0_9] : memref<1x32xf32, #tpu.memory_space<vmem>>, vector<1x32xf32>
    %10 = vector.broadcast %9 : vector<1x32xf32> to vector<512x32xf32>
    %11 = arith.addf %8, %10 : vector<512x32xf32>
    %12 = math.tanh %11 : vector<512x32xf32>
    %c0_10 = arith.constant 0 : index
    %c0_11 = arith.constant 0 : index
    %13 = vector.load %arg6[%c0_10, %c0_11] : memref<1x32xf32, #tpu.memory_space<vmem>>, vector<1x32xf32>
    %14 = vector.broadcast %13 : vector<1x32xf32> to vector<512x32xf32>
    %15 = arith.mulf %12, %14 : vector<512x32xf32>
    %cst_12 = arith.constant dense<0.000000e+00> : vector<512xf32>
    %16 = vector.multi_reduction <add>, %15, %cst_12 [1] : vector<512x32xf32> to vector<512xf32>
    %c0_13 = arith.constant 0 : index
    %17 = memref.load %arg7[%c0_13] : memref<1xf32, #tpu.memory_space<smem>>
    %18 = vector.broadcast %17 : f32 to vector<512xf32>
    %19 = arith.addf %16, %18 : vector<512xf32>
    %20 = vector.shape_cast %19 : vector<512xf32> to vector<1x512xf32>
    %c0_14 = arith.constant 0 : index
    %c0_15 = arith.constant 0 : index
    %21 = vector.load %arg8[%c0_14, %c0_15] : memref<1x512xf32, #tpu.memory_space<vmem>>, vector<1x512xf32>
    tpu.vector_store %arg8[%c0_14, %c0_15], %20 {strides = array<i32>} : memref<1x512xf32, #tpu.memory_space<vmem>>, vector<1x512xf32>,
    return
  }
  func.func @transform_0(%arg0: i32) -> (i32, i32) {
    %c0_i32 = arith.constant 0 : i32
    %c0_i32_0 = arith.constant 0 : i32
    return %arg0, %c0_i32 : i32, i32
  }
  func.func @transform_1(%arg0: i32) -> (i32, i32) {
    %c0_i32 = arith.constant 0 : i32
    %c0_i32_0 = arith.constant 0 : i32
    %c0_i32_1 = arith.constant 0 : i32
    return %c0_i32, %c0_i32_0 : i32, i32
  }
  func.func @transform_2(%arg0: i32) -> (i32, i32) {
    %c0_i32 = arith.constant 0 : i32
    %c0_i32_0 = arith.constant 0 : i32
    %c0_i32_1 = arith.constant 0 : i32
    return %c0_i32, %c0_i32_0 : i32, i32
  }
  func.func @transform_3(%arg0: i32) -> (i32, i32) {
    %c0_i32 = arith.constant 0 : i32
    %c0_i32_0 = arith.constant 0 : i32
    %c0_i32_1 = arith.constant 0 : i32
    return %c0_i32, %c0_i32_0 : i32, i32
  }
  func.func @transform_4(%arg0: i32) -> (i32, i32) {
    %c0_i32 = arith.constant 0 : i32
    %c0_i32_0 = arith.constant 0 : i32
    %c0_i32_1 = arith.constant 0 : i32
    return %c0_i32, %c0_i32_0 : i32, i32
  }
  func.func @transform_5(%arg0: i32) -> (i32, i32) {
    %c0_i32 = arith.constant 0 : i32
    %c0_i32_0 = arith.constant 0 : i32
    %c0_i32_1 = arith.constant 0 : i32
    return %c0_i32, %c0_i32_0 : i32, i32
  }
  func.func @transform_6(%arg0: i32) -> i32 {
    %c0_i32 = arith.constant 0 : i32
    %c0_i32_0 = arith.constant 0 : i32
    return %c0_i32 : i32
  }
  func.func @transform_7(%arg0: i32) -> (i32, i32) {
    %c0_i32 = arith.constant 0 : i32
    %c0_i32_0 = arith.constant 0 : i32
    return %arg0, %c0_i32 : i32, i32
  }
}

</mosaic_0001>

<llo_original>
// kernel: critic_forward.1
$region0: #{critic_forward.1}
  #allocation0 [shape = 'u32[]', space=smem, size = 0x4, offset = 0x4, fixed_abs, tag = 'smem constant byte address 0x4 - core index']
  #allocation1 [shape = 'u32[144,128]{1,0:T(1,128)}', space=vmem, size = 0x12000, scoped, tag = 'internal scratch']
  #allocation2 [shape = 'f32[1]{0:T(128)S(6)}', space=smem, size = 0x200, scoped, tag = 'scoped memory for critic_forward.1']
  %s0 = inlined_call_operand.vmem [shape: f32[512,4], index: 0, kind: input, shape index: {}]
  %s1 = inlined_call_operand.vmem [shape: f32[4,32], index: 1, kind: input, shape index: {}]
  %s2 = inlined_call_operand.vmem [shape: f32[1,32], index: 2, kind: input, shape index: {}]
  %s3 = inlined_call_operand.vmem [shape: f32[32,32], index: 3, kind: input, shape index: {}]
  %s4 = inlined_call_operand.vmem [shape: f32[1,32], index: 4, kind: input, shape index: {}]
  %s5 = inlined_call_operand.vmem [shape: f32[1,32], index: 5, kind: input, shape index: {}]
  %s6 = inlined_call_operand.<no memory space> [shape: f32[1], index: 6, kind: input, shape index: {}]
  %s7 = inlined_call_operand.vmem [shape: f32[1,512], index: 7, kind: output, shape index: {}]
  %s8 = sld [smem:[#allocation0]]
  $region38: #{critic_forward.1} parent=0
    _
  %s10 = ssub.s32 1, %s8
  %s11 = scalar_select 0, %s10, %s8
  %12 = sst [smem:[#allocation2]] %s6
  // Predicated region
  $region2: #{critic_forward.1} parent=0 // pred_check
    _
  $region3: #{critic_forward.1} parent=0 // pred_check_branch
    %14 = sbr.rel (0) target = $region5
  $region4: #{critic_forward.1} parent=0 // pred_region
    _
  $region5: #{critic_forward.1} parent=0 // pred_fallthru
    _
  // Predicated region
  $region6: #{critic_forward.1} parent=0 // pred_check
    _
  $region7: #{critic_forward.1} parent=0 // pred_check_branch
    %16 = sbr.rel (0) target = $region9
  $region8: #{critic_forward.1} parent=0 // pred_region
    _
  $region9: #{critic_forward.1} parent=0 // pred_fallthru
    _
  // Predicated region
  $region10: #{critic_forward.1} parent=0 // pred_check
    _
  $region11: #{critic_forward.1} parent=0 // pred_check_branch
    %18 = sbr.rel (0) target = $region13
  $region12: #{critic_forward.1} parent=0 // pred_region
    _
  $region13: #{critic_forward.1} parent=0 // pred_fallthru
    _
  // Predicated region
  $region14: #{critic_forward.1} parent=0 // pred_check
    _
  $region15: #{critic_forward.1} parent=0 // pred_check_branch
    %20 = sbr.rel (0) target = $region17
  $region16: #{critic_forward.1} parent=0 // pred_region
    _
  $region17: #{critic_forward.1} parent=0 // pred_fallthru
    _
  // Predicated region
  $region18: #{critic_forward.1} parent=0 // pred_check
    _
  $region19: #{critic_forward.1} parent=0 // pred_check_branch
    %22 = sbr.rel (0) target = $region21
  $region20: #{critic_forward.1} parent=0 // pred_region
    _
  $region21: #{critic_forward.1} parent=0 // pred_fallthru
    _
  // Predicated region
  $region22: #{critic_forward.1} parent=0 // pred_check
    _
  $region23: #{critic_forward.1} parent=0 // pred_check_branch
    %24 = sbr.rel (0) target = $region25
  $region24: #{critic_forward.1} parent=0 // pred_region
    _
  $region25: #{critic_forward.1} parent=0 // pred_fallthru
    _
  // Predicated region
  $region26: #{critic_forward.1} parent=0 // pred_check
    _
  $region27: #{critic_forward.1} parent=0 // pred_check_branch
    %26 = sbr.rel (0) target = $region29
  $region28: #{critic_forward.1} parent=0 // pred_region
    _
  $region29: #{critic_forward.1} parent=0 // pred_fallthru
    _
  %v27 = vld [vmem:[%s0] sm:$0xff]
  %v28 = vld [vmem:[%s0 + $0x8] sm:$0xff]
  %v29 = vld [vmem:[%s0 + $0x10] sm:$0xff]
  %v30 = vld [vmem:[%s0 + $0x18] sm:$0xff]
  %v31 = vld [vmem:[%s0 + $0x20] sm:$0xff]
  %v32 = vld [vmem:[%s0 + $0x28] sm:$0xff]
  %v33 = vld [vmem:[%s0 + $0x30] sm:$0xff]
  %v34 = vld [vmem:[%s0 + $0x38] sm:$0xff]
  %v35 = vld [vmem:[%s0 + $0x40] sm:$0xff]
  %v36 = vld [vmem:[%s0 + $0x48] sm:$0xff]
  %v37 = vld [vmem:[%s0 + $0x50] sm:$0xff]
  %v38 = vld [vmem:[%s0 + $0x58] sm:$0xff]
  %v39 = vld [vmem:[%s0 + $0x60] sm:$0xff]
  %v40 = vld [vmem:[%s0 + $0x68] sm:$0xff]
  %v41 = vld [vmem:[%s0 + $0x70] sm:$0xff]
  %v42 = vld [vmem:[%s0 + $0x78] sm:$0xff]
  %v43 = vld [vmem:[%s0 + $0x80] sm:$0xff]
  %v44 = vld [vmem:[%s0 + $0x88] sm:$0xff]
  %v45 = vld [vmem:[%s0 + $0x90] sm:$0xff]
  %v46 = vld [vmem:[%s0 + $0x98] sm:$0xff]
  %v47 = vld [vmem:[%s0 + $0xa0] sm:$0xff]
  %v48 = vld [vmem:[%s0 + $0xa8] sm:$0xff]
  %v49 = vld [vmem:[%s0 + $0xb0] sm:$0xff]
  %v50 = vld [vmem:[%s0 + $0xb8] sm:$0xff]
  %v51 = vld [vmem:[%s0 + $0xc0] sm:$0xff]
  %v52 = vld [vmem:[%s0 + $0xc8] sm:$0xff]
  %v53 = vld [vmem:[%s0 + $0xd0] sm:$0xff]
  %v54 = vld [vmem:[%s0 + $0xd8] sm:$0xff]
  %v55 = vld [vmem:[%s0 + $0xe0] sm:$0xff]
  %v56 = vld [vmem:[%s0 + $0xe8] sm:$0xff]
  %v57 = vld [vmem:[%s0 + $0xf0] sm:$0xff]
  %v58 = vld [vmem:[%s0 + $0xf8] sm:$0xff]
  %v59 = vld [vmem:[%s0 + $0x100] sm:$0xff]
  %v60 = vld [vmem:[%s0 + $0x108] sm:$0xff]
  %v61 = vld [vmem:[%s0 + $0x110] sm:$0xff]
  %v62 = vld [vmem:[%s0 + $0x118] sm:$0xff]
  %v63 = vld [vmem:[%s0 + $0x120] sm:$0xff]
  %v64 = vld [vmem:[%s0 + $0x128] sm:$0xff]
  %v65 = vld [vmem:[%s0 + $0x130] sm:$0xff]
  %v66 = vld [vmem:[%s0 + $0x138] sm:$0xff]
  %v67 = vld [vmem:[%s0 + $0x140] sm:$0xff]
  %v68 = vld [vmem:[%s0 + $0x148] sm:$0xff]
  %v69 = vld [vmem:[%s0 + $0x150] sm:$0xff]
  %v70 = vld [vmem:[%s0 + $0x158] sm:$0xff]
  %v71 = vld [vmem:[%s0 + $0x160] sm:$0xff]
  %v72 = vld [vmem:[%s0 + $0x168] sm:$0xff]
  %v73 = vld [vmem:[%s0 + $0x170] sm:$0xff]
  %v74 = vld [vmem:[%s0 + $0x178] sm:$0xff]
  %v75 = vld [vmem:[%s0 + $0x180] sm:$0xff]
  %v76 = vld [vmem:[%s0 + $0x188] sm:$0xff]
  %v77 = vld [vmem:[%s0 + $0x190] sm:$0xff]
  %v78 = vld [vmem:[%s0 + $0x198] sm:$0xff]
  %v79 = vld [vmem:[%s0 + $0x1a0] sm:$0xff]
  %v80 = vld [vmem:[%s0 + $0x1a8] sm:$0xff]
  %v81 = vld [vmem:[%s0 + $0x1b0] sm:$0xff]
  %v82 = vld [vmem:[%s0 + $0x1b8] sm:$0xff]
  %v83 = vld [vmem:[%s0 + $0x1c0] sm:$0xff]
  %v84 = vld [vmem:[%s0 + $0x1c8] sm:$0xff]
  %v85 = vld [vmem:[%s0 + $0x1d0] sm:$0xff]
  %v86 = vld [vmem:[%s0 + $0x1d8] sm:$0xff]
  %v87 = vld [vmem:[%s0 + $0x1e0] sm:$0xff]
  %v88 = vld [vmem:[%s0 + $0x1e8] sm:$0xff]
  %v89 = vld [vmem:[%s0 + $0x1f0] sm:$0xff]
  %v90 = vld [vmem:[%s0 + $0x1f8] sm:$0xff]
  %v91 = vld [vmem:[%s1] sm:$0xf]
  %v92 = vld [vmem:[%s2] sm:$0x1]
  %v94 = vlaneseq
  %v95 = vshrl.u32 %v94, 7
  %v96 = vsub.s32 0, %v95
  %v97 = vrot.slane %v92, %v96
  %vm99 = vcmask 31744
  %v101 = vsel %vm99, %v27, 0
  %v104 = vsel %vm99, %v28, 0
  %v107 = vsel %vm99, %v29, 0
  %v110 = vsel %vm99, %v30, 0
  %v113 = vsel %vm99, %v31, 0
  %v116 = vsel %vm99, %v32, 0
  %v119 = vsel %vm99, %v33, 0
  %v122 = vsel %vm99, %v34, 0
  %v125 = vsel %vm99, %v35, 0
  %v128 = vsel %vm99, %v36, 0
  %v131 = vsel %vm99, %v37, 0
  %v134 = vsel %vm99, %v38, 0
  %v137 = vsel %vm99, %v39, 0
  %v140 = vsel %vm99, %v40, 0
  %v143 = vsel %vm99, %v41, 0
  %v146 = vsel %vm99, %v42, 0
  %v149 = vsel %vm99, %v43, 0
  %v152 = vsel %vm99, %v44, 0
  %v155 = vsel %vm99, %v45, 0
  %v158 = vsel %vm99, %v46, 0
  %v161 = vsel %vm99, %v47, 0
  %v164 = vsel %vm99, %v48, 0
  %v167 = vsel %vm99, %v49, 0
  %v170 = vsel %vm99, %v50, 0
  %v173 = vsel %vm99, %v51, 0
  %v176 = vsel %vm99, %v52, 0
  %v179 = vsel %vm99, %v53, 0
  %v182 = vsel %vm99, %v54, 0
  %v185 = vsel %vm99, %v55, 0
  %v188 = vsel %vm99, %v56, 0
  %v191 = vsel %vm99, %v57, 0
  %v194 = vsel %vm99, %v58, 0
  %v197 = vsel %vm99, %v59, 0
  %v200 = vsel %vm99, %v60, 0
  %v203 = vsel %vm99, %v61, 0
  %v206 = vsel %vm99, %v62, 0
  %v209 = vsel %vm99, %v63, 0
  %v212 = vsel %vm99, %v64, 0
  %v215 = vsel %vm99, %v65, 0
  %v218 = vsel %vm99, %v66, 0
  %v221 = vsel %vm99, %v67, 0
  %v224 = vsel %vm99, %v68, 0
  %v227 = vsel %vm99, %v69, 0
  %v230 = vsel %vm99, %v70, 0
  %v233 = vsel %vm99, %v71, 0
  %v236 = vsel %vm99, %v72, 0
  %v239 = vsel %vm99, %v73, 0
  %v242 = vsel %vm99, %v74, 0
  %v245 = vsel %vm99, %v75, 0
  %v248 = vsel %vm99, %v76, 0
  %v251 = vsel %vm99, %v77, 0
  %v254 = vsel %vm99, %v78, 0
  %v257 = vsel %vm99, %v79, 0
  %v260 = vsel %vm99, %v80, 0
  %v263 = vsel %vm99, %v81, 0
  %v266 = vsel %vm99, %v82, 0
  %v269 = vsel %vm99, %v83, 0
  %v272 = vsel %vm99, %v84, 0
  %v275 = vsel %vm99, %v85, 0
  %v278 = vsel %vm99, %v86, 0
  %v281 = vsel %vm99, %v87, 0
  %v284 = vsel %vm99, %v88, 0
  %v287 = vsel %vm99, %v89, 0
  %v290 = vsel %vm99, %v90, 0
  %vm292 = vcmask 1043456
  %v294 = vsel %vm292, %v91, 0
  %296 = vmatprep.subr.mxu0 0.0
  %297 = vmatpush1.msra.mxu0 %v294
  %298 = vmatprep.subr.mxu0 0.0
  %299 = vmatpush1.msra.mxu0 0.0
  %300 = vmatprep.subr.mxu0 0.0
  %301 = vmatpush1.msra.mxu0 0.0
  %302 = vmatprep.subr.mxu0 0.0
  %303 = vmatpush1.msra.mxu0 0.0
  %304 = vmatprep.subr.mxu0 0.0
  %305 = vmatpush1.msra.mxu0 0.0
  %306 = vmatprep.subr.mxu0 0.0
  %307 = vmatpush1.msra.mxu0 0.0
  %308 = vmatprep.subr.mxu0 0.0
  %309 = vmatpush1.msra.mxu0 0.0
  %310 = vmatprep.subr.mxu0 0.0
  %311 = vmatpush1.msra.mxu0 0.0
  %312 = vmatprep.subr.mxu0 0.0
  %313 = vmatpush1.msra.mxu0 0.0
  %314 = vmatprep.subr.mxu0 0.0
  %315 = vmatpush1.msra.mxu0 0.0
  %316 = vmatprep.subr.mxu0 0.0
  %317 = vmatpush1.msra.mxu0 0.0
  %318 = vmatprep.subr.mxu0 0.0
  %319 = vmatpush1.msra.mxu0 0.0
  %320 = vmatprep.subr.mxu0 0.0
  %321 = vmatpush1.msra.mxu0 0.0
  %322 = vmatprep.subr.mxu0 0.0
  %323 = vmatpush1.msra.mxu0 0.0
  %324 = vmatprep.subr.mxu0 0.0
  %325 = vmatpush1.msra.mxu0 0.0
  %326 = vmatprep.subr.mxu0 0.0
  %327 = vmatpush1.msra.mxu0 0.0
  %328 = vmatprep.subr.mxu0 0.0
  %329 = vmatpush1.msra.mxu0 0.0
  %330 = vmatprep.subr.mxu0 0.0
  %331 = vmatpush1.msra.mxu0 0.0
  %332 = vmatprep.subr.mxu0 0.0
  %333 = vmatpush1.msra.mxu0 0.0
  %334 = vmatprep.subr.mxu0 0.0
  %335 = vmatpush1.msra.mxu0 0.0
  %336 = vmatprep.subr.mxu0 0.0
  %337 = vmatpush1.msra.mxu0 0.0
  %338 = vmatprep.subr.mxu0 0.0
  %339 = vmatpush1.msra.mxu0 0.0
  %340 = vmatprep.subr.mxu0 0.0
  %341 = vmatpush1.msra.mxu0 0.0
  %342 = vmatprep.subr.mxu0 0.0
  %343 = vmatpush1.msra.mxu0 0.0
  %344 = vmatprep.subr.mxu0 0.0
  %345 = vmatpush1.msra.mxu0 0.0
  %346 = vmatprep.subr.mxu0 0.0
  %347 = vmatpush1.msra.mxu0 0.0
  %348 = vmatprep.subr.mxu0 0.0
  %349 = vmatpush1.msra.mxu0 0.0
  %350 = vmatprep.subr.mxu0 0.0
  %351 = vmatpush1.msra.mxu0 0.0
  %352 = vmatprep.subr.mxu0 0.0
  %353 = vmatpush1.msra.mxu0 0.0
  %354 = vmatprep.subr.mxu0 0.0
  %355 = vmatpush1.msra.mxu0 0.0
  %356 = vmatprep.subr.mxu0 0.0
  %357 = vmatpush1.msra.mxu0 0.0
  %358 = vmatprep.subr.mxu0 0.0
  %359 = vmatpush1.msra.mxu0 0.0
  %360 = vmatprep.mubr.f32.mxu0 0.0
  %361 = vmatmul.mubr.f32.gmra.mrb[0].mxu0 %v101
  %v362 = vpop.f32.mrb[0].mxu0
  %v363 = vadd.f32 %v97, %v362
  %v364 = vpop.f32.mrb[0].mxu0
  %365 = vmatprep.mubr.f32.mxu0 0.0
  %366 = vmatmul.mubr.f32.gmra.mrb[0].mxu0 %v104
  %v367 = vpop.f32.mrb[0].mxu0
  %v368 = vadd.f32 %v97, %v367
  %v369 = vpop.f32.mrb[0].mxu0
  %370 = vmatprep.mubr.f32.mxu0 0.0
  %371 = vmatmul.mubr.f32.gmra.mrb[0].mxu0 %v107
  %v372 = vpop.f32.mrb[0].mxu0
  %v373 = vadd.f32 %v97, %v372
  %v374 = vpop.f32.mrb[0].mxu0
  %375 = vmatprep.mubr.f32.mxu0 0.0
  %376 = vmatmul.mubr.f32.gmra.mrb[0].mxu0 %v110
  %v377 = vpop.f32.mrb[0].mxu0
  %v378 = vadd.f32 %v97, %v377
  %v379 = vpop.f32.mrb[0].mxu0
  %380 = vmatprep.mubr.f32.mxu0 0.0
  %381 = vmatmul.mubr.f32.gmra.mrb[0].mxu0 %v113
  %v382 = vpop.f32.mrb[0].mxu0
  %v383 = vadd.f32 %v97, %v382
  %v384 = vpop.f32.mrb[0].mxu0
  %385 = vmatprep.mubr.f32.mxu0 0.0
  %386 = vmatmul.mubr.f32.gmra.mrb[0].mxu0 %v116
  %v387 = vpop.f32.mrb[0].mxu0
  %v388 = vadd.f32 %v97, %v387
  %v389 = vpop.f32.mrb[0].mxu0
  %390 = vmatprep.mubr.f32.mxu0 0.0
  %391 = vmatmul.mubr.f32.gmra.mrb[0].mxu0 %v119
  %v392 = vpop.f32.mrb[0].mxu0
  %v393 = vadd.f32 %v97, %v392
  %v394 = vpop.f32.mrb[0].mxu0
  %395 = vmatprep.mubr.f32.mxu0 0.0
  %396 = vmatmul.mubr.f32.gmra.mrb[0].mxu0 %v122
  %v397 = vpop.f32.mrb[0].mxu0
  %v398 = vadd.f32 %v97, %v397
  %v399 = vpop.f32.mrb[0].mxu0
  %400 = vmatprep.mubr.f32.mxu0 0.0
  %401 = vmatmul.mubr.f32.gmra.mrb[0].mxu0 %v125
  %v402 = vpop.f32.mrb[0].mxu0
  %v403 = vadd.f32 %v97, %v402
  %v404 = vpop.f32.mrb[0].mxu0
  %405 = vmatprep.mubr.f32.mxu0 0.0
  %406 = vmatmul.mubr.f32.gmra.mrb[0].mxu0 %v128
  %v407 = vpop.f32.mrb[0].mxu0
  %v408 = vadd.f32 %v97, %v407
  %v409 = vpop.f32.mrb[0].mxu0
  %410 = vmatprep.mubr.f32.mxu0 0.0
  %411 = vmatmul.mubr.f32.gmra.mrb[0].mxu0 %v131
  %v412 = vpop.f32.mrb[0].mxu0
  %v413 = vadd.f32 %v97, %v412
  %v414 = vpop.f32.mrb[0].mxu0
  %415 = vmatprep.mubr.f32.mxu0 0.0
  %416 = vmatmul.mubr.f32.gmra.mrb[0].mxu0 %v134
  %v417 = vpop.f32.mrb[0].mxu0
  %v418 = vadd.f32 %v97, %v417
  %v419 = vpop.f32.mrb[0].mxu0
  %420 = vmatprep.mubr.f32.mxu0 0.0
  %421 = vmatmul.mubr.f32.gmra.mrb[0].mxu0 %v137
  %v422 = vpop.f32.mrb[0].mxu0
  %v423 = vadd.f32 %v97, %v422
  %v424 = vpop.f32.mrb[0].mxu0
  %425 = vmatprep.mubr.f32.mxu0 0.0
  %426 = vmatmul.mubr.f32.gmra.mrb[0].mxu0 %v140
  %v427 = vpop.f32.mrb[0].mxu0
  %v428 = vadd.f32 %v97, %v427
  %v429 = vpop.f32.mrb[0].mxu0
  %430 = vmatprep.mubr.f32.mxu0 0.0
  %431 = vmatmul.mubr.f32.gmra.mrb[0].mxu0 %v143
  %v432 = vpop.f32.mrb[0].mxu0
  %v433 = vadd.f32 %v97, %v432
  %v434 = vpop.f32.mrb[0].mxu0
  %435 = vmatprep.mubr.f32.mxu0 0.0
  %436 = vmatmul.mubr.f32.gmra.mrb[0].mxu0 %v146
  %v437 = vpop.f32.mrb[0].mxu0
  %v438 = vadd.f32 %v97, %v437
  %v439 = vpop.f32.mrb[0].mxu0
  %440 = vmatprep.mubr.f32.mxu0 0.0
  %441 = vmatmul.mubr.f32.gmra.mrb[0].mxu0 %v149
  %v442 = vpop.f32.mrb[0].mxu0
  %v443 = vadd.f32 %v97, %v442
  %v444 = vpop.f32.mrb[0].mxu0
  %445 = vmatprep.mubr.f32.mxu0 0.0
  %446 = vmatmul.mubr.f32.gmra.mrb[0].mxu0 %v152
  %v447 = vpop.f32.mrb[0].mxu0
  %v448 = vadd.f32 %v97, %v447
  %v449 = vpop.f32.mrb[0].mxu0
  %450 = vmatprep.mubr.f32.mxu0 0.0
  %451 = vmatmul.mubr.f32.gmra.mrb[0].mxu0 %v155
  %v452 = vpop.f32.mrb[0].mxu0
  %v453 = vadd.f32 %v97, %v452
  %v454 = vpop.f32.mrb[0].mxu0
  %455 = vmatprep.mubr.f32.mxu0 0.0
  %456 = vmatmul.mubr.f32.gmra.mrb[0].mxu0 %v158
  %v457 = vpop.f32.mrb[0].mxu0
  %v458 = vadd.f32 %v97, %v457
  %v459 = vpop.f32.mrb[0].mxu0
  %460 = vmatprep.mubr.f32.mxu0 0.0
  %461 = vmatmul.mubr.f32.gmra.mrb[0].mxu0 %v161
  %v462 = vpop.f32.mrb[0].mxu0
  %v463 = vadd.f32 %v97, %v462
  %v464 = vpop.f32.mrb[0].mxu0
  %465 = vmatprep.mubr.f32.mxu0 0.0
  %466 = vmatmul.mubr.f32.gmra.mrb[0].mxu0 %v164
  %v467 = vpop.f32.mrb[0].mxu0
  %v468 = vadd.f32 %v97, %v467
  %v469 = vpop.f32.mrb[0].mxu0
  %470 = vmatprep.mubr.f32.mxu0 0.0
  %471 = vmatmul.mubr.f32.gmra.mrb[0].mxu0 %v167
  %v472 = vpop.f32.mrb[0].mxu0
  %v473 = vadd.f32 %v97, %v472
  %v474 = vpop.f32.mrb[0].mxu0
  %475 = vmatprep.mubr.f32.mxu0 0.0
  %476 = vmatmul.mubr.f32.gmra.mrb[0].mxu0 %v170
  %v477 = vpop.f32.mrb[0].mxu0
  %v478 = vadd.f32 %v97, %v477
  %v479 = vpop.f32.mrb[0].mxu0
  %480 = vmatprep.mubr.f32.mxu0 0.0
  %481 = vmatmul.mubr.f32.gmra.mrb[0].mxu0 %v173
  %v482 = vpop.f32.mrb[0].mxu0
  %v483 = vadd.f32 %v97, %v482
  %v484 = vpop.f32.mrb[0].mxu0
  %485 = vmatprep.mubr.f32.mxu0 0.0
  %486 = vmatmul.mubr.f32.gmra.mrb[0].mxu0 %v176
  %v487 = vpop.f32.mrb[0].mxu0
  %v488 = vadd.f32 %v97, %v487
  %v489 = vpop.f32.mrb[0].mxu0
  %490 = vmatprep.mubr.f32.mxu0 0.0
  %491 = vmatmul.mubr.f32.gmra.mrb[0].mxu0 %v179
  %v492 = vpop.f32.mrb[0].mxu0
  %v493 = vadd.f32 %v97, %v492
  %v494 = vpop.f32.mrb[0].mxu0
  %495 = vmatprep.mubr.f32.mxu0 0.0
  %496 = vmatmul.mubr.f32.gmra.mrb[0].mxu0 %v182
  %v497 = vpop.f32.mrb[0].mxu0
  %v498 = vadd.f32 %v97, %v497
  %v499 = vpop.f32.mrb[0].mxu0
  %500 = vmatprep.mubr.f32.mxu0 0.0
  %501 = vmatmul.mubr.f32.gmra.mrb[0].mxu0 %v185
  %v502 = vpop.f32.mrb[0].mxu0
  %v503 = vadd.f32 %v97, %v502
  %v504 = vpop.f32.mrb[0].mxu0
  %505 = vmatprep.mubr.f32.mxu0 0.0
  %506 = vmatmul.mubr.f32.gmra.mrb[0].mxu0 %v188
  %v507 = vpop.f32.mrb[0].mxu0
  %v508 = vadd.f32 %v97, %v507
  %v509 = vpop.f32.mrb[0].mxu0
  %510 = vmatprep.mubr.f32.mxu0 0.0
  %511 = vmatmul.mubr.f32.gmra.mrb[0].mxu0 %v191
  %v512 = vpop.f32.mrb[0].mxu0
  %v513 = vadd.f32 %v97, %v512
  %v514 = vpop.f32.mrb[0].mxu0
  %515 = vmatprep.mubr.f32.mxu0 0.0
  %516 = vmatmul.mubr.f32.gmra.mrb[0].mxu0 %v194
  %v517 = vpop.f32.mrb[0].mxu0
  %v518 = vadd.f32 %v97, %v517
  %v519 = vpop.f32.mrb[0].mxu0
  %520 = vmatprep.mubr.f32.mxu0 0.0
  %521 = vmatmul.mubr.f32.gmra.mrb[0].mxu0 %v197
  %v522 = vpop.f32.mrb[0].mxu0
  %v523 = vadd.f32 %v97, %v522
  %v524 = vpop.f32.mrb[0].mxu0
  %525 = vmatprep.mubr.f32.mxu0 0.0
  %526 = vmatmul.mubr.f32.gmra.mrb[0].mxu0 %v200
  %v527 = vpop.f32.mrb[0].mxu0
  %v528 = vadd.f32 %v97, %v527
  %v529 = vpop.f32.mrb[0].mxu0
  %530 = vmatprep.mubr.f32.mxu0 0.0
  %531 = vmatmul.mubr.f32.gmra.mrb[0].mxu0 %v203
  %v532 = vpop.f32.mrb[0].mxu0
  %v533 = vadd.f32 %v97, %v532
  %v534 = vpop.f32.mrb[0].mxu0
  %535 = vmatprep.mubr.f32.mxu0 0.0
  %536 = vmatmul.mubr.f32.gmra.mrb[0].mxu0 %v206
  %v537 = vpop.f32.mrb[0].mxu0
  %v538 = vadd.f32 %v97, %v537
  %v539 = vpop.f32.mrb[0].mxu0
  %540 = vmatprep.mubr.f32.mxu0 0.0
  %541 = vmatmul.mubr.f32.gmra.mrb[0].mxu0 %v209
  %v542 = vpop.f32.mrb[0].mxu0
  %v543 = vadd.f32 %v97, %v542
  %v544 = vpop.f32.mrb[0].mxu0
  %545 = vmatprep.mubr.f32.mxu0 0.0
  %546 = vmatmul.mubr.f32.gmra.mrb[0].mxu0 %v212
  %v547 = vpop.f32.mrb[0].mxu0
  %v548 = vadd.f32 %v97, %v547
  %v549 = vpop.f32.mrb[0].mxu0
  %550 = vmatprep.mubr.f32.mxu0 0.0
  %551 = vmatmul.mubr.f32.gmra.mrb[0].mxu0 %v215
  %v552 = vpop.f32.mrb[0].mxu0
  %v553 = vadd.f32 %v97, %v552
  %v554 = vpop.f32.mrb[0].mxu0
  %555 = vmatprep.mubr.f32.mxu0 0.0
  %556 = vmatmul.mubr.f32.gmra.mrb[0].mxu0 %v218
  %v557 = vpop.f32.mrb[0].mxu0
  %v558 = vadd.f32 %v97, %v557
  %v559 = vpop.f32.mrb[0].mxu0
  %560 = vmatprep.mubr.f32.mxu0 0.0
  %561 = vmatmul.mubr.f32.gmra.mrb[0].mxu0 %v221
  %v562 = vpop.f32.mrb[0].mxu0
  %v563 = vadd.f32 %v97, %v562
  %v564 = vpop.f32.mrb[0].mxu0
  %565 = vmatprep.mubr.f32.mxu0 0.0
  %566 = vmatmul.mubr.f32.gmra.mrb[0].mxu0 %v224
  %v567 = vpop.f32.mrb[0].mxu0
  %v568 = vadd.f32 %v97, %v567
  %v569 = vpop.f32.mrb[0].mxu0
  %570 = vmatprep.mubr.f32.mxu0 0.0
  %571 = vmatmul.mubr.f32.gmra.mrb[0].mxu0 %v227
  %v572 = vpop.f32.mrb[0].mxu0
  %v573 = vadd.f32 %v97, %v572
  %v574 = vpop.f32.mrb[0].mxu0
  %575 = vmatprep.mubr.f32.mxu0 0.0
  %576 = vmatmul.mubr.f32.gmra.mrb[0].mxu0 %v230
  %v577 = vpop.f32.mrb[0].mxu0
  %v578 = vadd.f32 %v97, %v577
  %v579 = vpop.f32.mrb[0].mxu0
  %580 = vmatprep.mubr.f32.mxu0 0.0
  %581 = vmatmul.mubr.f32.gmra.mrb[0].mxu0 %v233
  %v582 = vpop.f32.mrb[0].mxu0
  %v583 = vadd.f32 %v97, %v582
  %v584 = vpop.f32.mrb[0].mxu0
  %585 = vmatprep.mubr.f32.mxu0 0.0
  %586 = vmatmul.mubr.f32.gmra.mrb[0].mxu0 %v236
  %v587 = vpop.f32.mrb[0].mxu0
  %v588 = vadd.f32 %v97, %v587
  %v589 = vpop.f32.mrb[0].mxu0
  %590 = vmatprep.mubr.f32.mxu0 0.0
  %591 = vmatmul.mubr.f32.gmra.mrb[0].mxu0 %v239
  %v592 = vpop.f32.mrb[0].mxu0
  %v593 = vadd.f32 %v97, %v592
  %v594 = vpop.f32.mrb[0].mxu0
  %595 = vmatprep.mubr.f32.mxu0 0.0
  %596 = vmatmul.mubr.f32.gmra.mrb[0].mxu0 %v242
  %v597 = vpop.f32.mrb[0].mxu0
  %v598 = vadd.f32 %v97, %v597
  %v599 = vpop.f32.mrb[0].mxu0
  %600 = vmatprep.mubr.f32.mxu0 0.0
  %601 = vmatmul.mubr.f32.gmra.mrb[0].mxu0 %v245
  %v602 = vpop.f32.mrb[0].mxu0
  %v603 = vadd.f32 %v97, %v602
  %v604 = vpop.f32.mrb[0].mxu0
  %605 = vmatprep.mubr.f32.mxu0 0.0
  %606 = vmatmul.mubr.f32.gmra.mrb[0].mxu0 %v248
  %v607 = vpop.f32.mrb[0].mxu0
  %v608 = vadd.f32 %v97, %v607
  %v609 = vpop.f32.mrb[0].mxu0
  %610 = vmatprep.mubr.f32.mxu0 0.0
  %611 = vmatmul.mubr.f32.gmra.mrb[0].mxu0 %v251
  %v612 = vpop.f32.mrb[0].mxu0
  %v613 = vadd.f32 %v97, %v612
  %v614 = vpop.f32.mrb[0].mxu0
  %615 = vmatprep.mubr.f32.mxu0 0.0
  %616 = vmatmul.mubr.f32.gmra.mrb[0].mxu0 %v254
  %v617 = vpop.f32.mrb[0].mxu0
  %v618 = vadd.f32 %v97, %v617
  %v619 = vpop.f32.mrb[0].mxu0
  %620 = vmatprep.mubr.f32.mxu0 0.0
  %621 = vmatmul.mubr.f32.gmra.mrb[0].mxu0 %v257
  %v622 = vpop.f32.mrb[0].mxu0
  %v623 = vadd.f32 %v97, %v622
  %v624 = vpop.f32.mrb[0].mxu0
  %625 = vmatprep.mubr.f32.mxu0 0.0
  %626 = vmatmul.mubr.f32.gmra.mrb[0].mxu0 %v260
  %v627 = vpop.f32.mrb[0].mxu0
  %v628 = vadd.f32 %v97, %v627
  %v629 = vpop.f32.mrb[0].mxu0
  %630 = vmatprep.mubr.f32.mxu0 0.0
  %631 = vmatmul.mubr.f32.gmra.mrb[0].mxu0 %v263
  %v632 = vpop.f32.mrb[0].mxu0
  %v633 = vadd.f32 %v97, %v632
  %v634 = vpop.f32.mrb[0].mxu0
  %635 = vmatprep.mubr.f32.mxu0 0.0
  %636 = vmatmul.mubr.f32.gmra.mrb[0].mxu0 %v266
  %v637 = vpop.f32.mrb[0].mxu0
  %v638 = vadd.f32 %v97, %v637
  %v639 = vpop.f32.mrb[0].mxu0
  %640 = vmatprep.mubr.f32.mxu0 0.0
  %641 = vmatmul.mubr.f32.gmra.mrb[0].mxu0 %v269
  %v642 = vpop.f32.mrb[0].mxu0
  %v643 = vadd.f32 %v97, %v642
  %v644 = vpop.f32.mrb[0].mxu0
  %645 = vmatprep.mubr.f32.mxu0 0.0
  %646 = vmatmul.mubr.f32.gmra.mrb[0].mxu0 %v272
  %v647 = vpop.f32.mrb[0].mxu0
  %v648 = vadd.f32 %v97, %v647
  %v649 = vpop.f32.mrb[0].mxu0
  %650 = vmatprep.mubr.f32.mxu0 0.0
  %651 = vmatmul.mubr.f32.gmra.mrb[0].mxu0 %v275
  %v652 = vpop.f32.mrb[0].mxu0
  %v653 = vadd.f32 %v97, %v652
  %v654 = vpop.f32.mrb[0].mxu0
  %655 = vmatprep.mubr.f32.mxu0 0.0
  %656 = vmatmul.mubr.f32.gmra.mrb[0].mxu0 %v278
  %v657 = vpop.f32.mrb[0].mxu0
  %v658 = vadd.f32 %v97, %v657
  %v659 = vpop.f32.mrb[0].mxu0
  %660 = vmatprep.mubr.f32.mxu0 0.0
  %661 = vmatmul.mubr.f32.gmra.mrb[0].mxu0 %v281
  %v662 = vpop.f32.mrb[0].mxu0
  %v663 = vadd.f32 %v97, %v662
  %v664 = vpop.f32.mrb[0].mxu0
  %665 = vmatprep.mubr.f32.mxu0 0.0
  %666 = vmatmul.mubr.f32.gmra.mrb[0].mxu0 %v284
  %v667 = vpop.f32.mrb[0].mxu0
  %v668 = vadd.f32 %v97, %v667
  %v669 = vpop.f32.mrb[0].mxu0
  %670 = vmatprep.mubr.f32.mxu0 0.0
  %671 = vmatmul.mubr.f32.gmra.mrb[0].mxu0 %v287
  %v672 = vpop.f32.mrb[0].mxu0
  %v673 = vadd.f32 %v97, %v672
  %v674 = vpop.f32.mrb[0].mxu0
  %675 = vmatprep.mubr.f32.mxu0 0.0
  %676 = vmatmul.mubr.f32.gmra.mrb[0].mxu0 %v290
  %v677 = vpop.f32.mrb[0].mxu0
  %v678 = vadd.f32 %v97, %v677
  %v679 = vpop.f32.mrb[0].mxu0
  %680 = vdwg.mxu0
  %v681 = vtanh.pop %v363
  %v682 = vtanh.pop %v368
  %v683 = vtanh.pop %v373
  %v684 = vtanh.pop %v378
  %v685 = vtanh.pop %v383
  %v686 = vtanh.pop %v388
  %v687 = vtanh.pop %v393
  %v688 = vtanh.pop %v398
  %v689 = vtanh.pop %v403
  %v690 = vtanh.pop %v408
  %v691 = vtanh.pop %v413
  %v692 = vtanh.pop %v418
  %v693 = vtanh.pop %v423
  %v694 = vtanh.pop %v428
  %v695 = vtanh.pop %v433
  %v696 = vtanh.pop %v438
  %v697 = vtanh.pop %v443
  %v698 = vtanh.pop %v448
  %v699 = vtanh.pop %v453
  %v700 = vtanh.pop %v458
  %v701 = vtanh.pop %v463
  %v702 = vtanh.pop %v468
  %v703 = vtanh.pop %v473
  %v704 = vtanh.pop %v478
  %v705 = vtanh.pop %v483
  %v706 = vtanh.pop %v488
  %v707 = vtanh.pop %v493
  %v708 = vtanh.pop %v498
  %v709 = vtanh.pop %v503
  %v710 = vtanh.pop %v508
  %v711 = vtanh.pop %v513
  %v712 = vtanh.pop %v518
  %v713 = vtanh.pop %v523
  %v714 = vtanh.pop %v528
  %v715 = vtanh.pop %v533
  %v716 = vtanh.pop %v538
  %v717 = vtanh.pop %v543
  %v718 = vtanh.pop %v548
  %v719 = vtanh.pop %v553
  %v720 = vtanh.pop %v558
  %v721 = vtanh.pop %v563
  %v722 = vtanh.pop %v568
  %v723 = vtanh.pop %v573
  %v724 = vtanh.pop %v578
  %v725 = vtanh.pop %v583
  %v726 = vtanh.pop %v588
  %v727 = vtanh.pop %v593
  %v728 = vtanh.pop %v598
  %v729 = vtanh.pop %v603
  %v730 = vtanh.pop %v608
  %v731 = vtanh.pop %v613
  %v732 = vtanh.pop %v618
  %v733 = vtanh.pop %v623
  %v734 = vtanh.pop %v628
  %v735 = vtanh.pop %v633
  %v736 = vtanh.pop %v638
  %v737 = vtanh.pop %v643
  %v738 = vtanh.pop %v648
  %v739 = vtanh.pop %v653
  %v740 = vtanh.pop %v658
  %v741 = vtanh.pop %v663
  %v742 = vtanh.pop %v668
  %v743 = vtanh.pop %v673
  %v744 = vtanh.pop %v678
  %v745 = vld [vmem:[%s3] sm:$0xff]
  %v746 = vld [vmem:[%s3 + $0x8] sm:$0xff]
  %v747 = vld [vmem:[%s3 + $0x10] sm:$0xff]
  %v748 = vld [vmem:[%s3 + $0x18] sm:$0xff]
  %v749 = vld [vmem:[%s4] sm:$0x1]
  %v751 = vlaneseq
  %v752 = vshrl.u32 %v751, 7
  %v753 = vsub.s32 0, %v752
  %v754 = vrot.slane %v749, %v753
  %vm756 = vcmask 261120
  %v758 = vsel %vm756, %v681, 0
  %v761 = vsel %vm756, %v682, 0
  %v764 = vsel %vm756, %v683, 0
  %v767 = vsel %vm756, %v684, 0
  %v770 = vsel %vm756, %v685, 0
  %v773 = vsel %vm756, %v686, 0
  %v776 = vsel %vm756, %v687, 0
  %v779 = vsel %vm756, %v688, 0
  %v782 = vsel %vm756, %v689, 0
  %v785 = vsel %vm756, %v690, 0
  %v788 = vsel %vm756, %v691, 0
  %v791 = vsel %vm756, %v692, 0
  %v794 = vsel %vm756, %v693, 0
  %v797 = vsel %vm756, %v694, 0
  %v800 = vsel %vm756, %v695, 0
  %v803 = vsel %vm756, %v696, 0
  %v806 = vsel %vm756, %v697, 0
  %v809 = vsel %vm756, %v698, 0
  %v812 = vsel %vm756, %v699, 0
  %v815 = vsel %vm756, %v700, 0
  %v818 = vsel %vm756, %v701, 0
  %v821 = vsel %vm756, %v702, 0
  %v824 = vsel %vm756, %v703, 0
  %v827 = vsel %vm756, %v704, 0
  %v830 = vsel %vm756, %v705, 0
  %v833 = vsel %vm756, %v706, 0
  %v836 = vsel %vm756, %v707, 0
  %v839 = vsel %vm756, %v708, 0
  %v842 = vsel %vm756, %v709, 0
  %v845 = vsel %vm756, %v710, 0
  %v848 = vsel %vm756, %v711, 0
  %v851 = vsel %vm756, %v712, 0
  %v854 = vsel %vm756, %v713, 0
  %v857 = vsel %vm756, %v714, 0
  %v860 = vsel %vm756, %v715, 0
  %v863 = vsel %vm756, %v716, 0
  %v866 = vsel %vm756, %v717, 0
  %v869 = vsel %vm756, %v718, 0
  %v872 = vsel %vm756, %v719, 0
  %v875 = vsel %vm756, %v720, 0
  %v878 = vsel %vm756, %v721, 0
  %v881 = vsel %vm756, %v722, 0
  %v884 = vsel %vm756, %v723, 0
  %v887 = vsel %vm756, %v724, 0
  %v890 = vsel %vm756, %v725, 0
  %v893 = vsel %vm756, %v726, 0
  %v896 = vsel %vm756, %v727, 0
  %v899 = vsel %vm756, %v728, 0
  %v902 = vsel %vm756, %v729, 0
  %v905 = vsel %vm756, %v730, 0
  %v908 = vsel %vm756, %v731, 0
  %v911 = vsel %vm756, %v732, 0
  %v914 = vsel %vm756, %v733, 0
  %v917 = vsel %vm756, %v734, 0
  %v920 = vsel %vm756, %v735, 0
  %v923 = vsel %vm756, %v736, 0
  %v926 = vsel %vm756, %v737, 0
  %v929 = vsel %vm756, %v738, 0
  %v932 = vsel %vm756, %v739, 0
  %v935 = vsel %vm756, %v740, 0
  %v938 = vsel %vm756, %v741, 0
  %v941 = vsel %vm756, %v742, 0
  %v944 = vsel %vm756, %v743, 0
  %v947 = vsel %vm756, %v744, 0
  %949 = vmatprep.subr.mxu0 0.0
  %950 = vmatpush1.msra.mxu0 %v745
  %951 = vmatprep.subr.mxu0 0.0
  %952 = vmatpush1.msra.mxu0 %v746
  %953 = vmatprep.subr.mxu0 0.0
  %954 = vmatpush1.msra.mxu0 %v747
  %955 = vmatprep.subr.mxu0 0.0
  %956 = vmatpush1.msra.mxu0 %v748
  %957 = vmatprep.subr.mxu0 0.0
  %958 = vmatpush1.msra.mxu0 0.0
  %959 = vmatprep.subr.mxu0 0.0
  %960 = vmatpush1.msra.mxu0 0.0
  %961 = vmatprep.subr.mxu0 0.0
  %962 = vmatpush1.msra.mxu0 0.0
  %963 = vmatprep.subr.mxu0 0.0
  %964 = vmatpush1.msra.mxu0 0.0
  %965 = vmatprep.subr.mxu0 0.0
  %966 = vmatpush1.msra.mxu0 0.0
  %967 = vmatprep.subr.mxu0 0.0
  %968 = vmatpush1.msra.mxu0 0.0
  %969 = vmatprep.subr.mxu0 0.0
  %970 = vmatpush1.msra.mxu0 0.0
  %971 = vmatprep.subr.mxu0 0.0
  %972 = vmatpush1.msra.mxu0 0.0
  %973 = vmatprep.subr.mxu0 0.0
  %974 = vmatpush1.msra.mxu0 0.0
  %975 = vmatprep.subr.mxu0 0.0
  %976 = vmatpush1.msra.mxu0 0.0
  %977 = vmatprep.subr.mxu0 0.0
  %978 = vmatpush1.msra.mxu0 0.0
  %979 = vmatprep.subr.mxu0 0.0
  %980 = vmatpush1.msra.mxu0 0.0
  %981 = vmatprep.subr.mxu0 0.0
  %982 = vmatpush1.msra.mxu0 0.0
  %983 = vmatprep.subr.mxu0 0.0
  %984 = vmatpush1.msra.mxu0 0.0
  %985 = vmatprep.subr.mxu0 0.0
  %986 = vmatpush1.msra.mxu0 0.0
  %987 = vmatprep.subr.mxu0 0.0
  %988 = vmatpush1.msra.mxu0 0.0
  %989 = vmatprep.subr.mxu0 0.0
  %990 = vmatpush1.msra.mxu0 0.0
  %991 = vmatprep.subr.mxu0 0.0
  %992 = vmatpush1.msra.mxu0 0.0
  %993 = vmatprep.subr.mxu0 0.0
  %994 = vmatpush1.msra.mxu0 0.0
  %995 = vmatprep.subr.mxu0 0.0
  %996 = vmatpush1.msra.mxu0 0.0
  %997 = vmatprep.subr.mxu0 0.0
  %998 = vmatpush1.msra.mxu0 0.0
  %999 = vmatprep.subr.mxu0 0.0
  %1000 = vmatpush1.msra.mxu0 0.0
  %1001 = vmatprep.subr.mxu0 0.0
  %1002 = vmatpush1.msra.mxu0 0.0
  %1003 = vmatprep.subr.mxu0 0.0
  %1004 = vmatpush1.msra.mxu0 0.0
  %1005 = vmatprep.subr.mxu0 0.0
  %1006 = vmatpush1.msra.mxu0 0.0
  %1007 = vmatprep.subr.mxu0 0.0
  %1008 = vmatpush1.msra.mxu0 0.0
  %1009 = vmatprep.subr.mxu0 0.0
  %1010 = vmatpush1.msra.mxu0 0.0
  %1011 = vmatprep.subr.mxu0 0.0
  %1012 = vmatpush1.msra.mxu0 0.0
  %1013 = vmatprep.mubr.f32.mxu0 0.0
  %1014 = vmatmul.mubr.f32.gmra.mrb[0].mxu0 %v758
  %v1015 = vpop.f32.mrb[0].mxu0
  %v1016 = vadd.f32 %v754, %v1015
  %v1017 = vpop.f32.mrb[0].mxu0
  %1018 = vmatprep.mubr.f32.mxu0 0.0
  %1019 = vmatmul.mubr.f32.gmra.mrb[0].mxu0 %v761
  %v1020 = vpop.f32.mrb[0].mxu0
  %v1021 = vadd.f32 %v754, %v1020
  %v1022 = vpop.f32.mrb[0].mxu0
  %1023 = vmatprep.mubr.f32.mxu0 0.0
  %1024 = vmatmul.mubr.f32.gmra.mrb[0].mxu0 %v764
  %v1025 = vpop.f32.mrb[0].mxu0
  %v1026 = vadd.f32 %v754, %v1025
  %v1027 = vpop.f32.mrb[0].mxu0
  %1028 = vmatprep.mubr.f32.mxu0 0.0
  %1029 = vmatmul.mubr.f32.gmra.mrb[0].mxu0 %v767
  %v1030 = vpop.f32.mrb[0].mxu0
  %v1031 = vadd.f32 %v754, %v1030
  %v1032 = vpop.f32.mrb[0].mxu0
  %1033 = vmatprep.mubr.f32.mxu0 0.0
  %1034 = vmatmul.mubr.f32.gmra.mrb[0].mxu0 %v770
  %v1035 = vpop.f32.mrb[0].mxu0
  %v1036 = vadd.f32 %v754, %v1035
  %v1037 = vpop.f32.mrb[0].mxu0
  %1038 = vmatprep.mubr.f32.mxu0 0.0
  %1039 = vmatmul.mubr.f32.gmra.mrb[0].mxu0 %v773
  %v1040 = vpop.f32.mrb[0].mxu0
  %v1041 = vadd.f32 %v754, %v1040
  %v1042 = vpop.f32.mrb[0].mxu0
  %1043 = vmatprep.mubr.f32.mxu0 0.0
  %1044 = vmatmul.mubr.f32.gmra.mrb[0].mxu0 %v776
  %v1045 = vpop.f32.mrb[0].mxu0
  %v1046 = vadd.f32 %v754, %v1045
  %v1047 = vpop.f32.mrb[0].mxu0
  %1048 = vmatprep.mubr.f32.mxu0 0.0
  %1049 = vmatmul.mubr.f32.gmra.mrb[0].mxu0 %v779
  %v1050 = vpop.f32.mrb[0].mxu0
  %v1051 = vadd.f32 %v754, %v1050
  %v1052 = vpop.f32.mrb[0].mxu0
  %1053 = vmatprep.mubr.f32.mxu0 0.0
  %1054 = vmatmul.mubr.f32.gmra.mrb[0].mxu0 %v782
  %v1055 = vpop.f32.mrb[0].mxu0
  %v1056 = vadd.f32 %v754, %v1055
  %v1057 = vpop.f32.mrb[0].mxu0
  %1058 = vmatprep.mubr.f32.mxu0 0.0
  %1059 = vmatmul.mubr.f32.gmra.mrb[0].mxu0 %v785
  %v1060 = vpop.f32.mrb[0].mxu0
  %v1061 = vadd.f32 %v754, %v1060
  %v1062 = vpop.f32.mrb[0].mxu0
  %1063 = vmatprep.mubr.f32.mxu0 0.0
  %1064 = vmatmul.mubr.f32.gmra.mrb[0].mxu0 %v788
  %v1065 = vpop.f32.mrb[0].mxu0
  %v1066 = vadd.f32 %v754, %v1065
  %v1067 = vpop.f32.mrb[0].mxu0
  %1068 = vmatprep.mubr.f32.mxu0 0.0
  %1069 = vmatmul.mubr.f32.gmra.mrb[0].mxu0 %v791
  %v1070 = vpop.f32.mrb[0].mxu0
  %v1071 = vadd.f32 %v754, %v1070
  %v1072 = vpop.f32.mrb[0].mxu0
  %1073 = vmatprep.mubr.f32.mxu0 0.0
  %1074 = vmatmul.mubr.f32.gmra.mrb[0].mxu0 %v794
  %v1075 = vpop.f32.mrb[0].mxu0
  %v1076 = vadd.f32 %v754, %v1075
  %v1077 = vpop.f32.mrb[0].mxu0
  %1078 = vmatprep.mubr.f32.mxu0 0.0
  %1079 = vmatmul.mubr.f32.gmra.mrb[0].mxu0 %v797
  %v1080 = vpop.f32.mrb[0].mxu0
  %v1081 = vadd.f32 %v754, %v1080
  %v1082 = vpop.f32.mrb[0].mxu0
  %1083 = vmatprep.mubr.f32.mxu0 0.0
  %1084 = vmatmul.mubr.f32.gmra.mrb[0].mxu0 %v800
  %v1085 = vpop.f32.mrb[0].mxu0
  %v1086 = vadd.f32 %v754, %v1085
  %v1087 = vpop.f32.mrb[0].mxu0
  %1088 = vmatprep.mubr.f32.mxu0 0.0
  %1089 = vmatmul.mubr.f32.gmra.mrb[0].mxu0 %v803
  %v1090 = vpop.f32.mrb[0].mxu0
  %v1091 = vadd.f32 %v754, %v1090
  %v1092 = vpop.f32.mrb[0].mxu0
  %1093 = vmatprep.mubr.f32.mxu0 0.0
  %1094 = vmatmul.mubr.f32.gmra.mrb[0].mxu0 %v806
  %v1095 = vpop.f32.mrb[0].mxu0
  %v1096 = vadd.f32 %v754, %v1095
  %v1097 = vpop.f32.mrb[0].mxu0
  %1098 = vmatprep.mubr.f32.mxu0 0.0
  %1099 = vmatmul.mubr.f32.gmra.mrb[0].mxu0 %v809
  %v1100 = vpop.f32.mrb[0].mxu0
  %v1101 = vadd.f32 %v754, %v1100
  %v1102 = vpop.f32.mrb[0].mxu0
  %1103 = vmatprep.mubr.f32.mxu0 0.0
  %1104 = vmatmul.mubr.f32.gmra.mrb[0].mxu0 %v812
  %v1105 = vpop.f32.mrb[0].mxu0
  %v1106 = vadd.f32 %v754, %v1105
  %v1107 = vpop.f32.mrb[0].mxu0
  %1108 = vmatprep.mubr.f32.mxu0 0.0
  %1109 = vmatmul.mubr.f32.gmra.mrb[0].mxu0 %v815
  %v1110 = vpop.f32.mrb[0].mxu0
  %v1111 = vadd.f32 %v754, %v1110
  %v1112 = vpop.f32.mrb[0].mxu0
  %1113 = vmatprep.mubr.f32.mxu0 0.0
  %1114 = vmatmul.mubr.f32.gmra.mrb[0].mxu0 %v818
  %v1115 = vpop.f32.mrb[0].mxu0
  %v1116 = vadd.f32 %v754, %v1115
  %v1117 = vpop.f32.mrb[0].mxu0
  %1118 = vmatprep.mubr.f32.mxu0 0.0
  %1119 = vmatmul.mubr.f32.gmra.mrb[0].mxu0 %v821
  %v1120 = vpop.f32.mrb[0].mxu0
  %v1121 = vadd.f32 %v754, %v1120
  %v1122 = vpop.f32.mrb[0].mxu0
  %1123 = vmatprep.mubr.f32.mxu0 0.0
  %1124 = vmatmul.mubr.f32.gmra.mrb[0].mxu0 %v824
  %v1125 = vpop.f32.mrb[0].mxu0
  %v1126 = vadd.f32 %v754, %v1125
  %v1127 = vpop.f32.mrb[0].mxu0
  %1128 = vmatprep.mubr.f32.mxu0 0.0
  %1129 = vmatmul.mubr.f32.gmra.mrb[0].mxu0 %v827
  %v1130 = vpop.f32.mrb[0].mxu0
  %v1131 = vadd.f32 %v754, %v1130
  %v1132 = vpop.f32.mrb[0].mxu0
  %1133 = vmatprep.mubr.f32.mxu0 0.0
  %1134 = vmatmul.mubr.f32.gmra.mrb[0].mxu0 %v830
  %v1135 = vpop.f32.mrb[0].mxu0
  %v1136 = vadd.f32 %v754, %v1135
  %v1137 = vpop.f32.mrb[0].mxu0
  %1138 = vmatprep.mubr.f32.mxu0 0.0
  %1139 = vmatmul.mubr.f32.gmra.mrb[0].mxu0 %v833
  %v1140 = vpop.f32.mrb[0].mxu0
  %v1141 = vadd.f32 %v754, %v1140
  %v1142 = vpop.f32.mrb[0].mxu0
  %1143 = vmatprep.mubr.f32.mxu0 0.0
  %1144 = vmatmul.mubr.f32.gmra.mrb[0].mxu0 %v836
  %v1145 = vpop.f32.mrb[0].mxu0
  %v1146 = vadd.f32 %v754, %v1145
  %v1147 = vpop.f32.mrb[0].mxu0
  %1148 = vmatprep.mubr.f32.mxu0 0.0
  %1149 = vmatmul.mubr.f32.gmra.mrb[0].mxu0 %v839
  %v1150 = vpop.f32.mrb[0].mxu0
  %v1151 = vadd.f32 %v754, %v1150
  %v1152 = vpop.f32.mrb[0].mxu0
  %1153 = vmatprep.mubr.f32.mxu0 0.0
  %1154 = vmatmul.mubr.f32.gmra.mrb[0].mxu0 %v842
  %v1155 = vpop.f32.mrb[0].mxu0
  %v1156 = vadd.f32 %v754, %v1155
  %v1157 = vpop.f32.mrb[0].mxu0
  %1158 = vmatprep.mubr.f32.mxu0 0.0
  %1159 = vmatmul.mubr.f32.gmra.mrb[0].mxu0 %v845
  %v1160 = vpop.f32.mrb[0].mxu0
  %v1161 = vadd.f32 %v754, %v1160
  %v1162 = vpop.f32.mrb[0].mxu0
  %1163 = vmatprep.mubr.f32.mxu0 0.0
  %1164 = vmatmul.mubr.f32.gmra.mrb[0].mxu0 %v848
  %v1165 = vpop.f32.mrb[0].mxu0
  %v1166 = vadd.f32 %v754, %v1165
  %v1167 = vpop.f32.mrb[0].mxu0
  %1168 = vmatprep.mubr.f32.mxu0 0.0
  %1169 = vmatmul.mubr.f32.gmra.mrb[0].mxu0 %v851
  %v1170 = vpop.f32.mrb[0].mxu0
  %v1171 = vadd.f32 %v754, %v1170
  %v1172 = vpop.f32.mrb[0].mxu0
  %1173 = vmatprep.mubr.f32.mxu0 0.0
  %1174 = vmatmul.mubr.f32.gmra.mrb[0].mxu0 %v854
  %v1175 = vpop.f32.mrb[0].mxu0
  %v1176 = vadd.f32 %v754, %v1175
  %v1177 = vpop.f32.mrb[0].mxu0
  %1178 = vmatprep.mubr.f32.mxu0 0.0
  %1179 = vmatmul.mubr.f32.gmra.mrb[0].mxu0 %v857
  %v1180 = vpop.f32.mrb[0].mxu0
  %v1181 = vadd.f32 %v754, %v1180
  %v1182 = vpop.f32.mrb[0].mxu0
  %1183 = vmatprep.mubr.f32.mxu0 0.0
  %1184 = vmatmul.mubr.f32.gmra.mrb[0].mxu0 %v860
  %v1185 = vpop.f32.mrb[0].mxu0
  %v1186 = vadd.f32 %v754, %v1185
  %v1187 = vpop.f32.mrb[0].mxu0
  %1188 = vmatprep.mubr.f32.mxu0 0.0
  %1189 = vmatmul.mubr.f32.gmra.mrb[0].mxu0 %v863
  %v1190 = vpop.f32.mrb[0].mxu0
  %v1191 = vadd.f32 %v754, %v1190
  %v1192 = vpop.f32.mrb[0].mxu0
  %1193 = vmatprep.mubr.f32.mxu0 0.0
  %1194 = vmatmul.mubr.f32.gmra.mrb[0].mxu0 %v866
  %v1195 = vpop.f32.mrb[0].mxu0
  %v1196 = vadd.f32 %v754, %v1195
  %v1197 = vpop.f32.mrb[0].mxu0
  %1198 = vmatprep.mubr.f32.mxu0 0.0
  %1199 = vmatmul.mubr.f32.gmra.mrb[0].mxu0 %v869
  %v1200 = vpop.f32.mrb[0].mxu0
  %v1201 = vadd.f32 %v754, %v1200
  %v1202 = vpop.f32.mrb[0].mxu0
  %1203 = vmatprep.mubr.f32.mxu0 0.0
  %1204 = vmatmul.mubr.f32.gmra.mrb[0].mxu0 %v872
  %v1205 = vpop.f32.mrb[0].mxu0
  %v1206 = vadd.f32 %v754, %v1205
  %v1207 = vpop.f32.mrb[0].mxu0
  %1208 = vmatprep.mubr.f32.mxu0 0.0
  %1209 = vmatmul.mubr.f32.gmra.mrb[0].mxu0 %v875
  %v1210 = vpop.f32.mrb[0].mxu0
  %v1211 = vadd.f32 %v754, %v1210
  %v1212 = vpop.f32.mrb[0].mxu0
  %1213 = vmatprep.mubr.f32.mxu0 0.0
  %1214 = vmatmul.mubr.f32.gmra.mrb[0].mxu0 %v878
  %v1215 = vpop.f32.mrb[0].mxu0
  %v1216 = vadd.f32 %v754, %v1215
  %v1217 = vpop.f32.mrb[0].mxu0
  %1218 = vmatprep.mubr.f32.mxu0 0.0
  %1219 = vmatmul.mubr.f32.gmra.mrb[0].mxu0 %v881
  %v1220 = vpop.f32.mrb[0].mxu0
  %v1221 = vadd.f32 %v754, %v1220
  %v1222 = vpop.f32.mrb[0].mxu0
  %1223 = vmatprep.mubr.f32.mxu0 0.0
  %1224 = vmatmul.mubr.f32.gmra.mrb[0].mxu0 %v884
  %v1225 = vpop.f32.mrb[0].mxu0
  %v1226 = vadd.f32 %v754, %v1225
  %v1227 = vpop.f32.mrb[0].mxu0
  %1228 = vmatprep.mubr.f32.mxu0 0.0
  %1229 = vmatmul.mubr.f32.gmra.mrb[0].mxu0 %v887
  %v1230 = vpop.f32.mrb[0].mxu0
  %v1231 = vadd.f32 %v754, %v1230
  %v1232 = vpop.f32.mrb[0].mxu0
  %1233 = vmatprep.mubr.f32.mxu0 0.0
  %1234 = vmatmul.mubr.f32.gmra.mrb[0].mxu0 %v890
  %v1235 = vpop.f32.mrb[0].mxu0
  %v1236 = vadd.f32 %v754, %v1235
  %v1237 = vpop.f32.mrb[0].mxu0
  %1238 = vmatprep.mubr.f32.mxu0 0.0
  %1239 = vmatmul.mubr.f32.gmra.mrb[0].mxu0 %v893
  %v1240 = vpop.f32.mrb[0].mxu0
  %v1241 = vadd.f32 %v754, %v1240
  %v1242 = vpop.f32.mrb[0].mxu0
  %1243 = vmatprep.mubr.f32.mxu0 0.0
  %1244 = vmatmul.mubr.f32.gmra.mrb[0].mxu0 %v896
  %v1245 = vpop.f32.mrb[0].mxu0
  %v1246 = vadd.f32 %v754, %v1245
  %v1247 = vpop.f32.mrb[0].mxu0
  %1248 = vmatprep.mubr.f32.mxu0 0.0
  %1249 = vmatmul.mubr.f32.gmra.mrb[0].mxu0 %v899
  %v1250 = vpop.f32.mrb[0].mxu0
  %v1251 = vadd.f32 %v754, %v1250
  %v1252 = vpop.f32.mrb[0].mxu0
  %1253 = vmatprep.mubr.f32.mxu0 0.0
  %1254 = vmatmul.mubr.f32.gmra.mrb[0].mxu0 %v902
  %v1255 = vpop.f32.mrb[0].mxu0
  %v1256 = vadd.f32 %v754, %v1255
  %v1257 = vpop.f32.mrb[0].mxu0
  %1258 = vmatprep.mubr.f32.mxu0 0.0
  %1259 = vmatmul.mubr.f32.gmra.mrb[0].mxu0 %v905
  %v1260 = vpop.f32.mrb[0].mxu0
  %v1261 = vadd.f32 %v754, %v1260
  %v1262 = vpop.f32.mrb[0].mxu0
  %1263 = vmatprep.mubr.f32.mxu0 0.0
  %1264 = vmatmul.mubr.f32.gmra.mrb[0].mxu0 %v908
  %v1265 = vpop.f32.mrb[0].mxu0
  %v1266 = vadd.f32 %v754, %v1265
  %v1267 = vpop.f32.mrb[0].mxu0
  %1268 = vmatprep.mubr.f32.mxu0 0.0
  %1269 = vmatmul.mubr.f32.gmra.mrb[0].mxu0 %v911
  %v1270 = vpop.f32.mrb[0].mxu0
  %v1271 = vadd.f32 %v754, %v1270
  %v1272 = vpop.f32.mrb[0].mxu0
  %1273 = vmatprep.mubr.f32.mxu0 0.0
  %1274 = vmatmul.mubr.f32.gmra.mrb[0].mxu0 %v914
  %v1275 = vpop.f32.mrb[0].mxu0
  %v1276 = vadd.f32 %v754, %v1275
  %v1277 = vpop.f32.mrb[0].mxu0
  %1278 = vmatprep.mubr.f32.mxu0 0.0
  %1279 = vmatmul.mubr.f32.gmra.mrb[0].mxu0 %v917
  %v1280 = vpop.f32.mrb[0].mxu0
  %v1281 = vadd.f32 %v754, %v1280
  %v1282 = vpop.f32.mrb[0].mxu0
  %1283 = vmatprep.mubr.f32.mxu0 0.0
  %1284 = vmatmul.mubr.f32.gmra.mrb[0].mxu0 %v920
  %v1285 = vpop.f32.mrb[0].mxu0
  %v1286 = vadd.f32 %v754, %v1285
  %v1287 = vpop.f32.mrb[0].mxu0
  %1288 = vmatprep.mubr.f32.mxu0 0.0
  %1289 = vmatmul.mubr.f32.gmra.mrb[0].mxu0 %v923
  %v1290 = vpop.f32.mrb[0].mxu0
  %v1291 = vadd.f32 %v754, %v1290
  %v1292 = vpop.f32.mrb[0].mxu0
  %1293 = vmatprep.mubr.f32.mxu0 0.0
  %1294 = vmatmul.mubr.f32.gmra.mrb[0].mxu0 %v926
  %v1295 = vpop.f32.mrb[0].mxu0
  %v1296 = vadd.f32 %v754, %v1295
  %v1297 = vpop.f32.mrb[0].mxu0
  %1298 = vmatprep.mubr.f32.mxu0 0.0
  %1299 = vmatmul.mubr.f32.gmra.mrb[0].mxu0 %v929
  %v1300 = vpop.f32.mrb[0].mxu0
  %v1301 = vadd.f32 %v754, %v1300
  %v1302 = vpop.f32.mrb[0].mxu0
  %1303 = vmatprep.mubr.f32.mxu0 0.0
  %1304 = vmatmul.mubr.f32.gmra.mrb[0].mxu0 %v932
  %v1305 = vpop.f32.mrb[0].mxu0
  %v1306 = vadd.f32 %v754, %v1305
  %v1307 = vpop.f32.mrb[0].mxu0
  %1308 = vmatprep.mubr.f32.mxu0 0.0
  %1309 = vmatmul.mubr.f32.gmra.mrb[0].mxu0 %v935
  %v1310 = vpop.f32.mrb[0].mxu0
  %v1311 = vadd.f32 %v754, %v1310
  %v1312 = vpop.f32.mrb[0].mxu0
  %1313 = vmatprep.mubr.f32.mxu0 0.0
  %1314 = vmatmul.mubr.f32.gmra.mrb[0].mxu0 %v938
  %v1315 = vpop.f32.mrb[0].mxu0
  %v1316 = vadd.f32 %v754, %v1315
  %v1317 = vpop.f32.mrb[0].mxu0
  %1318 = vmatprep.mubr.f32.mxu0 0.0
  %1319 = vmatmul.mubr.f32.gmra.mrb[0].mxu0 %v941
  %v1320 = vpop.f32.mrb[0].mxu0
  %v1321 = vadd.f32 %v754, %v1320
  %v1322 = vpop.f32.mrb[0].mxu0
  %1323 = vmatprep.mubr.f32.mxu0 0.0
  %1324 = vmatmul.mubr.f32.gmra.mrb[0].mxu0 %v944
  %v1325 = vpop.f32.mrb[0].mxu0
  %v1326 = vadd.f32 %v754, %v1325
  %v1327 = vpop.f32.mrb[0].mxu0
  %1328 = vmatprep.mubr.f32.mxu0 0.0
  %1329 = vmatmul.mubr.f32.gmra.mrb[0].mxu0 %v947
  %v1330 = vpop.f32.mrb[0].mxu0
  %v1331 = vadd.f32 %v754, %v1330
  %v1332 = vpop.f32.mrb[0].mxu0
  %1333 = vdwg.mxu0
  %v1334 = vtanh.pop %v1016
  %v1335 = vtanh.pop %v1021
  %v1336 = vtanh.pop %v1026
  %v1337 = vtanh.pop %v1031
  %v1338 = vtanh.pop %v1036
  %v1339 = vtanh.pop %v1041
  %v1340 = vtanh.pop %v1046
  %v1341 = vtanh.pop %v1051
  %v1342 = vtanh.pop %v1056
  %v1343 = vtanh.pop %v1061
  %v1344 = vtanh.pop %v1066
  %v1345 = vtanh.pop %v1071
  %v1346 = vtanh.pop %v1076
  %v1347 = vtanh.pop %v1081
  %v1348 = vtanh.pop %v1086
  %v1349 = vtanh.pop %v1091
  %v1350 = vtanh.pop %v1096
  %v1351 = vtanh.pop %v1101
  %v1352 = vtanh.pop %v1106
  %v1353 = vtanh.pop %v1111
  %v1354 = vtanh.pop %v1116
  %v1355 = vtanh.pop %v1121
  %v1356 = vtanh.pop %v1126
  %v1357 = vtanh.pop %v1131
  %v1358 = vtanh.pop %v1136
  %v1359 = vtanh.pop %v1141
  %v1360 = vtanh.pop %v1146
  %v1361 = vtanh.pop %v1151
  %v1362 = vtanh.pop %v1156
  %v1363 = vtanh.pop %v1161
  %v1364 = vtanh.pop %v1166
  %v1365 = vtanh.pop %v1171
  %v1366 = vtanh.pop %v1176
  %v1367 = vtanh.pop %v1181
  %v1368 = vtanh.pop %v1186
  %v1369 = vtanh.pop %v1191
  %v1370 = vtanh.pop %v1196
  %v1371 = vtanh.pop %v1201
  %v1372 = vtanh.pop %v1206
  %v1373 = vtanh.pop %v1211
  %v1374 = vtanh.pop %v1216
  %v1375 = vtanh.pop %v1221
  %v1376 = vtanh.pop %v1226
  %v1377 = vtanh.pop %v1231
  %v1378 = vtanh.pop %v1236
  %v1379 = vtanh.pop %v1241
  %v1380 = vtanh.pop %v1246
  %v1381 = vtanh.pop %v1251
  %v1382 = vtanh.pop %v1256
  %v1383 = vtanh.pop %v1261
  %v1384 = vtanh.pop %v1266
  %v1385 = vtanh.pop %v1271
  %v1386 = vtanh.pop %v1276
  %v1387 = vtanh.pop %v1281
  %v1388 = vtanh.pop %v1286
  %v1389 = vtanh.pop %v1291
  %v1390 = vtanh.pop %v1296
  %v1391 = vtanh.pop %v1301
  %v1392 = vtanh.pop %v1306
  %v1393 = vtanh.pop %v1311
  %v1394 = vtanh.pop %v1316
  %v1395 = vtanh.pop %v1321
  %v1396 = vtanh.pop %v1326
  %v1397 = vtanh.pop %v1331
  %v1398 = vld [vmem:[%s5] sm:$0x1]
  %v1400 = vlaneseq
  %v1401 = vshrl.u32 %v1400, 7
  %v1402 = vsub.s32 0, %v1401
  %v1403 = vrot.slane %v1398, %v1402
  %v1405 = vmul.f32 %v1334, %v1403
  %v1406 = vmul.f32 %v1335, %v1403
  %v1407 = vmul.f32 %v1336, %v1403
  %v1408 = vmul.f32 %v1337, %v1403
  %v1409 = vmul.f32 %v1338, %v1403
  %v1410 = vmul.f32 %v1339, %v1403
  %v1411 = vmul.f32 %v1340, %v1403
  %v1412 = vmul.f32 %v1341, %v1403
  %v1413 = vmul.f32 %v1342, %v1403
  %v1414 = vmul.f32 %v1343, %v1403
  %v1415 = vmul.f32 %v1344, %v1403
  %v1416 = vmul.f32 %v1345, %v1403
  %v1417 = vmul.f32 %v1346, %v1403
  %v1418 = vmul.f32 %v1347, %v1403
  %v1419 = vmul.f32 %v1348, %v1403
  %v1420 = vmul.f32 %v1349, %v1403
  %v1421 = vmul.f32 %v1350, %v1403
  %v1422 = vmul.f32 %v1351, %v1403
  %v1423 = vmul.f32 %v1352, %v1403
  %v1424 = vmul.f32 %v1353, %v1403
  %v1425 = vmul.f32 %v1354, %v1403
  %v1426 = vmul.f32 %v1355, %v1403
  %v1427 = vmul.f32 %v1356, %v1403
  %v1428 = vmul.f32 %v1357, %v1403
  %v1429 = vmul.f32 %v1358, %v1403
  %v1430 = vmul.f32 %v1359, %v1403
  %v1431 = vmul.f32 %v1360, %v1403
  %v1432 = vmul.f32 %v1361, %v1403
  %v1433 = vmul.f32 %v1362, %v1403
  %v1434 = vmul.f32 %v1363, %v1403
  %v1435 = vmul.f32 %v1364, %v1403
  %v1436 = vmul.f32 %v1365, %v1403
  %v1437 = vmul.f32 %v1366, %v1403
  %v1438 = vmul.f32 %v1367, %v1403
  %v1439 = vmul.f32 %v1368, %v1403
  %v1440 = vmul.f32 %v1369, %v1403
  %v1441 = vmul.f32 %v1370, %v1403
  %v1442 = vmul.f32 %v1371, %v1403
  %v1443 = vmul.f32 %v1372, %v1403
  %v1444 = vmul.f32 %v1373, %v1403
  %v1445 = vmul.f32 %v1374, %v1403
  %v1446 = vmul.f32 %v1375, %v1403
  %v1447 = vmul.f32 %v1376, %v1403
  %v1448 = vmul.f32 %v1377, %v1403
  %v1449 = vmul.f32 %v1378, %v1403
  %v1450 = vmul.f32 %v1379, %v1403
  %v1451 = vmul.f32 %v1380, %v1403
  %v1452 = vmul.f32 %v1381, %v1403
  %v1453 = vmul.f32 %v1382, %v1403
  %v1454 = vmul.f32 %v1383, %v1403
  %v1455 = vmul.f32 %v1384, %v1403
  %v1456 = vmul.f32 %v1385, %v1403
  %v1457 = vmul.f32 %v1386, %v1403
  %v1458 = vmul.f32 %v1387, %v1403
  %v1459 = vmul.f32 %v1388, %v1403
  %v1460 = vmul.f32 %v1389, %v1403
  %v1461 = vmul.f32 %v1390, %v1403
  %v1462 = vmul.f32 %v1391, %v1403
  %v1463 = vmul.f32 %v1392, %v1403
  %v1464 = vmul.f32 %v1393, %v1403
  %v1465 = vmul.f32 %v1394, %v1403
  %v1466 = vmul.f32 %v1395, %v1403
  %v1467 = vmul.f32 %v1396, %v1403
  %v1468 = vmul.f32 %v1397, %v1403
  %v1469 = vsel %vm756, %v1405, 0.0
  %1470 = vadd.xlane.f32.xlu0 %v1469
  %v1471 = vpop.xlane.xlu0 %1470
  %v1472 = vsel %vm756, %v1406, 0.0
  %1473 = vadd.xlane.f32.xlu0 %v1472
  %v1474 = vpop.xlane.xlu0 %1473
  %v1475 = vsel %vm756, %v1407, 0.0
  %1476 = vadd.xlane.f32.xlu0 %v1475
  %v1477 = vpop.xlane.xlu0 %1476
  %v1478 = vsel %vm756, %v1408, 0.0
  %1479 = vadd.xlane.f32.xlu0 %v1478
  %v1480 = vpop.xlane.xlu0 %1479
  %v1481 = vsel %vm756, %v1409, 0.0
  %1482 = vadd.xlane.f32.xlu0 %v1481
  %v1483 = vpop.xlane.xlu0 %1482
  %v1484 = vsel %vm756, %v1410, 0.0
  %1485 = vadd.xlane.f32.xlu0 %v1484
  %v1486 = vpop.xlane.xlu0 %1485
  %v1487 = vsel %vm756, %v1411, 0.0
  %1488 = vadd.xlane.f32.xlu0 %v1487
  %v1489 = vpop.xlane.xlu0 %1488
  %v1490 = vsel %vm756, %v1412, 0.0
  %1491 = vadd.xlane.f32.xlu0 %v1490
  %v1492 = vpop.xlane.xlu0 %1491
  %v1493 = vsel %vm756, %v1413, 0.0
  %1494 = vadd.xlane.f32.xlu0 %v1493
  %v1495 = vpop.xlane.xlu0 %1494
  %v1496 = vsel %vm756, %v1414, 0.0
  %1497 = vadd.xlane.f32.xlu0 %v1496
  %v1498 = vpop.xlane.xlu0 %1497
  %v1499 = vsel %vm756, %v1415, 0.0
  %1500 = vadd.xlane.f32.xlu0 %v1499
  %v1501 = vpop.xlane.xlu0 %1500
  %v1502 = vsel %vm756, %v1416, 0.0
  %1503 = vadd.xlane.f32.xlu0 %v1502
  %v1504 = vpop.xlane.xlu0 %1503
  %v1505 = vsel %vm756, %v1417, 0.0
  %1506 = vadd.xlane.f32.xlu0 %v1505
  %v1507 = vpop.xlane.xlu0 %1506
  %v1508 = vsel %vm756, %v1418, 0.0
  %1509 = vadd.xlane.f32.xlu0 %v1508
  %v1510 = vpop.xlane.xlu0 %1509
  %v1511 = vsel %vm756, %v1419, 0.0
  %1512 = vadd.xlane.f32.xlu0 %v1511
  %v1513 = vpop.xlane.xlu0 %1512
  %v1514 = vsel %vm756, %v1420, 0.0
  %1515 = vadd.xlane.f32.xlu0 %v1514
  %v1516 = vpop.xlane.xlu0 %1515
  %v1517 = vsel %vm756, %v1421, 0.0
  %1518 = vadd.xlane.f32.xlu0 %v1517
  %v1519 = vpop.xlane.xlu0 %1518
  %v1520 = vsel %vm756, %v1422, 0.0
  %1521 = vadd.xlane.f32.xlu0 %v1520
  %v1522 = vpop.xlane.xlu0 %1521
  %v1523 = vsel %vm756, %v1423, 0.0
  %1524 = vadd.xlane.f32.xlu0 %v1523
  %v1525 = vpop.xlane.xlu0 %1524
  %v1526 = vsel %vm756, %v1424, 0.0
  %1527 = vadd.xlane.f32.xlu0 %v1526
  %v1528 = vpop.xlane.xlu0 %1527
  %v1529 = vsel %vm756, %v1425, 0.0
  %1530 = vadd.xlane.f32.xlu0 %v1529
  %v1531 = vpop.xlane.xlu0 %1530
  %v1532 = vsel %vm756, %v1426, 0.0
  %1533 = vadd.xlane.f32.xlu0 %v1532
  %v1534 = vpop.xlane.xlu0 %1533
  %v1535 = vsel %vm756, %v1427, 0.0
  %1536 = vadd.xlane.f32.xlu0 %v1535
  %v1537 = vpop.xlane.xlu0 %1536
  %v1538 = vsel %vm756, %v1428, 0.0
  %1539 = vadd.xlane.f32.xlu0 %v1538
  %v1540 = vpop.xlane.xlu0 %1539
  %v1541 = vsel %vm756, %v1429, 0.0
  %1542 = vadd.xlane.f32.xlu0 %v1541
  %v1543 = vpop.xlane.xlu0 %1542
  %v1544 = vsel %vm756, %v1430, 0.0
  %1545 = vadd.xlane.f32.xlu0 %v1544
  %v1546 = vpop.xlane.xlu0 %1545
  %v1547 = vsel %vm756, %v1431, 0.0
  %1548 = vadd.xlane.f32.xlu0 %v1547
  %v1549 = vpop.xlane.xlu0 %1548
  %v1550 = vsel %vm756, %v1432, 0.0
  %1551 = vadd.xlane.f32.xlu0 %v1550
  %v1552 = vpop.xlane.xlu0 %1551
  %v1553 = vsel %vm756, %v1433, 0.0
  %1554 = vadd.xlane.f32.xlu0 %v1553
  %v1555 = vpop.xlane.xlu0 %1554
  %v1556 = vsel %vm756, %v1434, 0.0
  %1557 = vadd.xlane.f32.xlu0 %v1556
  %v1558 = vpop.xlane.xlu0 %1557
  %v1559 = vsel %vm756, %v1435, 0.0
  %1560 = vadd.xlane.f32.xlu0 %v1559
  %v1561 = vpop.xlane.xlu0 %1560
  %v1562 = vsel %vm756, %v1436, 0.0
  %1563 = vadd.xlane.f32.xlu0 %v1562
  %v1564 = vpop.xlane.xlu0 %1563
  %v1565 = vsel %vm756, %v1437, 0.0
  %1566 = vadd.xlane.f32.xlu0 %v1565
  %v1567 = vpop.xlane.xlu0 %1566
  %v1568 = vsel %vm756, %v1438, 0.0
  %1569 = vadd.xlane.f32.xlu0 %v1568
  %v1570 = vpop.xlane.xlu0 %1569
  %v1571 = vsel %vm756, %v1439, 0.0
  %1572 = vadd.xlane.f32.xlu0 %v1571
  %v1573 = vpop.xlane.xlu0 %1572
  %v1574 = vsel %vm756, %v1440, 0.0
  %1575 = vadd.xlane.f32.xlu0 %v1574
  %v1576 = vpop.xlane.xlu0 %1575
  %v1577 = vsel %vm756, %v1441, 0.0
  %1578 = vadd.xlane.f32.xlu0 %v1577
  %v1579 = vpop.xlane.xlu0 %1578
  %v1580 = vsel %vm756, %v1442, 0.0
  %1581 = vadd.xlane.f32.xlu0 %v1580
  %v1582 = vpop.xlane.xlu0 %1581
  %v1583 = vsel %vm756, %v1443, 0.0
  %1584 = vadd.xlane.f32.xlu0 %v1583
  %v1585 = vpop.xlane.xlu0 %1584
  %v1586 = vsel %vm756, %v1444, 0.0
  %1587 = vadd.xlane.f32.xlu0 %v1586
  %v1588 = vpop.xlane.xlu0 %1587
  %v1589 = vsel %vm756, %v1445, 0.0
  %1590 = vadd.xlane.f32.xlu0 %v1589
  %v1591 = vpop.xlane.xlu0 %1590
  %v1592 = vsel %vm756, %v1446, 0.0
  %1593 = vadd.xlane.f32.xlu0 %v1592
  %v1594 = vpop.xlane.xlu0 %1593
  %v1595 = vsel %vm756, %v1447, 0.0
  %1596 = vadd.xlane.f32.xlu0 %v1595
  %v1597 = vpop.xlane.xlu0 %1596
  %v1598 = vsel %vm756, %v1448, 0.0
  %1599 = vadd.xlane.f32.xlu0 %v1598
  %v1600 = vpop.xlane.xlu0 %1599
  %v1601 = vsel %vm756, %v1449, 0.0
  %1602 = vadd.xlane.f32.xlu0 %v1601
  %v1603 = vpop.xlane.xlu0 %1602
  %v1604 = vsel %vm756, %v1450, 0.0
  %1605 = vadd.xlane.f32.xlu0 %v1604
  %v1606 = vpop.xlane.xlu0 %1605
  %v1607 = vsel %vm756, %v1451, 0.0
  %1608 = vadd.xlane.f32.xlu0 %v1607
  %v1609 = vpop.xlane.xlu0 %1608
  %v1610 = vsel %vm756, %v1452, 0.0
  %1611 = vadd.xlane.f32.xlu0 %v1610
  %v1612 = vpop.xlane.xlu0 %1611
  %v1613 = vsel %vm756, %v1453, 0.0
  %1614 = vadd.xlane.f32.xlu0 %v1613
  %v1615 = vpop.xlane.xlu0 %1614
  %v1616 = vsel %vm756, %v1454, 0.0
  %1617 = vadd.xlane.f32.xlu0 %v1616
  %v1618 = vpop.xlane.xlu0 %1617
  %v1619 = vsel %vm756, %v1455, 0.0
  %1620 = vadd.xlane.f32.xlu0 %v1619
  %v1621 = vpop.xlane.xlu0 %1620
  %v1622 = vsel %vm756, %v1456, 0.0
  %1623 = vadd.xlane.f32.xlu0 %v1622
  %v1624 = vpop.xlane.xlu0 %1623
  %v1625 = vsel %vm756, %v1457, 0.0
  %1626 = vadd.xlane.f32.xlu0 %v1625
  %v1627 = vpop.xlane.xlu0 %1626
  %v1628 = vsel %vm756, %v1458, 0.0
  %1629 = vadd.xlane.f32.xlu0 %v1628
  %v1630 = vpop.xlane.xlu0 %1629
  %v1631 = vsel %vm756, %v1459, 0.0
  %1632 = vadd.xlane.f32.xlu0 %v1631
  %v1633 = vpop.xlane.xlu0 %1632
  %v1634 = vsel %vm756, %v1460, 0.0
  %1635 = vadd.xlane.f32.xlu0 %v1634
  %v1636 = vpop.xlane.xlu0 %1635
  %v1637 = vsel %vm756, %v1461, 0.0
  %1638 = vadd.xlane.f32.xlu0 %v1637
  %v1639 = vpop.xlane.xlu0 %1638
  %v1640 = vsel %vm756, %v1462, 0.0
  %1641 = vadd.xlane.f32.xlu0 %v1640
  %v1642 = vpop.xlane.xlu0 %1641
  %v1643 = vsel %vm756, %v1463, 0.0
  %1644 = vadd.xlane.f32.xlu0 %v1643
  %v1645 = vpop.xlane.xlu0 %1644
  %v1646 = vsel %vm756, %v1464, 0.0
  %1647 = vadd.xlane.f32.xlu0 %v1646
  %v1648 = vpop.xlane.xlu0 %1647
  %v1649 = vsel %vm756, %v1465, 0.0
  %1650 = vadd.xlane.f32.xlu0 %v1649
  %v1651 = vpop.xlane.xlu0 %1650
  %v1652 = vsel %vm756, %v1466, 0.0
  %1653 = vadd.xlane.f32.xlu0 %v1652
  %v1654 = vpop.xlane.xlu0 %1653
  %v1655 = vsel %vm756, %v1467, 0.0
  %1656 = vadd.xlane.f32.xlu0 %v1655
  %v1657 = vpop.xlane.xlu0 %1656
  %v1658 = vsel %vm756, %v1468, 0.0
  %1659 = vadd.xlane.f32.xlu0 %v1658
  %v1660 = vpop.xlane.xlu0 %1659
  %s1661 = sld [smem:[#allocation2]]
  %v1662 = vstv %s1661
  %v1663 = vadd.f32 %v1471, %v1662
  %v1664 = vadd.f32 %v1474, %v1662
  %v1665 = vadd.f32 %v1477, %v1662
  %v1666 = vadd.f32 %v1480, %v1662
  %v1667 = vadd.f32 %v1483, %v1662
  %v1668 = vadd.f32 %v1486, %v1662
  %v1669 = vadd.f32 %v1489, %v1662
  %v1670 = vadd.f32 %v1492, %v1662
  %v1671 = vadd.f32 %v1495, %v1662
  %v1672 = vadd.f32 %v1498, %v1662
  %v1673 = vadd.f32 %v1501, %v1662
  %v1674 = vadd.f32 %v1504, %v1662
  %v1675 = vadd.f32 %v1507, %v1662
  %v1676 = vadd.f32 %v1510, %v1662
  %v1677 = vadd.f32 %v1513, %v1662
  %v1678 = vadd.f32 %v1516, %v1662
  %v1679 = vadd.f32 %v1519, %v1662
  %v1680 = vadd.f32 %v1522, %v1662
  %v1681 = vadd.f32 %v1525, %v1662
  %v1682 = vadd.f32 %v1528, %v1662
  %v1683 = vadd.f32 %v1531, %v1662
  %v1684 = vadd.f32 %v1534, %v1662
  %v1685 = vadd.f32 %v1537, %v1662
  %v1686 = vadd.f32 %v1540, %v1662
  %v1687 = vadd.f32 %v1543, %v1662
  %v1688 = vadd.f32 %v1546, %v1662
  %v1689 = vadd.f32 %v1549, %v1662
  %v1690 = vadd.f32 %v1552, %v1662
  %v1691 = vadd.f32 %v1555, %v1662
  %v1692 = vadd.f32 %v1558, %v1662
  %v1693 = vadd.f32 %v1561, %v1662
  %v1694 = vadd.f32 %v1564, %v1662
  %v1695 = vadd.f32 %v1567, %v1662
  %v1696 = vadd.f32 %v1570, %v1662
  %v1697 = vadd.f32 %v1573, %v1662
  %v1698 = vadd.f32 %v1576, %v1662
  %v1699 = vadd.f32 %v1579, %v1662
  %v1700 = vadd.f32 %v1582, %v1662
  %v1701 = vadd.f32 %v1585, %v1662
  %v1702 = vadd.f32 %v1588, %v1662
  %v1703 = vadd.f32 %v1591, %v1662
  %v1704 = vadd.f32 %v1594, %v1662
  %v1705 = vadd.f32 %v1597, %v1662
  %v1706 = vadd.f32 %v1600, %v1662
  %v1707 = vadd.f32 %v1603, %v1662
  %v1708 = vadd.f32 %v1606, %v1662
  %v1709 = vadd.f32 %v1609, %v1662
  %v1710 = vadd.f32 %v1612, %v1662
  %v1711 = vadd.f32 %v1615, %v1662
  %v1712 = vadd.f32 %v1618, %v1662
  %v1713 = vadd.f32 %v1621, %v1662
  %v1714 = vadd.f32 %v1624, %v1662
  %v1715 = vadd.f32 %v1627, %v1662
  %v1716 = vadd.f32 %v1630, %v1662
  %v1717 = vadd.f32 %v1633, %v1662
  %v1718 = vadd.f32 %v1636, %v1662
  %v1719 = vadd.f32 %v1639, %v1662
  %v1720 = vadd.f32 %v1642, %v1662
  %v1721 = vadd.f32 %v1645, %v1662
  %v1722 = vadd.f32 %v1648, %v1662
  %v1723 = vadd.f32 %v1651, %v1662
  %v1724 = vadd.f32 %v1654, %v1662
  %v1725 = vadd.f32 %v1657, %v1662
  %v1726 = vadd.f32 %v1660, %v1662
  %v1791 = vlaneseq
  %v1792 = vshrl.u32 %v1791, 7
  %v1793 = vsub.s32 0, %v1792
  %v1794 = vrot.slane %v1663, %v1793
  %v1795 = vlaneseq
  %v1796 = vshrl.u32 %v1795, 7
  %v1797 = vsub.s32 1, %v1796
  %v1798 = vrot.slane %v1663, %v1797
  %v1799 = vlaneseq
  %v1800 = vshrl.u32 %v1799, 7
  %v1801 = vsub.s32 2, %v1800
  %v1802 = vrot.slane %v1663, %v1801
  %v1803 = vlaneseq
  %v1804 = vshrl.u32 %v1803, 7
  %v1805 = vsub.s32 3, %v1804
  %v1806 = vrot.slane %v1663, %v1805
  %v1807 = vlaneseq
  %v1808 = vshrl.u32 %v1807, 7
  %v1809 = vsub.s32 4, %v1808
  %v1810 = vrot.slane %v1663, %v1809
  %v1811 = vlaneseq
  %v1812 = vshrl.u32 %v1811, 7
  %v1813 = vsub.s32 5, %v1812
  %v1814 = vrot.slane %v1663, %v1813
  %v1815 = vlaneseq
  %v1816 = vshrl.u32 %v1815, 7
  %v1817 = vsub.s32 6, %v1816
  %v1818 = vrot.slane %v1663, %v1817
  %v1819 = vlaneseq
  %v1820 = vshrl.u32 %v1819, 7
  %v1821 = vsub.s32 7, %v1820
  %v1822 = vrot.slane %v1663, %v1821
  %v1823 = vlaneseq
  %v1824 = vshrl.u32 %v1823, 7
  %v1825 = vsub.s32 0, %v1824
  %v1826 = vrot.slane %v1664, %v1825
  %v1827 = vlaneseq
  %v1828 = vshrl.u32 %v1827, 7
  %v1829 = vsub.s32 1, %v1828
  %v1830 = vrot.slane %v1664, %v1829
  %v1831 = vlaneseq
  %v1832 = vshrl.u32 %v1831, 7
  %v1833 = vsub.s32 2, %v1832
  %v1834 = vrot.slane %v1664, %v1833
  %v1835 = vlaneseq
  %v1836 = vshrl.u32 %v1835, 7
  %v1837 = vsub.s32 3, %v1836
  %v1838 = vrot.slane %v1664, %v1837
  %v1839 = vlaneseq
  %v1840 = vshrl.u32 %v1839, 7
  %v1841 = vsub.s32 4, %v1840
  %v1842 = vrot.slane %v1664, %v1841
  %v1843 = vlaneseq
  %v1844 = vshrl.u32 %v1843, 7
  %v1845 = vsub.s32 5, %v1844
  %v1846 = vrot.slane %v1664, %v1845
  %v1847 = vlaneseq
  %v1848 = vshrl.u32 %v1847, 7
  %v1849 = vsub.s32 6, %v1848
  %v1850 = vrot.slane %v1664, %v1849
  %v1851 = vlaneseq
  %v1852 = vshrl.u32 %v1851, 7
  %v1853 = vsub.s32 7, %v1852
  %v1854 = vrot.slane %v1664, %v1853
  %v1855 = vlaneseq
  %v1856 = vshrl.u32 %v1855, 7
  %v1857 = vsub.s32 0, %v1856
  %v1858 = vrot.slane %v1665, %v1857
  %v1859 = vlaneseq
  %v1860 = vshrl.u32 %v1859, 7
  %v1861 = vsub.s32 1, %v1860
  %v1862 = vrot.slane %v1665, %v1861
  %v1863 = vlaneseq
  %v1864 = vshrl.u32 %v1863, 7
  %v1865 = vsub.s32 2, %v1864
  %v1866 = vrot.slane %v1665, %v1865
  %v1867 = vlaneseq
  %v1868 = vshrl.u32 %v1867, 7
  %v1869 = vsub.s32 3, %v1868
  %v1870 = vrot.slane %v1665, %v1869
  %v1871 = vlaneseq
  %v1872 = vshrl.u32 %v1871, 7
  %v1873 = vsub.s32 4, %v1872
  %v1874 = vrot.slane %v1665, %v1873
  %v1875 = vlaneseq
  %v1876 = vshrl.u32 %v1875, 7
  %v1877 = vsub.s32 5, %v1876
  %v1878 = vrot.slane %v1665, %v1877
  %v1879 = vlaneseq
  %v1880 = vshrl.u32 %v1879, 7
  %v1881 = vsub.s32 6, %v1880
  %v1882 = vrot.slane %v1665, %v1881
  %v1883 = vlaneseq
  %v1884 = vshrl.u32 %v1883, 7
  %v1885 = vsub.s32 7, %v1884
  %v1886 = vrot.slane %v1665, %v1885
  %v1887 = vlaneseq
  %v1888 = vshrl.u32 %v1887, 7
  %v1889 = vsub.s32 0, %v1888
  %v1890 = vrot.slane %v1666, %v1889
  %v1891 = vlaneseq
  %v1892 = vshrl.u32 %v1891, 7
  %v1893 = vsub.s32 1, %v1892
  %v1894 = vrot.slane %v1666, %v1893
  %v1895 = vlaneseq
  %v1896 = vshrl.u32 %v1895, 7
  %v1897 = vsub.s32 2, %v1896
  %v1898 = vrot.slane %v1666, %v1897
  %v1899 = vlaneseq
  %v1900 = vshrl.u32 %v1899, 7
  %v1901 = vsub.s32 3, %v1900
  %v1902 = vrot.slane %v1666, %v1901
  %v1903 = vlaneseq
  %v1904 = vshrl.u32 %v1903, 7
  %v1905 = vsub.s32 4, %v1904
  %v1906 = vrot.slane %v1666, %v1905
  %v1907 = vlaneseq
  %v1908 = vshrl.u32 %v1907, 7
  %v1909 = vsub.s32 5, %v1908
  %v1910 = vrot.slane %v1666, %v1909
  %v1911 = vlaneseq
  %v1912 = vshrl.u32 %v1911, 7
  %v1913 = vsub.s32 6, %v1912
  %v1914 = vrot.slane %v1666, %v1913
  %v1915 = vlaneseq
  %v1916 = vshrl.u32 %v1915, 7
  %v1917 = vsub.s32 7, %v1916
  %v1918 = vrot.slane %v1666, %v1917
  %v1919 = vlaneseq
  %v1920 = vshrl.u32 %v1919, 7
  %v1921 = vsub.s32 0, %v1920
  %v1922 = vrot.slane %v1667, %v1921
  %v1923 = vlaneseq
  %v1924 = vshrl.u32 %v1923, 7
  %v1925 = vsub.s32 1, %v1924
  %v1926 = vrot.slane %v1667, %v1925
  %v1927 = vlaneseq
  %v1928 = vshrl.u32 %v1927, 7
  %v1929 = vsub.s32 2, %v1928
  %v1930 = vrot.slane %v1667, %v1929
  %v1931 = vlaneseq
  %v1932 = vshrl.u32 %v1931, 7
  %v1933 = vsub.s32 3, %v1932
  %v1934 = vrot.slane %v1667, %v1933
  %v1935 = vlaneseq
  %v1936 = vshrl.u32 %v1935, 7
  %v1937 = vsub.s32 4, %v1936
  %v1938 = vrot.slane %v1667, %v1937
  %v1939 = vlaneseq
  %v1940 = vshrl.u32 %v1939, 7
  %v1941 = vsub.s32 5, %v1940
  %v1942 = vrot.slane %v1667, %v1941
  %v1943 = vlaneseq
  %v1944 = vshrl.u32 %v1943, 7
  %v1945 = vsub.s32 6, %v1944
  %v1946 = vrot.slane %v1667, %v1945
  %v1947 = vlaneseq
  %v1948 = vshrl.u32 %v1947, 7
  %v1949 = vsub.s32 7, %v1948
  %v1950 = vrot.slane %v1667, %v1949
  %v1951 = vlaneseq
  %v1952 = vshrl.u32 %v1951, 7
  %v1953 = vsub.s32 0, %v1952
  %v1954 = vrot.slane %v1668, %v1953
  %v1955 = vlaneseq
  %v1956 = vshrl.u32 %v1955, 7
  %v1957 = vsub.s32 1, %v1956
  %v1958 = vrot.slane %v1668, %v1957
  %v1959 = vlaneseq
  %v1960 = vshrl.u32 %v1959, 7
  %v1961 = vsub.s32 2, %v1960
  %v1962 = vrot.slane %v1668, %v1961
  %v1963 = vlaneseq
  %v1964 = vshrl.u32 %v1963, 7
  %v1965 = vsub.s32 3, %v1964
  %v1966 = vrot.slane %v1668, %v1965
  %v1967 = vlaneseq
  %v1968 = vshrl.u32 %v1967, 7
  %v1969 = vsub.s32 4, %v1968
  %v1970 = vrot.slane %v1668, %v1969
  %v1971 = vlaneseq
  %v1972 = vshrl.u32 %v1971, 7
  %v1973 = vsub.s32 5, %v1972
  %v1974 = vrot.slane %v1668, %v1973
  %v1975 = vlaneseq
  %v1976 = vshrl.u32 %v1975, 7
  %v1977 = vsub.s32 6, %v1976
  %v1978 = vrot.slane %v1668, %v1977
  %v1979 = vlaneseq
  %v1980 = vshrl.u32 %v1979, 7
  %v1981 = vsub.s32 7, %v1980
  %v1982 = vrot.slane %v1668, %v1981
  %v1983 = vlaneseq
  %v1984 = vshrl.u32 %v1983, 7
  %v1985 = vsub.s32 0, %v1984
  %v1986 = vrot.slane %v1669, %v1985
  %v1987 = vlaneseq
  %v1988 = vshrl.u32 %v1987, 7
  %v1989 = vsub.s32 1, %v1988
  %v1990 = vrot.slane %v1669, %v1989
  %v1991 = vlaneseq
  %v1992 = vshrl.u32 %v1991, 7
  %v1993 = vsub.s32 2, %v1992
  %v1994 = vrot.slane %v1669, %v1993
  %v1995 = vlaneseq
  %v1996 = vshrl.u32 %v1995, 7
  %v1997 = vsub.s32 3, %v1996
  %v1998 = vrot.slane %v1669, %v1997
  %v1999 = vlaneseq
  %v2000 = vshrl.u32 %v1999, 7
  %v2001 = vsub.s32 4, %v2000
  %v2002 = vrot.slane %v1669, %v2001
  %v2003 = vlaneseq
  %v2004 = vshrl.u32 %v2003, 7
  %v2005 = vsub.s32 5, %v2004
  %v2006 = vrot.slane %v1669, %v2005
  %v2007 = vlaneseq
  %v2008 = vshrl.u32 %v2007, 7
  %v2009 = vsub.s32 6, %v2008
  %v2010 = vrot.slane %v1669, %v2009
  %v2011 = vlaneseq
  %v2012 = vshrl.u32 %v2011, 7
  %v2013 = vsub.s32 7, %v2012
  %v2014 = vrot.slane %v1669, %v2013
  %v2015 = vlaneseq
  %v2016 = vshrl.u32 %v2015, 7
  %v2017 = vsub.s32 0, %v2016
  %v2018 = vrot.slane %v1670, %v2017
  %v2019 = vlaneseq
  %v2020 = vshrl.u32 %v2019, 7
  %v2021 = vsub.s32 1, %v2020
  %v2022 = vrot.slane %v1670, %v2021
  %v2023 = vlaneseq
  %v2024 = vshrl.u32 %v2023, 7
  %v2025 = vsub.s32 2, %v2024
  %v2026 = vrot.slane %v1670, %v2025
  %v2027 = vlaneseq
  %v2028 = vshrl.u32 %v2027, 7
  %v2029 = vsub.s32 3, %v2028
  %v2030 = vrot.slane %v1670, %v2029
  %v2031 = vlaneseq
  %v2032 = vshrl.u32 %v2031, 7
  %v2033 = vsub.s32 4, %v2032
  %v2034 = vrot.slane %v1670, %v2033
  %v2035 = vlaneseq
  %v2036 = vshrl.u32 %v2035, 7
  %v2037 = vsub.s32 5, %v2036
  %v2038 = vrot.slane %v1670, %v2037
  %v2039 = vlaneseq
  %v2040 = vshrl.u32 %v2039, 7
  %v2041 = vsub.s32 6, %v2040
  %v2042 = vrot.slane %v1670, %v2041
  %v2043 = vlaneseq
  %v2044 = vshrl.u32 %v2043, 7
  %v2045 = vsub.s32 7, %v2044
  %v2046 = vrot.slane %v1670, %v2045
  %v2047 = vlaneseq
  %v2048 = vshrl.u32 %v2047, 7
  %v2049 = vsub.s32 0, %v2048
  %v2050 = vrot.slane %v1671, %v2049
  %v2051 = vlaneseq
  %v2052 = vshrl.u32 %v2051, 7
  %v2053 = vsub.s32 1, %v2052
  %v2054 = vrot.slane %v1671, %v2053
  %v2055 = vlaneseq
  %v2056 = vshrl.u32 %v2055, 7
  %v2057 = vsub.s32 2, %v2056
  %v2058 = vrot.slane %v1671, %v2057
  %v2059 = vlaneseq
  %v2060 = vshrl.u32 %v2059, 7
  %v2061 = vsub.s32 3, %v2060
  %v2062 = vrot.slane %v1671, %v2061
  %v2063 = vlaneseq
  %v2064 = vshrl.u32 %v2063, 7
  %v2065 = vsub.s32 4, %v2064
  %v2066 = vrot.slane %v1671, %v2065
  %v2067 = vlaneseq
  %v2068 = vshrl.u32 %v2067, 7
  %v2069 = vsub.s32 5, %v2068
  %v2070 = vrot.slane %v1671, %v2069
  %v2071 = vlaneseq
  %v2072 = vshrl.u32 %v2071, 7
  %v2073 = vsub.s32 6, %v2072
  %v2074 = vrot.slane %v1671, %v2073
  %v2075 = vlaneseq
  %v2076 = vshrl.u32 %v2075, 7
  %v2077 = vsub.s32 7, %v2076
  %v2078 = vrot.slane %v1671, %v2077
  %v2079 = vlaneseq
  %v2080 = vshrl.u32 %v2079, 7
  %v2081 = vsub.s32 0, %v2080
  %v2082 = vrot.slane %v1672, %v2081
  %v2083 = vlaneseq
  %v2084 = vshrl.u32 %v2083, 7
  %v2085 = vsub.s32 1, %v2084
  %v2086 = vrot.slane %v1672, %v2085
  %v2087 = vlaneseq
  %v2088 = vshrl.u32 %v2087, 7
  %v2089 = vsub.s32 2, %v2088
  %v2090 = vrot.slane %v1672, %v2089
  %v2091 = vlaneseq
  %v2092 = vshrl.u32 %v2091, 7
  %v2093 = vsub.s32 3, %v2092
  %v2094 = vrot.slane %v1672, %v2093
  %v2095 = vlaneseq
  %v2096 = vshrl.u32 %v2095, 7
  %v2097 = vsub.s32 4, %v2096
  %v2098 = vrot.slane %v1672, %v2097
  %v2099 = vlaneseq
  %v2100 = vshrl.u32 %v2099, 7
  %v2101 = vsub.s32 5, %v2100
  %v2102 = vrot.slane %v1672, %v2101
  %v2103 = vlaneseq
  %v2104 = vshrl.u32 %v2103, 7
  %v2105 = vsub.s32 6, %v2104
  %v2106 = vrot.slane %v1672, %v2105
  %v2107 = vlaneseq
  %v2108 = vshrl.u32 %v2107, 7
  %v2109 = vsub.s32 7, %v2108
  %v2110 = vrot.slane %v1672, %v2109
  %v2111 = vlaneseq
  %v2112 = vshrl.u32 %v2111, 7
  %v2113 = vsub.s32 0, %v2112
  %v2114 = vrot.slane %v1673, %v2113
  %v2115 = vlaneseq
  %v2116 = vshrl.u32 %v2115, 7
  %v2117 = vsub.s32 1, %v2116
  %v2118 = vrot.slane %v1673, %v2117
  %v2119 = vlaneseq
  %v2120 = vshrl.u32 %v2119, 7
  %v2121 = vsub.s32 2, %v2120
  %v2122 = vrot.slane %v1673, %v2121
  %v2123 = vlaneseq
  %v2124 = vshrl.u32 %v2123, 7
  %v2125 = vsub.s32 3, %v2124
  %v2126 = vrot.slane %v1673, %v2125
  %v2127 = vlaneseq
  %v2128 = vshrl.u32 %v2127, 7
  %v2129 = vsub.s32 4, %v2128
  %v2130 = vrot.slane %v1673, %v2129
  %v2131 = vlaneseq
  %v2132 = vshrl.u32 %v2131, 7
  %v2133 = vsub.s32 5, %v2132
  %v2134 = vrot.slane %v1673, %v2133
  %v2135 = vlaneseq
  %v2136 = vshrl.u32 %v2135, 7
  %v2137 = vsub.s32 6, %v2136
  %v2138 = vrot.slane %v1673, %v2137
  %v2139 = vlaneseq
  %v2140 = vshrl.u32 %v2139, 7
  %v2141 = vsub.s32 7, %v2140
  %v2142 = vrot.slane %v1673, %v2141
  %v2143 = vlaneseq
  %v2144 = vshrl.u32 %v2143, 7
  %v2145 = vsub.s32 0, %v2144
  %v2146 = vrot.slane %v1674, %v2145
  %v2147 = vlaneseq
  %v2148 = vshrl.u32 %v2147, 7
  %v2149 = vsub.s32 1, %v2148
  %v2150 = vrot.slane %v1674, %v2149
  %v2151 = vlaneseq
  %v2152 = vshrl.u32 %v2151, 7
  %v2153 = vsub.s32 2, %v2152
  %v2154 = vrot.slane %v1674, %v2153
  %v2155 = vlaneseq
  %v2156 = vshrl.u32 %v2155, 7
  %v2157 = vsub.s32 3, %v2156
  %v2158 = vrot.slane %v1674, %v2157
  %v2159 = vlaneseq
  %v2160 = vshrl.u32 %v2159, 7
  %v2161 = vsub.s32 4, %v2160
  %v2162 = vrot.slane %v1674, %v2161
  %v2163 = vlaneseq
  %v2164 = vshrl.u32 %v2163, 7
  %v2165 = vsub.s32 5, %v2164
  %v2166 = vrot.slane %v1674, %v2165
  %v2167 = vlaneseq
  %v2168 = vshrl.u32 %v2167, 7
  %v2169 = vsub.s32 6, %v2168
  %v2170 = vrot.slane %v1674, %v2169
  %v2171 = vlaneseq
  %v2172 = vshrl.u32 %v2171, 7
  %v2173 = vsub.s32 7, %v2172
  %v2174 = vrot.slane %v1674, %v2173
  %v2175 = vlaneseq
  %v2176 = vshrl.u32 %v2175, 7
  %v2177 = vsub.s32 0, %v2176
  %v2178 = vrot.slane %v1675, %v2177
  %v2179 = vlaneseq
  %v2180 = vshrl.u32 %v2179, 7
  %v2181 = vsub.s32 1, %v2180
  %v2182 = vrot.slane %v1675, %v2181
  %v2183 = vlaneseq
  %v2184 = vshrl.u32 %v2183, 7
  %v2185 = vsub.s32 2, %v2184
  %v2186 = vrot.slane %v1675, %v2185
  %v2187 = vlaneseq
  %v2188 = vshrl.u32 %v2187, 7
  %v2189 = vsub.s32 3, %v2188
  %v2190 = vrot.slane %v1675, %v2189
  %v2191 = vlaneseq
  %v2192 = vshrl.u32 %v2191, 7
  %v2193 = vsub.s32 4, %v2192
  %v2194 = vrot.slane %v1675, %v2193
  %v2195 = vlaneseq
  %v2196 = vshrl.u32 %v2195, 7
  %v2197 = vsub.s32 5, %v2196
  %v2198 = vrot.slane %v1675, %v2197
  %v2199 = vlaneseq
  %v2200 = vshrl.u32 %v2199, 7
  %v2201 = vsub.s32 6, %v2200
  %v2202 = vrot.slane %v1675, %v2201
  %v2203 = vlaneseq
  %v2204 = vshrl.u32 %v2203, 7
  %v2205 = vsub.s32 7, %v2204
  %v2206 = vrot.slane %v1675, %v2205
  %v2207 = vlaneseq
  %v2208 = vshrl.u32 %v2207, 7
  %v2209 = vsub.s32 0, %v2208
  %v2210 = vrot.slane %v1676, %v2209
  %v2211 = vlaneseq
  %v2212 = vshrl.u32 %v2211, 7
  %v2213 = vsub.s32 1, %v2212
  %v2214 = vrot.slane %v1676, %v2213
  %v2215 = vlaneseq
  %v2216 = vshrl.u32 %v2215, 7
  %v2217 = vsub.s32 2, %v2216
  %v2218 = vrot.slane %v1676, %v2217
  %v2219 = vlaneseq
  %v2220 = vshrl.u32 %v2219, 7
  %v2221 = vsub.s32 3, %v2220
  %v2222 = vrot.slane %v1676, %v2221
  %v2223 = vlaneseq
  %v2224 = vshrl.u32 %v2223, 7
  %v2225 = vsub.s32 4, %v2224
  %v2226 = vrot.slane %v1676, %v2225
  %v2227 = vlaneseq
  %v2228 = vshrl.u32 %v2227, 7
  %v2229 = vsub.s32 5, %v2228
  %v2230 = vrot.slane %v1676, %v2229
  %v2231 = vlaneseq
  %v2232 = vshrl.u32 %v2231, 7
  %v2233 = vsub.s32 6, %v2232
  %v2234 = vrot.slane %v1676, %v2233
  %v2235 = vlaneseq
  %v2236 = vshrl.u32 %v2235, 7
  %v2237 = vsub.s32 7, %v2236
  %v2238 = vrot.slane %v1676, %v2237
  %v2239 = vlaneseq
  %v2240 = vshrl.u32 %v2239, 7
  %v2241 = vsub.s32 0, %v2240
  %v2242 = vrot.slane %v1677, %v2241
  %v2243 = vlaneseq
  %v2244 = vshrl.u32 %v2243, 7
  %v2245 = vsub.s32 1, %v2244
  %v2246 = vrot.slane %v1677, %v2245
  %v2247 = vlaneseq
  %v2248 = vshrl.u32 %v2247, 7
  %v2249 = vsub.s32 2, %v2248
  %v2250 = vrot.slane %v1677, %v2249
  %v2251 = vlaneseq
  %v2252 = vshrl.u32 %v2251, 7
  %v2253 = vsub.s32 3, %v2252
  %v2254 = vrot.slane %v1677, %v2253
  %v2255 = vlaneseq
  %v2256 = vshrl.u32 %v2255, 7
  %v2257 = vsub.s32 4, %v2256
  %v2258 = vrot.slane %v1677, %v2257
  %v2259 = vlaneseq
  %v2260 = vshrl.u32 %v2259, 7
  %v2261 = vsub.s32 5, %v2260
  %v2262 = vrot.slane %v1677, %v2261
  %v2263 = vlaneseq
  %v2264 = vshrl.u32 %v2263, 7
  %v2265 = vsub.s32 6, %v2264
  %v2266 = vrot.slane %v1677, %v2265
  %v2267 = vlaneseq
  %v2268 = vshrl.u32 %v2267, 7
  %v2269 = vsub.s32 7, %v2268
  %v2270 = vrot.slane %v1677, %v2269
  %v2271 = vlaneseq
  %v2272 = vshrl.u32 %v2271, 7
  %v2273 = vsub.s32 0, %v2272
  %v2274 = vrot.slane %v1678, %v2273
  %v2275 = vlaneseq
  %v2276 = vshrl.u32 %v2275, 7
  %v2277 = vsub.s32 1, %v2276
  %v2278 = vrot.slane %v1678, %v2277
  %v2279 = vlaneseq
  %v2280 = vshrl.u32 %v2279, 7
  %v2281 = vsub.s32 2, %v2280
  %v2282 = vrot.slane %v1678, %v2281
  %v2283 = vlaneseq
  %v2284 = vshrl.u32 %v2283, 7
  %v2285 = vsub.s32 3, %v2284
  %v2286 = vrot.slane %v1678, %v2285
  %v2287 = vlaneseq
  %v2288 = vshrl.u32 %v2287, 7
  %v2289 = vsub.s32 4, %v2288
  %v2290 = vrot.slane %v1678, %v2289
  %v2291 = vlaneseq
  %v2292 = vshrl.u32 %v2291, 7
  %v2293 = vsub.s32 5, %v2292
  %v2294 = vrot.slane %v1678, %v2293
  %v2295 = vlaneseq
  %v2296 = vshrl.u32 %v2295, 7
  %v2297 = vsub.s32 6, %v2296
  %v2298 = vrot.slane %v1678, %v2297
  %v2299 = vlaneseq
  %v2300 = vshrl.u32 %v2299, 7
  %v2301 = vsub.s32 7, %v2300
  %v2302 = vrot.slane %v1678, %v2301
  %v2303 = vlaneseq
  %v2304 = vshrl.u32 %v2303, 7
  %v2305 = vsub.s32 0, %v2304
  %v2306 = vrot.slane %v1679, %v2305
  %v2307 = vlaneseq
  %v2308 = vshrl.u32 %v2307, 7
  %v2309 = vsub.s32 1, %v2308
  %v2310 = vrot.slane %v1679, %v2309
  %v2311 = vlaneseq
  %v2312 = vshrl.u32 %v2311, 7
  %v2313 = vsub.s32 2, %v2312
  %v2314 = vrot.slane %v1679, %v2313
  %v2315 = vlaneseq
  %v2316 = vshrl.u32 %v2315, 7
  %v2317 = vsub.s32 3, %v2316
  %v2318 = vrot.slane %v1679, %v2317
  %v2319 = vlaneseq
  %v2320 = vshrl.u32 %v2319, 7
  %v2321 = vsub.s32 4, %v2320
  %v2322 = vrot.slane %v1679, %v2321
  %v2323 = vlaneseq
  %v2324 = vshrl.u32 %v2323, 7
  %v2325 = vsub.s32 5, %v2324
  %v2326 = vrot.slane %v1679, %v2325
  %v2327 = vlaneseq
  %v2328 = vshrl.u32 %v2327, 7
  %v2329 = vsub.s32 6, %v2328
  %v2330 = vrot.slane %v1679, %v2329
  %v2331 = vlaneseq
  %v2332 = vshrl.u32 %v2331, 7
  %v2333 = vsub.s32 7, %v2332
  %v2334 = vrot.slane %v1679, %v2333
  %v2335 = vlaneseq
  %v2336 = vshrl.u32 %v2335, 7
  %v2337 = vsub.s32 0, %v2336
  %v2338 = vrot.slane %v1680, %v2337
  %v2339 = vlaneseq
  %v2340 = vshrl.u32 %v2339, 7
  %v2341 = vsub.s32 1, %v2340
  %v2342 = vrot.slane %v1680, %v2341
  %v2343 = vlaneseq
  %v2344 = vshrl.u32 %v2343, 7
  %v2345 = vsub.s32 2, %v2344
  %v2346 = vrot.slane %v1680, %v2345
  %v2347 = vlaneseq
  %v2348 = vshrl.u32 %v2347, 7
  %v2349 = vsub.s32 3, %v2348
  %v2350 = vrot.slane %v1680, %v2349
  %v2351 = vlaneseq
  %v2352 = vshrl.u32 %v2351, 7
  %v2353 = vsub.s32 4, %v2352
  %v2354 = vrot.slane %v1680, %v2353
  %v2355 = vlaneseq
  %v2356 = vshrl.u32 %v2355, 7
  %v2357 = vsub.s32 5, %v2356
  %v2358 = vrot.slane %v1680, %v2357
  %v2359 = vlaneseq
  %v2360 = vshrl.u32 %v2359, 7
  %v2361 = vsub.s32 6, %v2360
  %v2362 = vrot.slane %v1680, %v2361
  %v2363 = vlaneseq
  %v2364 = vshrl.u32 %v2363, 7
  %v2365 = vsub.s32 7, %v2364
  %v2366 = vrot.slane %v1680, %v2365
  %v2367 = vlaneseq
  %v2368 = vshrl.u32 %v2367, 7
  %v2369 = vsub.s32 0, %v2368
  %v2370 = vrot.slane %v1681, %v2369
  %v2371 = vlaneseq
  %v2372 = vshrl.u32 %v2371, 7
  %v2373 = vsub.s32 1, %v2372
  %v2374 = vrot.slane %v1681, %v2373
  %v2375 = vlaneseq
  %v2376 = vshrl.u32 %v2375, 7
  %v2377 = vsub.s32 2, %v2376
  %v2378 = vrot.slane %v1681, %v2377
  %v2379 = vlaneseq
  %v2380 = vshrl.u32 %v2379, 7
  %v2381 = vsub.s32 3, %v2380
  %v2382 = vrot.slane %v1681, %v2381
  %v2383 = vlaneseq
  %v2384 = vshrl.u32 %v2383, 7
  %v2385 = vsub.s32 4, %v2384
  %v2386 = vrot.slane %v1681, %v2385
  %v2387 = vlaneseq
  %v2388 = vshrl.u32 %v2387, 7
  %v2389 = vsub.s32 5, %v2388
  %v2390 = vrot.slane %v1681, %v2389
  %v2391 = vlaneseq
  %v2392 = vshrl.u32 %v2391, 7
  %v2393 = vsub.s32 6, %v2392
  %v2394 = vrot.slane %v1681, %v2393
  %v2395 = vlaneseq
  %v2396 = vshrl.u32 %v2395, 7
  %v2397 = vsub.s32 7, %v2396
  %v2398 = vrot.slane %v1681, %v2397
  %v2399 = vlaneseq
  %v2400 = vshrl.u32 %v2399, 7
  %v2401 = vsub.s32 0, %v2400
  %v2402 = vrot.slane %v1682, %v2401
  %v2403 = vlaneseq
  %v2404 = vshrl.u32 %v2403, 7
  %v2405 = vsub.s32 1, %v2404
  %v2406 = vrot.slane %v1682, %v2405
  %v2407 = vlaneseq
  %v2408 = vshrl.u32 %v2407, 7
  %v2409 = vsub.s32 2, %v2408
  %v2410 = vrot.slane %v1682, %v2409
  %v2411 = vlaneseq
  %v2412 = vshrl.u32 %v2411, 7
  %v2413 = vsub.s32 3, %v2412
  %v2414 = vrot.slane %v1682, %v2413
  %v2415 = vlaneseq
  %v2416 = vshrl.u32 %v2415, 7
  %v2417 = vsub.s32 4, %v2416
  %v2418 = vrot.slane %v1682, %v2417
  %v2419 = vlaneseq
  %v2420 = vshrl.u32 %v2419, 7
  %v2421 = vsub.s32 5, %v2420
  %v2422 = vrot.slane %v1682, %v2421
  %v2423 = vlaneseq
  %v2424 = vshrl.u32 %v2423, 7
  %v2425 = vsub.s32 6, %v2424
  %v2426 = vrot.slane %v1682, %v2425
  %v2427 = vlaneseq
  %v2428 = vshrl.u32 %v2427, 7
  %v2429 = vsub.s32 7, %v2428
  %v2430 = vrot.slane %v1682, %v2429
  %v2431 = vlaneseq
  %v2432 = vshrl.u32 %v2431, 7
  %v2433 = vsub.s32 0, %v2432
  %v2434 = vrot.slane %v1683, %v2433
  %v2435 = vlaneseq
  %v2436 = vshrl.u32 %v2435, 7
  %v2437 = vsub.s32 1, %v2436
  %v2438 = vrot.slane %v1683, %v2437
  %v2439 = vlaneseq
  %v2440 = vshrl.u32 %v2439, 7
  %v2441 = vsub.s32 2, %v2440
  %v2442 = vrot.slane %v1683, %v2441
  %v2443 = vlaneseq
  %v2444 = vshrl.u32 %v2443, 7
  %v2445 = vsub.s32 3, %v2444
  %v2446 = vrot.slane %v1683, %v2445
  %v2447 = vlaneseq
  %v2448 = vshrl.u32 %v2447, 7
  %v2449 = vsub.s32 4, %v2448
  %v2450 = vrot.slane %v1683, %v2449
  %v2451 = vlaneseq
  %v2452 = vshrl.u32 %v2451, 7
  %v2453 = vsub.s32 5, %v2452
  %v2454 = vrot.slane %v1683, %v2453
  %v2455 = vlaneseq
  %v2456 = vshrl.u32 %v2455, 7
  %v2457 = vsub.s32 6, %v2456
  %v2458 = vrot.slane %v1683, %v2457
  %v2459 = vlaneseq
  %v2460 = vshrl.u32 %v2459, 7
  %v2461 = vsub.s32 7, %v2460
  %v2462 = vrot.slane %v1683, %v2461
  %v2463 = vlaneseq
  %v2464 = vshrl.u32 %v2463, 7
  %v2465 = vsub.s32 0, %v2464
  %v2466 = vrot.slane %v1684, %v2465
  %v2467 = vlaneseq
  %v2468 = vshrl.u32 %v2467, 7
  %v2469 = vsub.s32 1, %v2468
  %v2470 = vrot.slane %v1684, %v2469
  %v2471 = vlaneseq
  %v2472 = vshrl.u32 %v2471, 7
  %v2473 = vsub.s32 2, %v2472
  %v2474 = vrot.slane %v1684, %v2473
  %v2475 = vlaneseq
  %v2476 = vshrl.u32 %v2475, 7
  %v2477 = vsub.s32 3, %v2476
  %v2478 = vrot.slane %v1684, %v2477
  %v2479 = vlaneseq
  %v2480 = vshrl.u32 %v2479, 7
  %v2481 = vsub.s32 4, %v2480
  %v2482 = vrot.slane %v1684, %v2481
  %v2483 = vlaneseq
  %v2484 = vshrl.u32 %v2483, 7
  %v2485 = vsub.s32 5, %v2484
  %v2486 = vrot.slane %v1684, %v2485
  %v2487 = vlaneseq
  %v2488 = vshrl.u32 %v2487, 7
  %v2489 = vsub.s32 6, %v2488
  %v2490 = vrot.slane %v1684, %v2489
  %v2491 = vlaneseq
  %v2492 = vshrl.u32 %v2491, 7
  %v2493 = vsub.s32 7, %v2492
  %v2494 = vrot.slane %v1684, %v2493
  %v2495 = vlaneseq
  %v2496 = vshrl.u32 %v2495, 7
  %v2497 = vsub.s32 0, %v2496
  %v2498 = vrot.slane %v1685, %v2497
  %v2499 = vlaneseq
  %v2500 = vshrl.u32 %v2499, 7
  %v2501 = vsub.s32 1, %v2500
  %v2502 = vrot.slane %v1685, %v2501
  %v2503 = vlaneseq
  %v2504 = vshrl.u32 %v2503, 7
  %v2505 = vsub.s32 2, %v2504
  %v2506 = vrot.slane %v1685, %v2505
  %v2507 = vlaneseq
  %v2508 = vshrl.u32 %v2507, 7
  %v2509 = vsub.s32 3, %v2508
  %v2510 = vrot.slane %v1685, %v2509
  %v2511 = vlaneseq
  %v2512 = vshrl.u32 %v2511, 7
  %v2513 = vsub.s32 4, %v2512
  %v2514 = vrot.slane %v1685, %v2513
  %v2515 = vlaneseq
  %v2516 = vshrl.u32 %v2515, 7
  %v2517 = vsub.s32 5, %v2516
  %v2518 = vrot.slane %v1685, %v2517
  %v2519 = vlaneseq
  %v2520 = vshrl.u32 %v2519, 7
  %v2521 = vsub.s32 6, %v2520
  %v2522 = vrot.slane %v1685, %v2521
  %v2523 = vlaneseq
  %v2524 = vshrl.u32 %v2523, 7
  %v2525 = vsub.s32 7, %v2524
  %v2526 = vrot.slane %v1685, %v2525
  %v2527 = vlaneseq
  %v2528 = vshrl.u32 %v2527, 7
  %v2529 = vsub.s32 0, %v2528
  %v2530 = vrot.slane %v1686, %v2529
  %v2531 = vlaneseq
  %v2532 = vshrl.u32 %v2531, 7
  %v2533 = vsub.s32 1, %v2532
  %v2534 = vrot.slane %v1686, %v2533
  %v2535 = vlaneseq
  %v2536 = vshrl.u32 %v2535, 7
  %v2537 = vsub.s32 2, %v2536
  %v2538 = vrot.slane %v1686, %v2537
  %v2539 = vlaneseq
  %v2540 = vshrl.u32 %v2539, 7
  %v2541 = vsub.s32 3, %v2540
  %v2542 = vrot.slane %v1686, %v2541
  %v2543 = vlaneseq
  %v2544 = vshrl.u32 %v2543, 7
  %v2545 = vsub.s32 4, %v2544
  %v2546 = vrot.slane %v1686, %v2545
  %v2547 = vlaneseq
  %v2548 = vshrl.u32 %v2547, 7
  %v2549 = vsub.s32 5, %v2548
  %v2550 = vrot.slane %v1686, %v2549
  %v2551 = vlaneseq
  %v2552 = vshrl.u32 %v2551, 7
  %v2553 = vsub.s32 6, %v2552
  %v2554 = vrot.slane %v1686, %v2553
  %v2555 = vlaneseq
  %v2556 = vshrl.u32 %v2555, 7
  %v2557 = vsub.s32 7, %v2556
  %v2558 = vrot.slane %v1686, %v2557
  %v2559 = vlaneseq
  %v2560 = vshrl.u32 %v2559, 7
  %v2561 = vsub.s32 0, %v2560
  %v2562 = vrot.slane %v1687, %v2561
  %v2563 = vlaneseq
  %v2564 = vshrl.u32 %v2563, 7
  %v2565 = vsub.s32 1, %v2564
  %v2566 = vrot.slane %v1687, %v2565
  %v2567 = vlaneseq
  %v2568 = vshrl.u32 %v2567, 7
  %v2569 = vsub.s32 2, %v2568
  %v2570 = vrot.slane %v1687, %v2569
  %v2571 = vlaneseq
  %v2572 = vshrl.u32 %v2571, 7
  %v2573 = vsub.s32 3, %v2572
  %v2574 = vrot.slane %v1687, %v2573
  %v2575 = vlaneseq
  %v2576 = vshrl.u32 %v2575, 7
  %v2577 = vsub.s32 4, %v2576
  %v2578 = vrot.slane %v1687, %v2577
  %v2579 = vlaneseq
  %v2580 = vshrl.u32 %v2579, 7
  %v2581 = vsub.s32 5, %v2580
  %v2582 = vrot.slane %v1687, %v2581
  %v2583 = vlaneseq
  %v2584 = vshrl.u32 %v2583, 7
  %v2585 = vsub.s32 6, %v2584
  %v2586 = vrot.slane %v1687, %v2585
  %v2587 = vlaneseq
  %v2588 = vshrl.u32 %v2587, 7
  %v2589 = vsub.s32 7, %v2588
  %v2590 = vrot.slane %v1687, %v2589
  %v2591 = vlaneseq
  %v2592 = vshrl.u32 %v2591, 7
  %v2593 = vsub.s32 0, %v2592
  %v2594 = vrot.slane %v1688, %v2593
  %v2595 = vlaneseq
  %v2596 = vshrl.u32 %v2595, 7
  %v2597 = vsub.s32 1, %v2596
  %v2598 = vrot.slane %v1688, %v2597
  %v2599 = vlaneseq
  %v2600 = vshrl.u32 %v2599, 7
  %v2601 = vsub.s32 2, %v2600
  %v2602 = vrot.slane %v1688, %v2601
  %v2603 = vlaneseq
  %v2604 = vshrl.u32 %v2603, 7
  %v2605 = vsub.s32 3, %v2604
  %v2606 = vrot.slane %v1688, %v2605
  %v2607 = vlaneseq
  %v2608 = vshrl.u32 %v2607, 7
  %v2609 = vsub.s32 4, %v2608
  %v2610 = vrot.slane %v1688, %v2609
  %v2611 = vlaneseq
  %v2612 = vshrl.u32 %v2611, 7
  %v2613 = vsub.s32 5, %v2612
  %v2614 = vrot.slane %v1688, %v2613
  %v2615 = vlaneseq
  %v2616 = vshrl.u32 %v2615, 7
  %v2617 = vsub.s32 6, %v2616
  %v2618 = vrot.slane %v1688, %v2617
  %v2619 = vlaneseq
  %v2620 = vshrl.u32 %v2619, 7
  %v2621 = vsub.s32 7, %v2620
  %v2622 = vrot.slane %v1688, %v2621
  %v2623 = vlaneseq
  %v2624 = vshrl.u32 %v2623, 7
  %v2625 = vsub.s32 0, %v2624
  %v2626 = vrot.slane %v1689, %v2625
  %v2627 = vlaneseq
  %v2628 = vshrl.u32 %v2627, 7
  %v2629 = vsub.s32 1, %v2628
  %v2630 = vrot.slane %v1689, %v2629
  %v2631 = vlaneseq
  %v2632 = vshrl.u32 %v2631, 7
  %v2633 = vsub.s32 2, %v2632
  %v2634 = vrot.slane %v1689, %v2633
  %v2635 = vlaneseq
  %v2636 = vshrl.u32 %v2635, 7
  %v2637 = vsub.s32 3, %v2636
  %v2638 = vrot.slane %v1689, %v2637
  %v2639 = vlaneseq
  %v2640 = vshrl.u32 %v2639, 7
  %v2641 = vsub.s32 4, %v2640
  %v2642 = vrot.slane %v1689, %v2641
  %v2643 = vlaneseq
  %v2644 = vshrl.u32 %v2643, 7
  %v2645 = vsub.s32 5, %v2644
  %v2646 = vrot.slane %v1689, %v2645
  %v2647 = vlaneseq
  %v2648 = vshrl.u32 %v2647, 7
  %v2649 = vsub.s32 6, %v2648
  %v2650 = vrot.slane %v1689, %v2649
  %v2651 = vlaneseq
  %v2652 = vshrl.u32 %v2651, 7
  %v2653 = vsub.s32 7, %v2652
  %v2654 = vrot.slane %v1689, %v2653
  %v2655 = vlaneseq
  %v2656 = vshrl.u32 %v2655, 7
  %v2657 = vsub.s32 0, %v2656
  %v2658 = vrot.slane %v1690, %v2657
  %v2659 = vlaneseq
  %v2660 = vshrl.u32 %v2659, 7
  %v2661 = vsub.s32 1, %v2660
  %v2662 = vrot.slane %v1690, %v2661
  %v2663 = vlaneseq
  %v2664 = vshrl.u32 %v2663, 7
  %v2665 = vsub.s32 2, %v2664
  %v2666 = vrot.slane %v1690, %v2665
  %v2667 = vlaneseq
  %v2668 = vshrl.u32 %v2667, 7
  %v2669 = vsub.s32 3, %v2668
  %v2670 = vrot.slane %v1690, %v2669
  %v2671 = vlaneseq
  %v2672 = vshrl.u32 %v2671, 7
  %v2673 = vsub.s32 4, %v2672
  %v2674 = vrot.slane %v1690, %v2673
  %v2675 = vlaneseq
  %v2676 = vshrl.u32 %v2675, 7
  %v2677 = vsub.s32 5, %v2676
  %v2678 = vrot.slane %v1690, %v2677
  %v2679 = vlaneseq
  %v2680 = vshrl.u32 %v2679, 7
  %v2681 = vsub.s32 6, %v2680
  %v2682 = vrot.slane %v1690, %v2681
  %v2683 = vlaneseq
  %v2684 = vshrl.u32 %v2683, 7
  %v2685 = vsub.s32 7, %v2684
  %v2686 = vrot.slane %v1690, %v2685
  %v2687 = vlaneseq
  %v2688 = vshrl.u32 %v2687, 7
  %v2689 = vsub.s32 0, %v2688
  %v2690 = vrot.slane %v1691, %v2689
  %v2691 = vlaneseq
  %v2692 = vshrl.u32 %v2691, 7
  %v2693 = vsub.s32 1, %v2692
  %v2694 = vrot.slane %v1691, %v2693
  %v2695 = vlaneseq
  %v2696 = vshrl.u32 %v2695, 7
  %v2697 = vsub.s32 2, %v2696
  %v2698 = vrot.slane %v1691, %v2697
  %v2699 = vlaneseq
  %v2700 = vshrl.u32 %v2699, 7
  %v2701 = vsub.s32 3, %v2700
  %v2702 = vrot.slane %v1691, %v2701
  %v2703 = vlaneseq
  %v2704 = vshrl.u32 %v2703, 7
  %v2705 = vsub.s32 4, %v2704
  %v2706 = vrot.slane %v1691, %v2705
  %v2707 = vlaneseq
  %v2708 = vshrl.u32 %v2707, 7
  %v2709 = vsub.s32 5, %v2708
  %v2710 = vrot.slane %v1691, %v2709
  %v2711 = vlaneseq
  %v2712 = vshrl.u32 %v2711, 7
  %v2713 = vsub.s32 6, %v2712
  %v2714 = vrot.slane %v1691, %v2713
  %v2715 = vlaneseq
  %v2716 = vshrl.u32 %v2715, 7
  %v2717 = vsub.s32 7, %v2716
  %v2718 = vrot.slane %v1691, %v2717
  %v2719 = vlaneseq
  %v2720 = vshrl.u32 %v2719, 7
  %v2721 = vsub.s32 0, %v2720
  %v2722 = vrot.slane %v1692, %v2721
  %v2723 = vlaneseq
  %v2724 = vshrl.u32 %v2723, 7
  %v2725 = vsub.s32 1, %v2724
  %v2726 = vrot.slane %v1692, %v2725
  %v2727 = vlaneseq
  %v2728 = vshrl.u32 %v2727, 7
  %v2729 = vsub.s32 2, %v2728
  %v2730 = vrot.slane %v1692, %v2729
  %v2731 = vlaneseq
  %v2732 = vshrl.u32 %v2731, 7
  %v2733 = vsub.s32 3, %v2732
  %v2734 = vrot.slane %v1692, %v2733
  %v2735 = vlaneseq
  %v2736 = vshrl.u32 %v2735, 7
  %v2737 = vsub.s32 4, %v2736
  %v2738 = vrot.slane %v1692, %v2737
  %v2739 = vlaneseq
  %v2740 = vshrl.u32 %v2739, 7
  %v2741 = vsub.s32 5, %v2740
  %v2742 = vrot.slane %v1692, %v2741
  %v2743 = vlaneseq
  %v2744 = vshrl.u32 %v2743, 7
  %v2745 = vsub.s32 6, %v2744
  %v2746 = vrot.slane %v1692, %v2745
  %v2747 = vlaneseq
  %v2748 = vshrl.u32 %v2747, 7
  %v2749 = vsub.s32 7, %v2748
  %v2750 = vrot.slane %v1692, %v2749
  %v2751 = vlaneseq
  %v2752 = vshrl.u32 %v2751, 7
  %v2753 = vsub.s32 0, %v2752
  %v2754 = vrot.slane %v1693, %v2753
  %v2755 = vlaneseq
  %v2756 = vshrl.u32 %v2755, 7
  %v2757 = vsub.s32 1, %v2756
  %v2758 = vrot.slane %v1693, %v2757
  %v2759 = vlaneseq
  %v2760 = vshrl.u32 %v2759, 7
  %v2761 = vsub.s32 2, %v2760
  %v2762 = vrot.slane %v1693, %v2761
  %v2763 = vlaneseq
  %v2764 = vshrl.u32 %v2763, 7
  %v2765 = vsub.s32 3, %v2764
  %v2766 = vrot.slane %v1693, %v2765
  %v2767 = vlaneseq
  %v2768 = vshrl.u32 %v2767, 7
  %v2769 = vsub.s32 4, %v2768
  %v2770 = vrot.slane %v1693, %v2769
  %v2771 = vlaneseq
  %v2772 = vshrl.u32 %v2771, 7
  %v2773 = vsub.s32 5, %v2772
  %v2774 = vrot.slane %v1693, %v2773
  %v2775 = vlaneseq
  %v2776 = vshrl.u32 %v2775, 7
  %v2777 = vsub.s32 6, %v2776
  %v2778 = vrot.slane %v1693, %v2777
  %v2779 = vlaneseq
  %v2780 = vshrl.u32 %v2779, 7
  %v2781 = vsub.s32 7, %v2780
  %v2782 = vrot.slane %v1693, %v2781
  %v2783 = vlaneseq
  %v2784 = vshrl.u32 %v2783, 7
  %v2785 = vsub.s32 0, %v2784
  %v2786 = vrot.slane %v1694, %v2785
  %v2787 = vlaneseq
  %v2788 = vshrl.u32 %v2787, 7
  %v2789 = vsub.s32 1, %v2788
  %v2790 = vrot.slane %v1694, %v2789
  %v2791 = vlaneseq
  %v2792 = vshrl.u32 %v2791, 7
  %v2793 = vsub.s32 2, %v2792
  %v2794 = vrot.slane %v1694, %v2793
  %v2795 = vlaneseq
  %v2796 = vshrl.u32 %v2795, 7
  %v2797 = vsub.s32 3, %v2796
  %v2798 = vrot.slane %v1694, %v2797
  %v2799 = vlaneseq
  %v2800 = vshrl.u32 %v2799, 7
  %v2801 = vsub.s32 4, %v2800
  %v2802 = vrot.slane %v1694, %v2801
  %v2803 = vlaneseq
  %v2804 = vshrl.u32 %v2803, 7
  %v2805 = vsub.s32 5, %v2804
  %v2806 = vrot.slane %v1694, %v2805
  %v2807 = vlaneseq
  %v2808 = vshrl.u32 %v2807, 7
  %v2809 = vsub.s32 6, %v2808
  %v2810 = vrot.slane %v1694, %v2809
  %v2811 = vlaneseq
  %v2812 = vshrl.u32 %v2811, 7
  %v2813 = vsub.s32 7, %v2812
  %v2814 = vrot.slane %v1694, %v2813
  %v2815 = vlaneseq
  %v2816 = vshrl.u32 %v2815, 7
  %v2817 = vsub.s32 0, %v2816
  %v2818 = vrot.slane %v1695, %v2817
  %v2819 = vlaneseq
  %v2820 = vshrl.u32 %v2819, 7
  %v2821 = vsub.s32 1, %v2820
  %v2822 = vrot.slane %v1695, %v2821
  %v2823 = vlaneseq
  %v2824 = vshrl.u32 %v2823, 7
  %v2825 = vsub.s32 2, %v2824
  %v2826 = vrot.slane %v1695, %v2825
  %v2827 = vlaneseq
  %v2828 = vshrl.u32 %v2827, 7
  %v2829 = vsub.s32 3, %v2828
  %v2830 = vrot.slane %v1695, %v2829
  %v2831 = vlaneseq
  %v2832 = vshrl.u32 %v2831, 7
  %v2833 = vsub.s32 4, %v2832
  %v2834 = vrot.slane %v1695, %v2833
  %v2835 = vlaneseq
  %v2836 = vshrl.u32 %v2835, 7
  %v2837 = vsub.s32 5, %v2836
  %v2838 = vrot.slane %v1695, %v2837
  %v2839 = vlaneseq
  %v2840 = vshrl.u32 %v2839, 7
  %v2841 = vsub.s32 6, %v2840
  %v2842 = vrot.slane %v1695, %v2841
  %v2843 = vlaneseq
  %v2844 = vshrl.u32 %v2843, 7
  %v2845 = vsub.s32 7, %v2844
  %v2846 = vrot.slane %v1695, %v2845
  %v2847 = vlaneseq
  %v2848 = vshrl.u32 %v2847, 7
  %v2849 = vsub.s32 0, %v2848
  %v2850 = vrot.slane %v1696, %v2849
  %v2851 = vlaneseq
  %v2852 = vshrl.u32 %v2851, 7
  %v2853 = vsub.s32 1, %v2852
  %v2854 = vrot.slane %v1696, %v2853
  %v2855 = vlaneseq
  %v2856 = vshrl.u32 %v2855, 7
  %v2857 = vsub.s32 2, %v2856
  %v2858 = vrot.slane %v1696, %v2857
  %v2859 = vlaneseq
  %v2860 = vshrl.u32 %v2859, 7
  %v2861 = vsub.s32 3, %v2860
  %v2862 = vrot.slane %v1696, %v2861
  %v2863 = vlaneseq
  %v2864 = vshrl.u32 %v2863, 7
  %v2865 = vsub.s32 4, %v2864
  %v2866 = vrot.slane %v1696, %v2865
  %v2867 = vlaneseq
  %v2868 = vshrl.u32 %v2867, 7
  %v2869 = vsub.s32 5, %v2868
  %v2870 = vrot.slane %v1696, %v2869
  %v2871 = vlaneseq
  %v2872 = vshrl.u32 %v2871, 7
  %v2873 = vsub.s32 6, %v2872
  %v2874 = vrot.slane %v1696, %v2873
  %v2875 = vlaneseq
  %v2876 = vshrl.u32 %v2875, 7
  %v2877 = vsub.s32 7, %v2876
  %v2878 = vrot.slane %v1696, %v2877
  %v2879 = vlaneseq
  %v2880 = vshrl.u32 %v2879, 7
  %v2881 = vsub.s32 0, %v2880
  %v2882 = vrot.slane %v1697, %v2881
  %v2883 = vlaneseq
  %v2884 = vshrl.u32 %v2883, 7
  %v2885 = vsub.s32 1, %v2884
  %v2886 = vrot.slane %v1697, %v2885
  %v2887 = vlaneseq
  %v2888 = vshrl.u32 %v2887, 7
  %v2889 = vsub.s32 2, %v2888
  %v2890 = vrot.slane %v1697, %v2889
  %v2891 = vlaneseq
  %v2892 = vshrl.u32 %v2891, 7
  %v2893 = vsub.s32 3, %v2892
  %v2894 = vrot.slane %v1697, %v2893
  %v2895 = vlaneseq
  %v2896 = vshrl.u32 %v2895, 7
  %v2897 = vsub.s32 4, %v2896
  %v2898 = vrot.slane %v1697, %v2897
  %v2899 = vlaneseq
  %v2900 = vshrl.u32 %v2899, 7
  %v2901 = vsub.s32 5, %v2900
  %v2902 = vrot.slane %v1697, %v2901
  %v2903 = vlaneseq
  %v2904 = vshrl.u32 %v2903, 7
  %v2905 = vsub.s32 6, %v2904
  %v2906 = vrot.slane %v1697, %v2905
  %v2907 = vlaneseq
  %v2908 = vshrl.u32 %v2907, 7
  %v2909 = vsub.s32 7, %v2908
  %v2910 = vrot.slane %v1697, %v2909
  %v2911 = vlaneseq
  %v2912 = vshrl.u32 %v2911, 7
  %v2913 = vsub.s32 0, %v2912
  %v2914 = vrot.slane %v1698, %v2913
  %v2915 = vlaneseq
  %v2916 = vshrl.u32 %v2915, 7
  %v2917 = vsub.s32 1, %v2916
  %v2918 = vrot.slane %v1698, %v2917
  %v2919 = vlaneseq
  %v2920 = vshrl.u32 %v2919, 7
  %v2921 = vsub.s32 2, %v2920
  %v2922 = vrot.slane %v1698, %v2921
  %v2923 = vlaneseq
  %v2924 = vshrl.u32 %v2923, 7
  %v2925 = vsub.s32 3, %v2924
  %v2926 = vrot.slane %v1698, %v2925
  %v2927 = vlaneseq
  %v2928 = vshrl.u32 %v2927, 7
  %v2929 = vsub.s32 4, %v2928
  %v2930 = vrot.slane %v1698, %v2929
  %v2931 = vlaneseq
  %v2932 = vshrl.u32 %v2931, 7
  %v2933 = vsub.s32 5, %v2932
  %v2934 = vrot.slane %v1698, %v2933
  %v2935 = vlaneseq
  %v2936 = vshrl.u32 %v2935, 7
  %v2937 = vsub.s32 6, %v2936
  %v2938 = vrot.slane %v1698, %v2937
  %v2939 = vlaneseq
  %v2940 = vshrl.u32 %v2939, 7
  %v2941 = vsub.s32 7, %v2940
  %v2942 = vrot.slane %v1698, %v2941
  %v2943 = vlaneseq
  %v2944 = vshrl.u32 %v2943, 7
  %v2945 = vsub.s32 0, %v2944
  %v2946 = vrot.slane %v1699, %v2945
  %v2947 = vlaneseq
  %v2948 = vshrl.u32 %v2947, 7
  %v2949 = vsub.s32 1, %v2948
  %v2950 = vrot.slane %v1699, %v2949
  %v2951 = vlaneseq
  %v2952 = vshrl.u32 %v2951, 7
  %v2953 = vsub.s32 2, %v2952
  %v2954 = vrot.slane %v1699, %v2953
  %v2955 = vlaneseq
  %v2956 = vshrl.u32 %v2955, 7
  %v2957 = vsub.s32 3, %v2956
  %v2958 = vrot.slane %v1699, %v2957
  %v2959 = vlaneseq
  %v2960 = vshrl.u32 %v2959, 7
  %v2961 = vsub.s32 4, %v2960
  %v2962 = vrot.slane %v1699, %v2961
  %v2963 = vlaneseq
  %v2964 = vshrl.u32 %v2963, 7
  %v2965 = vsub.s32 5, %v2964
  %v2966 = vrot.slane %v1699, %v2965
  %v2967 = vlaneseq
  %v2968 = vshrl.u32 %v2967, 7
  %v2969 = vsub.s32 6, %v2968
  %v2970 = vrot.slane %v1699, %v2969
  %v2971 = vlaneseq
  %v2972 = vshrl.u32 %v2971, 7
  %v2973 = vsub.s32 7, %v2972
  %v2974 = vrot.slane %v1699, %v2973
  %v2975 = vlaneseq
  %v2976 = vshrl.u32 %v2975, 7
  %v2977 = vsub.s32 0, %v2976
  %v2978 = vrot.slane %v1700, %v2977
  %v2979 = vlaneseq
  %v2980 = vshrl.u32 %v2979, 7
  %v2981 = vsub.s32 1, %v2980
  %v2982 = vrot.slane %v1700, %v2981
  %v2983 = vlaneseq
  %v2984 = vshrl.u32 %v2983, 7
  %v2985 = vsub.s32 2, %v2984
  %v2986 = vrot.slane %v1700, %v2985
  %v2987 = vlaneseq
  %v2988 = vshrl.u32 %v2987, 7
  %v2989 = vsub.s32 3, %v2988
  %v2990 = vrot.slane %v1700, %v2989
  %v2991 = vlaneseq
  %v2992 = vshrl.u32 %v2991, 7
  %v2993 = vsub.s32 4, %v2992
  %v2994 = vrot.slane %v1700, %v2993
  %v2995 = vlaneseq
  %v2996 = vshrl.u32 %v2995, 7
  %v2997 = vsub.s32 5, %v2996
  %v2998 = vrot.slane %v1700, %v2997
  %v2999 = vlaneseq
  %v3000 = vshrl.u32 %v2999, 7
  %v3001 = vsub.s32 6, %v3000
  %v3002 = vrot.slane %v1700, %v3001
  %v3003 = vlaneseq
  %v3004 = vshrl.u32 %v3003, 7
  %v3005 = vsub.s32 7, %v3004
  %v3006 = vrot.slane %v1700, %v3005
  %v3007 = vlaneseq
  %v3008 = vshrl.u32 %v3007, 7
  %v3009 = vsub.s32 0, %v3008
  %v3010 = vrot.slane %v1701, %v3009
  %v3011 = vlaneseq
  %v3012 = vshrl.u32 %v3011, 7
  %v3013 = vsub.s32 1, %v3012
  %v3014 = vrot.slane %v1701, %v3013
  %v3015 = vlaneseq
  %v3016 = vshrl.u32 %v3015, 7
  %v3017 = vsub.s32 2, %v3016
  %v3018 = vrot.slane %v1701, %v3017
  %v3019 = vlaneseq
  %v3020 = vshrl.u32 %v3019, 7
  %v3021 = vsub.s32 3, %v3020
  %v3022 = vrot.slane %v1701, %v3021
  %v3023 = vlaneseq
  %v3024 = vshrl.u32 %v3023, 7
  %v3025 = vsub.s32 4, %v3024
  %v3026 = vrot.slane %v1701, %v3025
  %v3027 = vlaneseq
  %v3028 = vshrl.u32 %v3027, 7
  %v3029 = vsub.s32 5, %v3028
  %v3030 = vrot.slane %v1701, %v3029
  %v3031 = vlaneseq
  %v3032 = vshrl.u32 %v3031, 7
  %v3033 = vsub.s32 6, %v3032
  %v3034 = vrot.slane %v1701, %v3033
  %v3035 = vlaneseq
  %v3036 = vshrl.u32 %v3035, 7
  %v3037 = vsub.s32 7, %v3036
  %v3038 = vrot.slane %v1701, %v3037
  %v3039 = vlaneseq
  %v3040 = vshrl.u32 %v3039, 7
  %v3041 = vsub.s32 0, %v3040
  %v3042 = vrot.slane %v1702, %v3041
  %v3043 = vlaneseq
  %v3044 = vshrl.u32 %v3043, 7
  %v3045 = vsub.s32 1, %v3044
  %v3046 = vrot.slane %v1702, %v3045
  %v3047 = vlaneseq
  %v3048 = vshrl.u32 %v3047, 7
  %v3049 = vsub.s32 2, %v3048
  %v3050 = vrot.slane %v1702, %v3049
  %v3051 = vlaneseq
  %v3052 = vshrl.u32 %v3051, 7
  %v3053 = vsub.s32 3, %v3052
  %v3054 = vrot.slane %v1702, %v3053
  %v3055 = vlaneseq
  %v3056 = vshrl.u32 %v3055, 7
  %v3057 = vsub.s32 4, %v3056
  %v3058 = vrot.slane %v1702, %v3057
  %v3059 = vlaneseq
  %v3060 = vshrl.u32 %v3059, 7
  %v3061 = vsub.s32 5, %v3060
  %v3062 = vrot.slane %v1702, %v3061
  %v3063 = vlaneseq
  %v3064 = vshrl.u32 %v3063, 7
  %v3065 = vsub.s32 6, %v3064
  %v3066 = vrot.slane %v1702, %v3065
  %v3067 = vlaneseq
  %v3068 = vshrl.u32 %v3067, 7
  %v3069 = vsub.s32 7, %v3068
  %v3070 = vrot.slane %v1702, %v3069
  %v3071 = vlaneseq
  %v3072 = vshrl.u32 %v3071, 7
  %v3073 = vsub.s32 0, %v3072
  %v3074 = vrot.slane %v1703, %v3073
  %v3075 = vlaneseq
  %v3076 = vshrl.u32 %v3075, 7
  %v3077 = vsub.s32 1, %v3076
  %v3078 = vrot.slane %v1703, %v3077
  %v3079 = vlaneseq
  %v3080 = vshrl.u32 %v3079, 7
  %v3081 = vsub.s32 2, %v3080
  %v3082 = vrot.slane %v1703, %v3081
  %v3083 = vlaneseq
  %v3084 = vshrl.u32 %v3083, 7
  %v3085 = vsub.s32 3, %v3084
  %v3086 = vrot.slane %v1703, %v3085
  %v3087 = vlaneseq
  %v3088 = vshrl.u32 %v3087, 7
  %v3089 = vsub.s32 4, %v3088
  %v3090 = vrot.slane %v1703, %v3089
  %v3091 = vlaneseq
  %v3092 = vshrl.u32 %v3091, 7
  %v3093 = vsub.s32 5, %v3092
  %v3094 = vrot.slane %v1703, %v3093
  %v3095 = vlaneseq
  %v3096 = vshrl.u32 %v3095, 7
  %v3097 = vsub.s32 6, %v3096
  %v3098 = vrot.slane %v1703, %v3097
  %v3099 = vlaneseq
  %v3100 = vshrl.u32 %v3099, 7
  %v3101 = vsub.s32 7, %v3100
  %v3102 = vrot.slane %v1703, %v3101
  %v3103 = vlaneseq
  %v3104 = vshrl.u32 %v3103, 7
  %v3105 = vsub.s32 0, %v3104
  %v3106 = vrot.slane %v1704, %v3105
  %v3107 = vlaneseq
  %v3108 = vshrl.u32 %v3107, 7
  %v3109 = vsub.s32 1, %v3108
  %v3110 = vrot.slane %v1704, %v3109
  %v3111 = vlaneseq
  %v3112 = vshrl.u32 %v3111, 7
  %v3113 = vsub.s32 2, %v3112
  %v3114 = vrot.slane %v1704, %v3113
  %v3115 = vlaneseq
  %v3116 = vshrl.u32 %v3115, 7
  %v3117 = vsub.s32 3, %v3116
  %v3118 = vrot.slane %v1704, %v3117
  %v3119 = vlaneseq
  %v3120 = vshrl.u32 %v3119, 7
  %v3121 = vsub.s32 4, %v3120
  %v3122 = vrot.slane %v1704, %v3121
  %v3123 = vlaneseq
  %v3124 = vshrl.u32 %v3123, 7
  %v3125 = vsub.s32 5, %v3124
  %v3126 = vrot.slane %v1704, %v3125
  %v3127 = vlaneseq
  %v3128 = vshrl.u32 %v3127, 7
  %v3129 = vsub.s32 6, %v3128
  %v3130 = vrot.slane %v1704, %v3129
  %v3131 = vlaneseq
  %v3132 = vshrl.u32 %v3131, 7
  %v3133 = vsub.s32 7, %v3132
  %v3134 = vrot.slane %v1704, %v3133
  %v3135 = vlaneseq
  %v3136 = vshrl.u32 %v3135, 7
  %v3137 = vsub.s32 0, %v3136
  %v3138 = vrot.slane %v1705, %v3137
  %v3139 = vlaneseq
  %v3140 = vshrl.u32 %v3139, 7
  %v3141 = vsub.s32 1, %v3140
  %v3142 = vrot.slane %v1705, %v3141
  %v3143 = vlaneseq
  %v3144 = vshrl.u32 %v3143, 7
  %v3145 = vsub.s32 2, %v3144
  %v3146 = vrot.slane %v1705, %v3145
  %v3147 = vlaneseq
  %v3148 = vshrl.u32 %v3147, 7
  %v3149 = vsub.s32 3, %v3148
  %v3150 = vrot.slane %v1705, %v3149
  %v3151 = vlaneseq
  %v3152 = vshrl.u32 %v3151, 7
  %v3153 = vsub.s32 4, %v3152
  %v3154 = vrot.slane %v1705, %v3153
  %v3155 = vlaneseq
  %v3156 = vshrl.u32 %v3155, 7
  %v3157 = vsub.s32 5, %v3156
  %v3158 = vrot.slane %v1705, %v3157
  %v3159 = vlaneseq
  %v3160 = vshrl.u32 %v3159, 7
  %v3161 = vsub.s32 6, %v3160
  %v3162 = vrot.slane %v1705, %v3161
  %v3163 = vlaneseq
  %v3164 = vshrl.u32 %v3163, 7
  %v3165 = vsub.s32 7, %v3164
  %v3166 = vrot.slane %v1705, %v3165
  %v3167 = vlaneseq
  %v3168 = vshrl.u32 %v3167, 7
  %v3169 = vsub.s32 0, %v3168
  %v3170 = vrot.slane %v1706, %v3169
  %v3171 = vlaneseq
  %v3172 = vshrl.u32 %v3171, 7
  %v3173 = vsub.s32 1, %v3172
  %v3174 = vrot.slane %v1706, %v3173
  %v3175 = vlaneseq
  %v3176 = vshrl.u32 %v3175, 7
  %v3177 = vsub.s32 2, %v3176
  %v3178 = vrot.slane %v1706, %v3177
  %v3179 = vlaneseq
  %v3180 = vshrl.u32 %v3179, 7
  %v3181 = vsub.s32 3, %v3180
  %v3182 = vrot.slane %v1706, %v3181
  %v3183 = vlaneseq
  %v3184 = vshrl.u32 %v3183, 7
  %v3185 = vsub.s32 4, %v3184
  %v3186 = vrot.slane %v1706, %v3185
  %v3187 = vlaneseq
  %v3188 = vshrl.u32 %v3187, 7
  %v3189 = vsub.s32 5, %v3188
  %v3190 = vrot.slane %v1706, %v3189
  %v3191 = vlaneseq
  %v3192 = vshrl.u32 %v3191, 7
  %v3193 = vsub.s32 6, %v3192
  %v3194 = vrot.slane %v1706, %v3193
  %v3195 = vlaneseq
  %v3196 = vshrl.u32 %v3195, 7
  %v3197 = vsub.s32 7, %v3196
  %v3198 = vrot.slane %v1706, %v3197
  %v3199 = vlaneseq
  %v3200 = vshrl.u32 %v3199, 7
  %v3201 = vsub.s32 0, %v3200
  %v3202 = vrot.slane %v1707, %v3201
  %v3203 = vlaneseq
  %v3204 = vshrl.u32 %v3203, 7
  %v3205 = vsub.s32 1, %v3204
  %v3206 = vrot.slane %v1707, %v3205
  %v3207 = vlaneseq
  %v3208 = vshrl.u32 %v3207, 7
  %v3209 = vsub.s32 2, %v3208
  %v3210 = vrot.slane %v1707, %v3209
  %v3211 = vlaneseq
  %v3212 = vshrl.u32 %v3211, 7
  %v3213 = vsub.s32 3, %v3212
  %v3214 = vrot.slane %v1707, %v3213
  %v3215 = vlaneseq
  %v3216 = vshrl.u32 %v3215, 7
  %v3217 = vsub.s32 4, %v3216
  %v3218 = vrot.slane %v1707, %v3217
  %v3219 = vlaneseq
  %v3220 = vshrl.u32 %v3219, 7
  %v3221 = vsub.s32 5, %v3220
  %v3222 = vrot.slane %v1707, %v3221
  %v3223 = vlaneseq
  %v3224 = vshrl.u32 %v3223, 7
  %v3225 = vsub.s32 6, %v3224
  %v3226 = vrot.slane %v1707, %v3225
  %v3227 = vlaneseq
  %v3228 = vshrl.u32 %v3227, 7
  %v3229 = vsub.s32 7, %v3228
  %v3230 = vrot.slane %v1707, %v3229
  %v3231 = vlaneseq
  %v3232 = vshrl.u32 %v3231, 7
  %v3233 = vsub.s32 0, %v3232
  %v3234 = vrot.slane %v1708, %v3233
  %v3235 = vlaneseq
  %v3236 = vshrl.u32 %v3235, 7
  %v3237 = vsub.s32 1, %v3236
  %v3238 = vrot.slane %v1708, %v3237
  %v3239 = vlaneseq
  %v3240 = vshrl.u32 %v3239, 7
  %v3241 = vsub.s32 2, %v3240
  %v3242 = vrot.slane %v1708, %v3241
  %v3243 = vlaneseq
  %v3244 = vshrl.u32 %v3243, 7
  %v3245 = vsub.s32 3, %v3244
  %v3246 = vrot.slane %v1708, %v3245
  %v3247 = vlaneseq
  %v3248 = vshrl.u32 %v3247, 7
  %v3249 = vsub.s32 4, %v3248
  %v3250 = vrot.slane %v1708, %v3249
  %v3251 = vlaneseq
  %v3252 = vshrl.u32 %v3251, 7
  %v3253 = vsub.s32 5, %v3252
  %v3254 = vrot.slane %v1708, %v3253
  %v3255 = vlaneseq
  %v3256 = vshrl.u32 %v3255, 7
  %v3257 = vsub.s32 6, %v3256
  %v3258 = vrot.slane %v1708, %v3257
  %v3259 = vlaneseq
  %v3260 = vshrl.u32 %v3259, 7
  %v3261 = vsub.s32 7, %v3260
  %v3262 = vrot.slane %v1708, %v3261
  %v3263 = vlaneseq
  %v3264 = vshrl.u32 %v3263, 7
  %v3265 = vsub.s32 0, %v3264
  %v3266 = vrot.slane %v1709, %v3265
  %v3267 = vlaneseq
  %v3268 = vshrl.u32 %v3267, 7
  %v3269 = vsub.s32 1, %v3268
  %v3270 = vrot.slane %v1709, %v3269
  %v3271 = vlaneseq
  %v3272 = vshrl.u32 %v3271, 7
  %v3273 = vsub.s32 2, %v3272
  %v3274 = vrot.slane %v1709, %v3273
  %v3275 = vlaneseq
  %v3276 = vshrl.u32 %v3275, 7
  %v3277 = vsub.s32 3, %v3276
  %v3278 = vrot.slane %v1709, %v3277
  %v3279 = vlaneseq
  %v3280 = vshrl.u32 %v3279, 7
  %v3281 = vsub.s32 4, %v3280
  %v3282 = vrot.slane %v1709, %v3281
  %v3283 = vlaneseq
  %v3284 = vshrl.u32 %v3283, 7
  %v3285 = vsub.s32 5, %v3284
  %v3286 = vrot.slane %v1709, %v3285
  %v3287 = vlaneseq
  %v3288 = vshrl.u32 %v3287, 7
  %v3289 = vsub.s32 6, %v3288
  %v3290 = vrot.slane %v1709, %v3289
  %v3291 = vlaneseq
  %v3292 = vshrl.u32 %v3291, 7
  %v3293 = vsub.s32 7, %v3292
  %v3294 = vrot.slane %v1709, %v3293
  %v3295 = vlaneseq
  %v3296 = vshrl.u32 %v3295, 7
  %v3297 = vsub.s32 0, %v3296
  %v3298 = vrot.slane %v1710, %v3297
  %v3299 = vlaneseq
  %v3300 = vshrl.u32 %v3299, 7
  %v3301 = vsub.s32 1, %v3300
  %v3302 = vrot.slane %v1710, %v3301
  %v3303 = vlaneseq
  %v3304 = vshrl.u32 %v3303, 7
  %v3305 = vsub.s32 2, %v3304
  %v3306 = vrot.slane %v1710, %v3305
  %v3307 = vlaneseq
  %v3308 = vshrl.u32 %v3307, 7
  %v3309 = vsub.s32 3, %v3308
  %v3310 = vrot.slane %v1710, %v3309
  %v3311 = vlaneseq
  %v3312 = vshrl.u32 %v3311, 7
  %v3313 = vsub.s32 4, %v3312
  %v3314 = vrot.slane %v1710, %v3313
  %v3315 = vlaneseq
  %v3316 = vshrl.u32 %v3315, 7
  %v3317 = vsub.s32 5, %v3316
  %v3318 = vrot.slane %v1710, %v3317
  %v3319 = vlaneseq
  %v3320 = vshrl.u32 %v3319, 7
  %v3321 = vsub.s32 6, %v3320
  %v3322 = vrot.slane %v1710, %v3321
  %v3323 = vlaneseq
  %v3324 = vshrl.u32 %v3323, 7
  %v3325 = vsub.s32 7, %v3324
  %v3326 = vrot.slane %v1710, %v3325
  %v3327 = vlaneseq
  %v3328 = vshrl.u32 %v3327, 7
  %v3329 = vsub.s32 0, %v3328
  %v3330 = vrot.slane %v1711, %v3329
  %v3331 = vlaneseq
  %v3332 = vshrl.u32 %v3331, 7
  %v3333 = vsub.s32 1, %v3332
  %v3334 = vrot.slane %v1711, %v3333
  %v3335 = vlaneseq
  %v3336 = vshrl.u32 %v3335, 7
  %v3337 = vsub.s32 2, %v3336
  %v3338 = vrot.slane %v1711, %v3337
  %v3339 = vlaneseq
  %v3340 = vshrl.u32 %v3339, 7
  %v3341 = vsub.s32 3, %v3340
  %v3342 = vrot.slane %v1711, %v3341
  %v3343 = vlaneseq
  %v3344 = vshrl.u32 %v3343, 7
  %v3345 = vsub.s32 4, %v3344
  %v3346 = vrot.slane %v1711, %v3345
  %v3347 = vlaneseq
  %v3348 = vshrl.u32 %v3347, 7
  %v3349 = vsub.s32 5, %v3348
  %v3350 = vrot.slane %v1711, %v3349
  %v3351 = vlaneseq
  %v3352 = vshrl.u32 %v3351, 7
  %v3353 = vsub.s32 6, %v3352
  %v3354 = vrot.slane %v1711, %v3353
  %v3355 = vlaneseq
  %v3356 = vshrl.u32 %v3355, 7
  %v3357 = vsub.s32 7, %v3356
  %v3358 = vrot.slane %v1711, %v3357
  %v3359 = vlaneseq
  %v3360 = vshrl.u32 %v3359, 7
  %v3361 = vsub.s32 0, %v3360
  %v3362 = vrot.slane %v1712, %v3361
  %v3363 = vlaneseq
  %v3364 = vshrl.u32 %v3363, 7
  %v3365 = vsub.s32 1, %v3364
  %v3366 = vrot.slane %v1712, %v3365
  %v3367 = vlaneseq
  %v3368 = vshrl.u32 %v3367, 7
  %v3369 = vsub.s32 2, %v3368
  %v3370 = vrot.slane %v1712, %v3369
  %v3371 = vlaneseq
  %v3372 = vshrl.u32 %v3371, 7
  %v3373 = vsub.s32 3, %v3372
  %v3374 = vrot.slane %v1712, %v3373
  %v3375 = vlaneseq
  %v3376 = vshrl.u32 %v3375, 7
  %v3377 = vsub.s32 4, %v3376
  %v3378 = vrot.slane %v1712, %v3377
  %v3379 = vlaneseq
  %v3380 = vshrl.u32 %v3379, 7
  %v3381 = vsub.s32 5, %v3380
  %v3382 = vrot.slane %v1712, %v3381
  %v3383 = vlaneseq
  %v3384 = vshrl.u32 %v3383, 7
  %v3385 = vsub.s32 6, %v3384
  %v3386 = vrot.slane %v1712, %v3385
  %v3387 = vlaneseq
  %v3388 = vshrl.u32 %v3387, 7
  %v3389 = vsub.s32 7, %v3388
  %v3390 = vrot.slane %v1712, %v3389
  %v3391 = vlaneseq
  %v3392 = vshrl.u32 %v3391, 7
  %v3393 = vsub.s32 0, %v3392
  %v3394 = vrot.slane %v1713, %v3393
  %v3395 = vlaneseq
  %v3396 = vshrl.u32 %v3395, 7
  %v3397 = vsub.s32 1, %v3396
  %v3398 = vrot.slane %v1713, %v3397
  %v3399 = vlaneseq
  %v3400 = vshrl.u32 %v3399, 7
  %v3401 = vsub.s32 2, %v3400
  %v3402 = vrot.slane %v1713, %v3401
  %v3403 = vlaneseq
  %v3404 = vshrl.u32 %v3403, 7
  %v3405 = vsub.s32 3, %v3404
  %v3406 = vrot.slane %v1713, %v3405
  %v3407 = vlaneseq
  %v3408 = vshrl.u32 %v3407, 7
  %v3409 = vsub.s32 4, %v3408
  %v3410 = vrot.slane %v1713, %v3409
  %v3411 = vlaneseq
  %v3412 = vshrl.u32 %v3411, 7
  %v3413 = vsub.s32 5, %v3412
  %v3414 = vrot.slane %v1713, %v3413
  %v3415 = vlaneseq
  %v3416 = vshrl.u32 %v3415, 7
  %v3417 = vsub.s32 6, %v3416
  %v3418 = vrot.slane %v1713, %v3417
  %v3419 = vlaneseq
  %v3420 = vshrl.u32 %v3419, 7
  %v3421 = vsub.s32 7, %v3420
  %v3422 = vrot.slane %v1713, %v3421
  %v3423 = vlaneseq
  %v3424 = vshrl.u32 %v3423, 7
  %v3425 = vsub.s32 0, %v3424
  %v3426 = vrot.slane %v1714, %v3425
  %v3427 = vlaneseq
  %v3428 = vshrl.u32 %v3427, 7
  %v3429 = vsub.s32 1, %v3428
  %v3430 = vrot.slane %v1714, %v3429
  %v3431 = vlaneseq
  %v3432 = vshrl.u32 %v3431, 7
  %v3433 = vsub.s32 2, %v3432
  %v3434 = vrot.slane %v1714, %v3433
  %v3435 = vlaneseq
  %v3436 = vshrl.u32 %v3435, 7
  %v3437 = vsub.s32 3, %v3436
  %v3438 = vrot.slane %v1714, %v3437
  %v3439 = vlaneseq
  %v3440 = vshrl.u32 %v3439, 7
  %v3441 = vsub.s32 4, %v3440
  %v3442 = vrot.slane %v1714, %v3441
  %v3443 = vlaneseq
  %v3444 = vshrl.u32 %v3443, 7
  %v3445 = vsub.s32 5, %v3444
  %v3446 = vrot.slane %v1714, %v3445
  %v3447 = vlaneseq
  %v3448 = vshrl.u32 %v3447, 7
  %v3449 = vsub.s32 6, %v3448
  %v3450 = vrot.slane %v1714, %v3449
  %v3451 = vlaneseq
  %v3452 = vshrl.u32 %v3451, 7
  %v3453 = vsub.s32 7, %v3452
  %v3454 = vrot.slane %v1714, %v3453
  %v3455 = vlaneseq
  %v3456 = vshrl.u32 %v3455, 7
  %v3457 = vsub.s32 0, %v3456
  %v3458 = vrot.slane %v1715, %v3457
  %v3459 = vlaneseq
  %v3460 = vshrl.u32 %v3459, 7
  %v3461 = vsub.s32 1, %v3460
  %v3462 = vrot.slane %v1715, %v3461
  %v3463 = vlaneseq
  %v3464 = vshrl.u32 %v3463, 7
  %v3465 = vsub.s32 2, %v3464
  %v3466 = vrot.slane %v1715, %v3465
  %v3467 = vlaneseq
  %v3468 = vshrl.u32 %v3467, 7
  %v3469 = vsub.s32 3, %v3468
  %v3470 = vrot.slane %v1715, %v3469
  %v3471 = vlaneseq
  %v3472 = vshrl.u32 %v3471, 7
  %v3473 = vsub.s32 4, %v3472
  %v3474 = vrot.slane %v1715, %v3473
  %v3475 = vlaneseq
  %v3476 = vshrl.u32 %v3475, 7
  %v3477 = vsub.s32 5, %v3476
  %v3478 = vrot.slane %v1715, %v3477
  %v3479 = vlaneseq
  %v3480 = vshrl.u32 %v3479, 7
  %v3481 = vsub.s32 6, %v3480
  %v3482 = vrot.slane %v1715, %v3481
  %v3483 = vlaneseq
  %v3484 = vshrl.u32 %v3483, 7
  %v3485 = vsub.s32 7, %v3484
  %v3486 = vrot.slane %v1715, %v3485
  %v3487 = vlaneseq
  %v3488 = vshrl.u32 %v3487, 7
  %v3489 = vsub.s32 0, %v3488
  %v3490 = vrot.slane %v1716, %v3489
  %v3491 = vlaneseq
  %v3492 = vshrl.u32 %v3491, 7
  %v3493 = vsub.s32 1, %v3492
  %v3494 = vrot.slane %v1716, %v3493
  %v3495 = vlaneseq
  %v3496 = vshrl.u32 %v3495, 7
  %v3497 = vsub.s32 2, %v3496
  %v3498 = vrot.slane %v1716, %v3497
  %v3499 = vlaneseq
  %v3500 = vshrl.u32 %v3499, 7
  %v3501 = vsub.s32 3, %v3500
  %v3502 = vrot.slane %v1716, %v3501
  %v3503 = vlaneseq
  %v3504 = vshrl.u32 %v3503, 7
  %v3505 = vsub.s32 4, %v3504
  %v3506 = vrot.slane %v1716, %v3505
  %v3507 = vlaneseq
  %v3508 = vshrl.u32 %v3507, 7
  %v3509 = vsub.s32 5, %v3508
  %v3510 = vrot.slane %v1716, %v3509
  %v3511 = vlaneseq
  %v3512 = vshrl.u32 %v3511, 7
  %v3513 = vsub.s32 6, %v3512
  %v3514 = vrot.slane %v1716, %v3513
  %v3515 = vlaneseq
  %v3516 = vshrl.u32 %v3515, 7
  %v3517 = vsub.s32 7, %v3516
  %v3518 = vrot.slane %v1716, %v3517
  %v3519 = vlaneseq
  %v3520 = vshrl.u32 %v3519, 7
  %v3521 = vsub.s32 0, %v3520
  %v3522 = vrot.slane %v1717, %v3521
  %v3523 = vlaneseq
  %v3524 = vshrl.u32 %v3523, 7
  %v3525 = vsub.s32 1, %v3524
  %v3526 = vrot.slane %v1717, %v3525
  %v3527 = vlaneseq
  %v3528 = vshrl.u32 %v3527, 7
  %v3529 = vsub.s32 2, %v3528
  %v3530 = vrot.slane %v1717, %v3529
  %v3531 = vlaneseq
  %v3532 = vshrl.u32 %v3531, 7
  %v3533 = vsub.s32 3, %v3532
  %v3534 = vrot.slane %v1717, %v3533
  %v3535 = vlaneseq
  %v3536 = vshrl.u32 %v3535, 7
  %v3537 = vsub.s32 4, %v3536
  %v3538 = vrot.slane %v1717, %v3537
  %v3539 = vlaneseq
  %v3540 = vshrl.u32 %v3539, 7
  %v3541 = vsub.s32 5, %v3540
  %v3542 = vrot.slane %v1717, %v3541
  %v3543 = vlaneseq
  %v3544 = vshrl.u32 %v3543, 7
  %v3545 = vsub.s32 6, %v3544
  %v3546 = vrot.slane %v1717, %v3545
  %v3547 = vlaneseq
  %v3548 = vshrl.u32 %v3547, 7
  %v3549 = vsub.s32 7, %v3548
  %v3550 = vrot.slane %v1717, %v3549
  %v3551 = vlaneseq
  %v3552 = vshrl.u32 %v3551, 7
  %v3553 = vsub.s32 0, %v3552
  %v3554 = vrot.slane %v1718, %v3553
  %v3555 = vlaneseq
  %v3556 = vshrl.u32 %v3555, 7
  %v3557 = vsub.s32 1, %v3556
  %v3558 = vrot.slane %v1718, %v3557
  %v3559 = vlaneseq
  %v3560 = vshrl.u32 %v3559, 7
  %v3561 = vsub.s32 2, %v3560
  %v3562 = vrot.slane %v1718, %v3561
  %v3563 = vlaneseq
  %v3564 = vshrl.u32 %v3563, 7
  %v3565 = vsub.s32 3, %v3564
  %v3566 = vrot.slane %v1718, %v3565
  %v3567 = vlaneseq
  %v3568 = vshrl.u32 %v3567, 7
  %v3569 = vsub.s32 4, %v3568
  %v3570 = vrot.slane %v1718, %v3569
  %v3571 = vlaneseq
  %v3572 = vshrl.u32 %v3571, 7
  %v3573 = vsub.s32 5, %v3572
  %v3574 = vrot.slane %v1718, %v3573
  %v3575 = vlaneseq
  %v3576 = vshrl.u32 %v3575, 7
  %v3577 = vsub.s32 6, %v3576
  %v3578 = vrot.slane %v1718, %v3577
  %v3579 = vlaneseq
  %v3580 = vshrl.u32 %v3579, 7
  %v3581 = vsub.s32 7, %v3580
  %v3582 = vrot.slane %v1718, %v3581
  %v3583 = vlaneseq
  %v3584 = vshrl.u32 %v3583, 7
  %v3585 = vsub.s32 0, %v3584
  %v3586 = vrot.slane %v1719, %v3585
  %v3587 = vlaneseq
  %v3588 = vshrl.u32 %v3587, 7
  %v3589 = vsub.s32 1, %v3588
  %v3590 = vrot.slane %v1719, %v3589
  %v3591 = vlaneseq
  %v3592 = vshrl.u32 %v3591, 7
  %v3593 = vsub.s32 2, %v3592
  %v3594 = vrot.slane %v1719, %v3593
  %v3595 = vlaneseq
  %v3596 = vshrl.u32 %v3595, 7
  %v3597 = vsub.s32 3, %v3596
  %v3598 = vrot.slane %v1719, %v3597
  %v3599 = vlaneseq
  %v3600 = vshrl.u32 %v3599, 7
  %v3601 = vsub.s32 4, %v3600
  %v3602 = vrot.slane %v1719, %v3601
  %v3603 = vlaneseq
  %v3604 = vshrl.u32 %v3603, 7
  %v3605 = vsub.s32 5, %v3604
  %v3606 = vrot.slane %v1719, %v3605
  %v3607 = vlaneseq
  %v3608 = vshrl.u32 %v3607, 7
  %v3609 = vsub.s32 6, %v3608
  %v3610 = vrot.slane %v1719, %v3609
  %v3611 = vlaneseq
  %v3612 = vshrl.u32 %v3611, 7
  %v3613 = vsub.s32 7, %v3612
  %v3614 = vrot.slane %v1719, %v3613
  %v3615 = vlaneseq
  %v3616 = vshrl.u32 %v3615, 7
  %v3617 = vsub.s32 0, %v3616
  %v3618 = vrot.slane %v1720, %v3617
  %v3619 = vlaneseq
  %v3620 = vshrl.u32 %v3619, 7
  %v3621 = vsub.s32 1, %v3620
  %v3622 = vrot.slane %v1720, %v3621
  %v3623 = vlaneseq
  %v3624 = vshrl.u32 %v3623, 7
  %v3625 = vsub.s32 2, %v3624
  %v3626 = vrot.slane %v1720, %v3625
  %v3627 = vlaneseq
  %v3628 = vshrl.u32 %v3627, 7
  %v3629 = vsub.s32 3, %v3628
  %v3630 = vrot.slane %v1720, %v3629
  %v3631 = vlaneseq
  %v3632 = vshrl.u32 %v3631, 7
  %v3633 = vsub.s32 4, %v3632
  %v3634 = vrot.slane %v1720, %v3633
  %v3635 = vlaneseq
  %v3636 = vshrl.u32 %v3635, 7
  %v3637 = vsub.s32 5, %v3636
  %v3638 = vrot.slane %v1720, %v3637
  %v3639 = vlaneseq
  %v3640 = vshrl.u32 %v3639, 7
  %v3641 = vsub.s32 6, %v3640
  %v3642 = vrot.slane %v1720, %v3641
  %v3643 = vlaneseq
  %v3644 = vshrl.u32 %v3643, 7
  %v3645 = vsub.s32 7, %v3644
  %v3646 = vrot.slane %v1720, %v3645
  %v3647 = vlaneseq
  %v3648 = vshrl.u32 %v3647, 7
  %v3649 = vsub.s32 0, %v3648
  %v3650 = vrot.slane %v1721, %v3649
  %v3651 = vlaneseq
  %v3652 = vshrl.u32 %v3651, 7
  %v3653 = vsub.s32 1, %v3652
  %v3654 = vrot.slane %v1721, %v3653
  %v3655 = vlaneseq
  %v3656 = vshrl.u32 %v3655, 7
  %v3657 = vsub.s32 2, %v3656
  %v3658 = vrot.slane %v1721, %v3657
  %v3659 = vlaneseq
  %v3660 = vshrl.u32 %v3659, 7
  %v3661 = vsub.s32 3, %v3660
  %v3662 = vrot.slane %v1721, %v3661
  %v3663 = vlaneseq
  %v3664 = vshrl.u32 %v3663, 7
  %v3665 = vsub.s32 4, %v3664
  %v3666 = vrot.slane %v1721, %v3665
  %v3667 = vlaneseq
  %v3668 = vshrl.u32 %v3667, 7
  %v3669 = vsub.s32 5, %v3668
  %v3670 = vrot.slane %v1721, %v3669
  %v3671 = vlaneseq
  %v3672 = vshrl.u32 %v3671, 7
  %v3673 = vsub.s32 6, %v3672
  %v3674 = vrot.slane %v1721, %v3673
  %v3675 = vlaneseq
  %v3676 = vshrl.u32 %v3675, 7
  %v3677 = vsub.s32 7, %v3676
  %v3678 = vrot.slane %v1721, %v3677
  %v3679 = vlaneseq
  %v3680 = vshrl.u32 %v3679, 7
  %v3681 = vsub.s32 0, %v3680
  %v3682 = vrot.slane %v1722, %v3681
  %v3683 = vlaneseq
  %v3684 = vshrl.u32 %v3683, 7
  %v3685 = vsub.s32 1, %v3684
  %v3686 = vrot.slane %v1722, %v3685
  %v3687 = vlaneseq
  %v3688 = vshrl.u32 %v3687, 7
  %v3689 = vsub.s32 2, %v3688
  %v3690 = vrot.slane %v1722, %v3689
  %v3691 = vlaneseq
  %v3692 = vshrl.u32 %v3691, 7
  %v3693 = vsub.s32 3, %v3692
  %v3694 = vrot.slane %v1722, %v3693
  %v3695 = vlaneseq
  %v3696 = vshrl.u32 %v3695, 7
  %v3697 = vsub.s32 4, %v3696
  %v3698 = vrot.slane %v1722, %v3697
  %v3699 = vlaneseq
  %v3700 = vshrl.u32 %v3699, 7
  %v3701 = vsub.s32 5, %v3700
  %v3702 = vrot.slane %v1722, %v3701
  %v3703 = vlaneseq
  %v3704 = vshrl.u32 %v3703, 7
  %v3705 = vsub.s32 6, %v3704
  %v3706 = vrot.slane %v1722, %v3705
  %v3707 = vlaneseq
  %v3708 = vshrl.u32 %v3707, 7
  %v3709 = vsub.s32 7, %v3708
  %v3710 = vrot.slane %v1722, %v3709
  %v3711 = vlaneseq
  %v3712 = vshrl.u32 %v3711, 7
  %v3713 = vsub.s32 0, %v3712
  %v3714 = vrot.slane %v1723, %v3713
  %v3715 = vlaneseq
  %v3716 = vshrl.u32 %v3715, 7
  %v3717 = vsub.s32 1, %v3716
  %v3718 = vrot.slane %v1723, %v3717
  %v3719 = vlaneseq
  %v3720 = vshrl.u32 %v3719, 7
  %v3721 = vsub.s32 2, %v3720
  %v3722 = vrot.slane %v1723, %v3721
  %v3723 = vlaneseq
  %v3724 = vshrl.u32 %v3723, 7
  %v3725 = vsub.s32 3, %v3724
  %v3726 = vrot.slane %v1723, %v3725
  %v3727 = vlaneseq
  %v3728 = vshrl.u32 %v3727, 7
  %v3729 = vsub.s32 4, %v3728
  %v3730 = vrot.slane %v1723, %v3729
  %v3731 = vlaneseq
  %v3732 = vshrl.u32 %v3731, 7
  %v3733 = vsub.s32 5, %v3732
  %v3734 = vrot.slane %v1723, %v3733
  %v3735 = vlaneseq
  %v3736 = vshrl.u32 %v3735, 7
  %v3737 = vsub.s32 6, %v3736
  %v3738 = vrot.slane %v1723, %v3737
  %v3739 = vlaneseq
  %v3740 = vshrl.u32 %v3739, 7
  %v3741 = vsub.s32 7, %v3740
  %v3742 = vrot.slane %v1723, %v3741
  %v3743 = vlaneseq
  %v3744 = vshrl.u32 %v3743, 7
  %v3745 = vsub.s32 0, %v3744
  %v3746 = vrot.slane %v1724, %v3745
  %v3747 = vlaneseq
  %v3748 = vshrl.u32 %v3747, 7
  %v3749 = vsub.s32 1, %v3748
  %v3750 = vrot.slane %v1724, %v3749
  %v3751 = vlaneseq
  %v3752 = vshrl.u32 %v3751, 7
  %v3753 = vsub.s32 2, %v3752
  %v3754 = vrot.slane %v1724, %v3753
  %v3755 = vlaneseq
  %v3756 = vshrl.u32 %v3755, 7
  %v3757 = vsub.s32 3, %v3756
  %v3758 = vrot.slane %v1724, %v3757
  %v3759 = vlaneseq
  %v3760 = vshrl.u32 %v3759, 7
  %v3761 = vsub.s32 4, %v3760
  %v3762 = vrot.slane %v1724, %v3761
  %v3763 = vlaneseq
  %v3764 = vshrl.u32 %v3763, 7
  %v3765 = vsub.s32 5, %v3764
  %v3766 = vrot.slane %v1724, %v3765
  %v3767 = vlaneseq
  %v3768 = vshrl.u32 %v3767, 7
  %v3769 = vsub.s32 6, %v3768
  %v3770 = vrot.slane %v1724, %v3769
  %v3771 = vlaneseq
  %v3772 = vshrl.u32 %v3771, 7
  %v3773 = vsub.s32 7, %v3772
  %v3774 = vrot.slane %v1724, %v3773
  %v3775 = vlaneseq
  %v3776 = vshrl.u32 %v3775, 7
  %v3777 = vsub.s32 0, %v3776
  %v3778 = vrot.slane %v1725, %v3777
  %v3779 = vlaneseq
  %v3780 = vshrl.u32 %v3779, 7
  %v3781 = vsub.s32 1, %v3780
  %v3782 = vrot.slane %v1725, %v3781
  %v3783 = vlaneseq
  %v3784 = vshrl.u32 %v3783, 7
  %v3785 = vsub.s32 2, %v3784
  %v3786 = vrot.slane %v1725, %v3785
  %v3787 = vlaneseq
  %v3788 = vshrl.u32 %v3787, 7
  %v3789 = vsub.s32 3, %v3788
  %v3790 = vrot.slane %v1725, %v3789
  %v3791 = vlaneseq
  %v3792 = vshrl.u32 %v3791, 7
  %v3793 = vsub.s32 4, %v3792
  %v3794 = vrot.slane %v1725, %v3793
  %v3795 = vlaneseq
  %v3796 = vshrl.u32 %v3795, 7
  %v3797 = vsub.s32 5, %v3796
  %v3798 = vrot.slane %v1725, %v3797
  %v3799 = vlaneseq
  %v3800 = vshrl.u32 %v3799, 7
  %v3801 = vsub.s32 6, %v3800
  %v3802 = vrot.slane %v1725, %v3801
  %v3803 = vlaneseq
  %v3804 = vshrl.u32 %v3803, 7
  %v3805 = vsub.s32 7, %v3804
  %v3806 = vrot.slane %v1725, %v3805
  %v3807 = vlaneseq
  %v3808 = vshrl.u32 %v3807, 7
  %v3809 = vsub.s32 0, %v3808
  %v3810 = vrot.slane %v1726, %v3809
  %v3811 = vlaneseq
  %v3812 = vshrl.u32 %v3811, 7
  %v3813 = vsub.s32 1, %v3812
  %v3814 = vrot.slane %v1726, %v3813
  %v3815 = vlaneseq
  %v3816 = vshrl.u32 %v3815, 7
  %v3817 = vsub.s32 2, %v3816
  %v3818 = vrot.slane %v1726, %v3817
  %v3819 = vlaneseq
  %v3820 = vshrl.u32 %v3819, 7
  %v3821 = vsub.s32 3, %v3820
  %v3822 = vrot.slane %v1726, %v3821
  %v3823 = vlaneseq
  %v3824 = vshrl.u32 %v3823, 7
  %v3825 = vsub.s32 4, %v3824
  %v3826 = vrot.slane %v1726, %v3825
  %v3827 = vlaneseq
  %v3828 = vshrl.u32 %v3827, 7
  %v3829 = vsub.s32 5, %v3828
  %v3830 = vrot.slane %v1726, %v3829
  %v3831 = vlaneseq
  %v3832 = vshrl.u32 %v3831, 7
  %v3833 = vsub.s32 6, %v3832
  %v3834 = vrot.slane %v1726, %v3833
  %v3835 = vlaneseq
  %v3836 = vshrl.u32 %v3835, 7
  %v3837 = vsub.s32 7, %v3836
  %v3838 = vrot.slane %v1726, %v3837
  %v3839 = vcombine.low %v1794, %v1798
  %v3840 = vcombine.low %v1802, %v1806
  %v3841 = vcombine.low %v1810, %v1814
  %v3842 = vcombine.low %v1818, %v1822
  %v3844 = vunpack.c.l.s4 1966171168
  %v3845 = vunpack.c.0.s8 %v3844
  %v3846 = vlaneseq
  %v3847 = vshrl.u32 %v3846, 7
  %v3848 = vsub.s32 %v3845, %v3847
  %v3849 = vrot.slane %v3839, %v3848
  %v3851 = vunpack.c.l.s4 1966171168
  %v3852 = vunpack.c.0.s8 %v3851
  %v3853 = vlaneseq
  %v3854 = vshrl.u32 %v3853, 7
  %v3855 = vsub.s32 %v3852, %v3854
  %v3856 = vrot.slane %v3840, %v3855
  %v3858 = vunpack.c.l.s4 1966171168
  %v3859 = vunpack.c.0.s8 %v3858
  %v3860 = vlaneseq
  %v3861 = vshrl.u32 %v3860, 7
  %v3862 = vsub.s32 %v3859, %v3861
  %v3863 = vrot.slane %v3841, %v3862
  %v3865 = vunpack.c.l.s4 1966171168
  %v3866 = vunpack.c.0.s8 %v3865
  %v3867 = vlaneseq
  %v3868 = vshrl.u32 %v3867, 7
  %v3869 = vsub.s32 %v3866, %v3868
  %v3870 = vrot.slane %v3842, %v3869
  %v3871 = vcombine.low %v3849, %v3856
  %v3872 = vcombine.low %v3863, %v3870
  %v3874 = vunpack.c.l.s4 1966171168
  %v3875 = vunpack.c.0.s8 %v3874
  %v3876 = vlaneseq
  %v3877 = vshrl.u32 %v3876, 7
  %v3878 = vsub.s32 %v3875, %v3877
  %v3879 = vrot.slane %v3871, %v3878
  %v3881 = vunpack.c.l.s4 1966171168
  %v3882 = vunpack.c.0.s8 %v3881
  %v3883 = vlaneseq
  %v3884 = vshrl.u32 %v3883, 7
  %v3885 = vsub.s32 %v3882, %v3884
  %v3886 = vrot.slane %v3872, %v3885
  %v3887 = vcombine.low %v3879, %v3886
  %v3888 = vcombine.low %v1826, %v1830
  %v3889 = vcombine.low %v1834, %v1838
  %v3890 = vcombine.low %v1842, %v1846
  %v3891 = vcombine.low %v1850, %v1854
  %v3893 = vunpack.c.l.s4 1966171168
  %v3894 = vunpack.c.0.s8 %v3893
  %v3895 = vlaneseq
  %v3896 = vshrl.u32 %v3895, 7
  %v3897 = vsub.s32 %v3894, %v3896
  %v3898 = vrot.slane %v3888, %v3897
  %v3900 = vunpack.c.l.s4 1966171168
  %v3901 = vunpack.c.0.s8 %v3900
  %v3902 = vlaneseq
  %v3903 = vshrl.u32 %v3902, 7
  %v3904 = vsub.s32 %v3901, %v3903
  %v3905 = vrot.slane %v3889, %v3904
  %v3907 = vunpack.c.l.s4 1966171168
  %v3908 = vunpack.c.0.s8 %v3907
  %v3909 = vlaneseq
  %v3910 = vshrl.u32 %v3909, 7
  %v3911 = vsub.s32 %v3908, %v3910
  %v3912 = vrot.slane %v3890, %v3911
  %v3914 = vunpack.c.l.s4 1966171168
  %v3915 = vunpack.c.0.s8 %v3914
  %v3916 = vlaneseq
  %v3917 = vshrl.u32 %v3916, 7
  %v3918 = vsub.s32 %v3915, %v3917
  %v3919 = vrot.slane %v3891, %v3918
  %v3920 = vcombine.low %v3898, %v3905
  %v3921 = vcombine.low %v3912, %v3919
  %v3923 = vunpack.c.l.s4 1966171168
  %v3924 = vunpack.c.0.s8 %v3923
  %v3925 = vlaneseq
  %v3926 = vshrl.u32 %v3925, 7
  %v3927 = vsub.s32 %v3924, %v3926
  %v3928 = vrot.slane %v3920, %v3927
  %v3930 = vunpack.c.l.s4 1966171168
  %v3931 = vunpack.c.0.s8 %v3930
  %v3932 = vlaneseq
  %v3933 = vshrl.u32 %v3932, 7
  %v3934 = vsub.s32 %v3931, %v3933
  %v3935 = vrot.slane %v3921, %v3934
  %v3936 = vcombine.low %v3928, %v3935
  %v3937 = vcombine.low %v1858, %v1862
  %v3938 = vcombine.low %v1866, %v1870
  %v3939 = vcombine.low %v1874, %v1878
  %v3940 = vcombine.low %v1882, %v1886
  %v3942 = vunpack.c.l.s4 1966171168
  %v3943 = vunpack.c.0.s8 %v3942
  %v3944 = vlaneseq
  %v3945 = vshrl.u32 %v3944, 7
  %v3946 = vsub.s32 %v3943, %v3945
  %v3947 = vrot.slane %v3937, %v3946
  %v3949 = vunpack.c.l.s4 1966171168
  %v3950 = vunpack.c.0.s8 %v3949
  %v3951 = vlaneseq
  %v3952 = vshrl.u32 %v3951, 7
  %v3953 = vsub.s32 %v3950, %v3952
  %v3954 = vrot.slane %v3938, %v3953
  %v3956 = vunpack.c.l.s4 1966171168
  %v3957 = vunpack.c.0.s8 %v3956
  %v3958 = vlaneseq
  %v3959 = vshrl.u32 %v3958, 7
  %v3960 = vsub.s32 %v3957, %v3959
  %v3961 = vrot.slane %v3939, %v3960
  %v3963 = vunpack.c.l.s4 1966171168
  %v3964 = vunpack.c.0.s8 %v3963
  %v3965 = vlaneseq
  %v3966 = vshrl.u32 %v3965, 7
  %v3967 = vsub.s32 %v3964, %v3966
  %v3968 = vrot.slane %v3940, %v3967
  %v3969 = vcombine.low %v3947, %v3954
  %v3970 = vcombine.low %v3961, %v3968
  %v3972 = vunpack.c.l.s4 1966171168
  %v3973 = vunpack.c.0.s8 %v3972
  %v3974 = vlaneseq
  %v3975 = vshrl.u32 %v3974, 7
  %v3976 = vsub.s32 %v3973, %v3975
  %v3977 = vrot.slane %v3969, %v3976
  %v3979 = vunpack.c.l.s4 1966171168
  %v3980 = vunpack.c.0.s8 %v3979
  %v3981 = vlaneseq
  %v3982 = vshrl.u32 %v3981, 7
  %v3983 = vsub.s32 %v3980, %v3982
  %v3984 = vrot.slane %v3970, %v3983
  %v3985 = vcombine.low %v3977, %v3984
  %v3986 = vcombine.low %v1890, %v1894
  %v3987 = vcombine.low %v1898, %v1902
  %v3988 = vcombine.low %v1906, %v1910
  %v3989 = vcombine.low %v1914, %v1918
  %v3991 = vunpack.c.l.s4 1966171168
  %v3992 = vunpack.c.0.s8 %v3991
  %v3993 = vlaneseq
  %v3994 = vshrl.u32 %v3993, 7
  %v3995 = vsub.s32 %v3992, %v3994
  %v3996 = vrot.slane %v3986, %v3995
  %v3998 = vunpack.c.l.s4 1966171168
  %v3999 = vunpack.c.0.s8 %v3998
  %v4000 = vlaneseq
  %v4001 = vshrl.u32 %v4000, 7
  %v4002 = vsub.s32 %v3999, %v4001
  %v4003 = vrot.slane %v3987, %v4002
  %v4005 = vunpack.c.l.s4 1966171168
  %v4006 = vunpack.c.0.s8 %v4005
  %v4007 = vlaneseq
  %v4008 = vshrl.u32 %v4007, 7
  %v4009 = vsub.s32 %v4006, %v4008
  %v4010 = vrot.slane %v3988, %v4009
  %v4012 = vunpack.c.l.s4 1966171168
  %v4013 = vunpack.c.0.s8 %v4012
  %v4014 = vlaneseq
  %v4015 = vshrl.u32 %v4014, 7
  %v4016 = vsub.s32 %v4013, %v4015
  %v4017 = vrot.slane %v3989, %v4016
  %v4018 = vcombine.low %v3996, %v4003
  %v4019 = vcombine.low %v4010, %v4017
  %v4021 = vunpack.c.l.s4 1966171168
  %v4022 = vunpack.c.0.s8 %v4021
  %v4023 = vlaneseq
  %v4024 = vshrl.u32 %v4023, 7
  %v4025 = vsub.s32 %v4022, %v4024
  %v4026 = vrot.slane %v4018, %v4025
  %v4028 = vunpack.c.l.s4 1966171168
  %v4029 = vunpack.c.0.s8 %v4028
  %v4030 = vlaneseq
  %v4031 = vshrl.u32 %v4030, 7
  %v4032 = vsub.s32 %v4029, %v4031
  %v4033 = vrot.slane %v4019, %v4032
  %v4034 = vcombine.low %v4026, %v4033
  %v4035 = vcombine.low %v1922, %v1926
  %v4036 = vcombine.low %v1930, %v1934
  %v4037 = vcombine.low %v1938, %v1942
  %v4038 = vcombine.low %v1946, %v1950
  %v4040 = vunpack.c.l.s4 1966171168
  %v4041 = vunpack.c.0.s8 %v4040
  %v4042 = vlaneseq
  %v4043 = vshrl.u32 %v4042, 7
  %v4044 = vsub.s32 %v4041, %v4043
  %v4045 = vrot.slane %v4035, %v4044
  %v4047 = vunpack.c.l.s4 1966171168
  %v4048 = vunpack.c.0.s8 %v4047
  %v4049 = vlaneseq
  %v4050 = vshrl.u32 %v4049, 7
  %v4051 = vsub.s32 %v4048, %v4050
  %v4052 = vrot.slane %v4036, %v4051
  %v4054 = vunpack.c.l.s4 1966171168
  %v4055 = vunpack.c.0.s8 %v4054
  %v4056 = vlaneseq
  %v4057 = vshrl.u32 %v4056, 7
  %v4058 = vsub.s32 %v4055, %v4057
  %v4059 = vrot.slane %v4037, %v4058
  %v4061 = vunpack.c.l.s4 1966171168
  %v4062 = vunpack.c.0.s8 %v4061
  %v4063 = vlaneseq
  %v4064 = vshrl.u32 %v4063, 7
  %v4065 = vsub.s32 %v4062, %v4064
  %v4066 = vrot.slane %v4038, %v4065
  %v4067 = vcombine.low %v4045, %v4052
  %v4068 = vcombine.low %v4059, %v4066
  %v4070 = vunpack.c.l.s4 1966171168
  %v4071 = vunpack.c.0.s8 %v4070
  %v4072 = vlaneseq
  %v4073 = vshrl.u32 %v4072, 7
  %v4074 = vsub.s32 %v4071, %v4073
  %v4075 = vrot.slane %v4067, %v4074
  %v4077 = vunpack.c.l.s4 1966171168
  %v4078 = vunpack.c.0.s8 %v4077
  %v4079 = vlaneseq
  %v4080 = vshrl.u32 %v4079, 7
  %v4081 = vsub.s32 %v4078, %v4080
  %v4082 = vrot.slane %v4068, %v4081
  %v4083 = vcombine.low %v4075, %v4082
  %v4084 = vcombine.low %v1954, %v1958
  %v4085 = vcombine.low %v1962, %v1966
  %v4086 = vcombine.low %v1970, %v1974
  %v4087 = vcombine.low %v1978, %v1982
  %v4089 = vunpack.c.l.s4 1966171168
  %v4090 = vunpack.c.0.s8 %v4089
  %v4091 = vlaneseq
  %v4092 = vshrl.u32 %v4091, 7
  %v4093 = vsub.s32 %v4090, %v4092
  %v4094 = vrot.slane %v4084, %v4093
  %v4096 = vunpack.c.l.s4 1966171168
  %v4097 = vunpack.c.0.s8 %v4096
  %v4098 = vlaneseq
  %v4099 = vshrl.u32 %v4098, 7
  %v4100 = vsub.s32 %v4097, %v4099
  %v4101 = vrot.slane %v4085, %v4100
  %v4103 = vunpack.c.l.s4 1966171168
  %v4104 = vunpack.c.0.s8 %v4103
  %v4105 = vlaneseq
  %v4106 = vshrl.u32 %v4105, 7
  %v4107 = vsub.s32 %v4104, %v4106
  %v4108 = vrot.slane %v4086, %v4107
  %v4110 = vunpack.c.l.s4 1966171168
  %v4111 = vunpack.c.0.s8 %v4110
  %v4112 = vlaneseq
  %v4113 = vshrl.u32 %v4112, 7
  %v4114 = vsub.s32 %v4111, %v4113
  %v4115 = vrot.slane %v4087, %v4114
  %v4116 = vcombine.low %v4094, %v4101
  %v4117 = vcombine.low %v4108, %v4115
  %v4119 = vunpack.c.l.s4 1966171168
  %v4120 = vunpack.c.0.s8 %v4119
  %v4121 = vlaneseq
  %v4122 = vshrl.u32 %v4121, 7
  %v4123 = vsub.s32 %v4120, %v4122
  %v4124 = vrot.slane %v4116, %v4123
  %v4126 = vunpack.c.l.s4 1966171168
  %v4127 = vunpack.c.0.s8 %v4126
  %v4128 = vlaneseq
  %v4129 = vshrl.u32 %v4128, 7
  %v4130 = vsub.s32 %v4127, %v4129
  %v4131 = vrot.slane %v4117, %v4130
  %v4132 = vcombine.low %v4124, %v4131
  %v4133 = vcombine.low %v1986, %v1990
  %v4134 = vcombine.low %v1994, %v1998
  %v4135 = vcombine.low %v2002, %v2006
  %v4136 = vcombine.low %v2010, %v2014
  %v4138 = vunpack.c.l.s4 1966171168
  %v4139 = vunpack.c.0.s8 %v4138
  %v4140 = vlaneseq
  %v4141 = vshrl.u32 %v4140, 7
  %v4142 = vsub.s32 %v4139, %v4141
  %v4143 = vrot.slane %v4133, %v4142
  %v4145 = vunpack.c.l.s4 1966171168
  %v4146 = vunpack.c.0.s8 %v4145
  %v4147 = vlaneseq
  %v4148 = vshrl.u32 %v4147, 7
  %v4149 = vsub.s32 %v4146, %v4148
  %v4150 = vrot.slane %v4134, %v4149
  %v4152 = vunpack.c.l.s4 1966171168
  %v4153 = vunpack.c.0.s8 %v4152
  %v4154 = vlaneseq
  %v4155 = vshrl.u32 %v4154, 7
  %v4156 = vsub.s32 %v4153, %v4155
  %v4157 = vrot.slane %v4135, %v4156
  %v4159 = vunpack.c.l.s4 1966171168
  %v4160 = vunpack.c.0.s8 %v4159
  %v4161 = vlaneseq
  %v4162 = vshrl.u32 %v4161, 7
  %v4163 = vsub.s32 %v4160, %v4162
  %v4164 = vrot.slane %v4136, %v4163
  %v4165 = vcombine.low %v4143, %v4150
  %v4166 = vcombine.low %v4157, %v4164
  %v4168 = vunpack.c.l.s4 1966171168
  %v4169 = vunpack.c.0.s8 %v4168
  %v4170 = vlaneseq
  %v4171 = vshrl.u32 %v4170, 7
  %v4172 = vsub.s32 %v4169, %v4171
  %v4173 = vrot.slane %v4165, %v4172
  %v4175 = vunpack.c.l.s4 1966171168
  %v4176 = vunpack.c.0.s8 %v4175
  %v4177 = vlaneseq
  %v4178 = vshrl.u32 %v4177, 7
  %v4179 = vsub.s32 %v4176, %v4178
  %v4180 = vrot.slane %v4166, %v4179
  %v4181 = vcombine.low %v4173, %v4180
  %v4182 = vcombine.low %v2018, %v2022
  %v4183 = vcombine.low %v2026, %v2030
  %v4184 = vcombine.low %v2034, %v2038
  %v4185 = vcombine.low %v2042, %v2046
  %v4187 = vunpack.c.l.s4 1966171168
  %v4188 = vunpack.c.0.s8 %v4187
  %v4189 = vlaneseq
  %v4190 = vshrl.u32 %v4189, 7
  %v4191 = vsub.s32 %v4188, %v4190
  %v4192 = vrot.slane %v4182, %v4191
  %v4194 = vunpack.c.l.s4 1966171168
  %v4195 = vunpack.c.0.s8 %v4194
  %v4196 = vlaneseq
  %v4197 = vshrl.u32 %v4196, 7
  %v4198 = vsub.s32 %v4195, %v4197
  %v4199 = vrot.slane %v4183, %v4198
  %v4201 = vunpack.c.l.s4 1966171168
  %v4202 = vunpack.c.0.s8 %v4201
  %v4203 = vlaneseq
  %v4204 = vshrl.u32 %v4203, 7
  %v4205 = vsub.s32 %v4202, %v4204
  %v4206 = vrot.slane %v4184, %v4205
  %v4208 = vunpack.c.l.s4 1966171168
  %v4209 = vunpack.c.0.s8 %v4208
  %v4210 = vlaneseq
  %v4211 = vshrl.u32 %v4210, 7
  %v4212 = vsub.s32 %v4209, %v4211
  %v4213 = vrot.slane %v4185, %v4212
  %v4214 = vcombine.low %v4192, %v4199
  %v4215 = vcombine.low %v4206, %v4213
  %v4217 = vunpack.c.l.s4 1966171168
  %v4218 = vunpack.c.0.s8 %v4217
  %v4219 = vlaneseq
  %v4220 = vshrl.u32 %v4219, 7
  %v4221 = vsub.s32 %v4218, %v4220
  %v4222 = vrot.slane %v4214, %v4221
  %v4224 = vunpack.c.l.s4 1966171168
  %v4225 = vunpack.c.0.s8 %v4224
  %v4226 = vlaneseq
  %v4227 = vshrl.u32 %v4226, 7
  %v4228 = vsub.s32 %v4225, %v4227
  %v4229 = vrot.slane %v4215, %v4228
  %v4230 = vcombine.low %v4222, %v4229
  %v4231 = vcombine.low %v2050, %v2054
  %v4232 = vcombine.low %v2058, %v2062
  %v4233 = vcombine.low %v2066, %v2070
  %v4234 = vcombine.low %v2074, %v2078
  %v4236 = vunpack.c.l.s4 1966171168
  %v4237 = vunpack.c.0.s8 %v4236
  %v4238 = vlaneseq
  %v4239 = vshrl.u32 %v4238, 7
  %v4240 = vsub.s32 %v4237, %v4239
  %v4241 = vrot.slane %v4231, %v4240
  %v4243 = vunpack.c.l.s4 1966171168
  %v4244 = vunpack.c.0.s8 %v4243
  %v4245 = vlaneseq
  %v4246 = vshrl.u32 %v4245, 7
  %v4247 = vsub.s32 %v4244, %v4246
  %v4248 = vrot.slane %v4232, %v4247
  %v4250 = vunpack.c.l.s4 1966171168
  %v4251 = vunpack.c.0.s8 %v4250
  %v4252 = vlaneseq
  %v4253 = vshrl.u32 %v4252, 7
  %v4254 = vsub.s32 %v4251, %v4253
  %v4255 = vrot.slane %v4233, %v4254
  %v4257 = vunpack.c.l.s4 1966171168
  %v4258 = vunpack.c.0.s8 %v4257
  %v4259 = vlaneseq
  %v4260 = vshrl.u32 %v4259, 7
  %v4261 = vsub.s32 %v4258, %v4260
  %v4262 = vrot.slane %v4234, %v4261
  %v4263 = vcombine.low %v4241, %v4248
  %v4264 = vcombine.low %v4255, %v4262
  %v4266 = vunpack.c.l.s4 1966171168
  %v4267 = vunpack.c.0.s8 %v4266
  %v4268 = vlaneseq
  %v4269 = vshrl.u32 %v4268, 7
  %v4270 = vsub.s32 %v4267, %v4269
  %v4271 = vrot.slane %v4263, %v4270
  %v4273 = vunpack.c.l.s4 1966171168
  %v4274 = vunpack.c.0.s8 %v4273
  %v4275 = vlaneseq
  %v4276 = vshrl.u32 %v4275, 7
  %v4277 = vsub.s32 %v4274, %v4276
  %v4278 = vrot.slane %v4264, %v4277
  %v4279 = vcombine.low %v4271, %v4278
  %v4280 = vcombine.low %v2082, %v2086
  %v4281 = vcombine.low %v2090, %v2094
  %v4282 = vcombine.low %v2098, %v2102
  %v4283 = vcombine.low %v2106, %v2110
  %v4285 = vunpack.c.l.s4 1966171168
  %v4286 = vunpack.c.0.s8 %v4285
  %v4287 = vlaneseq
  %v4288 = vshrl.u32 %v4287, 7
  %v4289 = vsub.s32 %v4286, %v4288
  %v4290 = vrot.slane %v4280, %v4289
  %v4292 = vunpack.c.l.s4 1966171168
  %v4293 = vunpack.c.0.s8 %v4292
  %v4294 = vlaneseq
  %v4295 = vshrl.u32 %v4294, 7
  %v4296 = vsub.s32 %v4293, %v4295
  %v4297 = vrot.slane %v4281, %v4296
  %v4299 = vunpack.c.l.s4 1966171168
  %v4300 = vunpack.c.0.s8 %v4299
  %v4301 = vlaneseq
  %v4302 = vshrl.u32 %v4301, 7
  %v4303 = vsub.s32 %v4300, %v4302
  %v4304 = vrot.slane %v4282, %v4303
  %v4306 = vunpack.c.l.s4 1966171168
  %v4307 = vunpack.c.0.s8 %v4306
  %v4308 = vlaneseq
  %v4309 = vshrl.u32 %v4308, 7
  %v4310 = vsub.s32 %v4307, %v4309
  %v4311 = vrot.slane %v4283, %v4310
  %v4312 = vcombine.low %v4290, %v4297
  %v4313 = vcombine.low %v4304, %v4311
  %v4315 = vunpack.c.l.s4 1966171168
  %v4316 = vunpack.c.0.s8 %v4315
  %v4317 = vlaneseq
  %v4318 = vshrl.u32 %v4317, 7
  %v4319 = vsub.s32 %v4316, %v4318
  %v4320 = vrot.slane %v4312, %v4319
  %v4322 = vunpack.c.l.s4 1966171168
  %v4323 = vunpack.c.0.s8 %v4322
  %v4324 = vlaneseq
  %v4325 = vshrl.u32 %v4324, 7
  %v4326 = vsub.s32 %v4323, %v4325
  %v4327 = vrot.slane %v4313, %v4326
  %v4328 = vcombine.low %v4320, %v4327
  %v4329 = vcombine.low %v2114, %v2118
  %v4330 = vcombine.low %v2122, %v2126
  %v4331 = vcombine.low %v2130, %v2134
  %v4332 = vcombine.low %v2138, %v2142
  %v4334 = vunpack.c.l.s4 1966171168
  %v4335 = vunpack.c.0.s8 %v4334
  %v4336 = vlaneseq
  %v4337 = vshrl.u32 %v4336, 7
  %v4338 = vsub.s32 %v4335, %v4337
  %v4339 = vrot.slane %v4329, %v4338
  %v4341 = vunpack.c.l.s4 1966171168
  %v4342 = vunpack.c.0.s8 %v4341
  %v4343 = vlaneseq
  %v4344 = vshrl.u32 %v4343, 7
  %v4345 = vsub.s32 %v4342, %v4344
  %v4346 = vrot.slane %v4330, %v4345
  %v4348 = vunpack.c.l.s4 1966171168
  %v4349 = vunpack.c.0.s8 %v4348
  %v4350 = vlaneseq
  %v4351 = vshrl.u32 %v4350, 7
  %v4352 = vsub.s32 %v4349, %v4351
  %v4353 = vrot.slane %v4331, %v4352
  %v4355 = vunpack.c.l.s4 1966171168
  %v4356 = vunpack.c.0.s8 %v4355
  %v4357 = vlaneseq
  %v4358 = vshrl.u32 %v4357, 7
  %v4359 = vsub.s32 %v4356, %v4358
  %v4360 = vrot.slane %v4332, %v4359
  %v4361 = vcombine.low %v4339, %v4346
  %v4362 = vcombine.low %v4353, %v4360
  %v4364 = vunpack.c.l.s4 1966171168
  %v4365 = vunpack.c.0.s8 %v4364
  %v4366 = vlaneseq
  %v4367 = vshrl.u32 %v4366, 7
  %v4368 = vsub.s32 %v4365, %v4367
  %v4369 = vrot.slane %v4361, %v4368
  %v4371 = vunpack.c.l.s4 1966171168
  %v4372 = vunpack.c.0.s8 %v4371
  %v4373 = vlaneseq
  %v4374 = vshrl.u32 %v4373, 7
  %v4375 = vsub.s32 %v4372, %v4374
  %v4376 = vrot.slane %v4362, %v4375
  %v4377 = vcombine.low %v4369, %v4376
  %v4378 = vcombine.low %v2146, %v2150
  %v4379 = vcombine.low %v2154, %v2158
  %v4380 = vcombine.low %v2162, %v2166
  %v4381 = vcombine.low %v2170, %v2174
  %v4383 = vunpack.c.l.s4 1966171168
  %v4384 = vunpack.c.0.s8 %v4383
  %v4385 = vlaneseq
  %v4386 = vshrl.u32 %v4385, 7
  %v4387 = vsub.s32 %v4384, %v4386
  %v4388 = vrot.slane %v4378, %v4387
  %v4390 = vunpack.c.l.s4 1966171168
  %v4391 = vunpack.c.0.s8 %v4390
  %v4392 = vlaneseq
  %v4393 = vshrl.u32 %v4392, 7
  %v4394 = vsub.s32 %v4391, %v4393
  %v4395 = vrot.slane %v4379, %v4394
  %v4397 = vunpack.c.l.s4 1966171168
  %v4398 = vunpack.c.0.s8 %v4397
  %v4399 = vlaneseq
  %v4400 = vshrl.u32 %v4399, 7
  %v4401 = vsub.s32 %v4398, %v4400
  %v4402 = vrot.slane %v4380, %v4401
  %v4404 = vunpack.c.l.s4 1966171168
  %v4405 = vunpack.c.0.s8 %v4404
  %v4406 = vlaneseq
  %v4407 = vshrl.u32 %v4406, 7
  %v4408 = vsub.s32 %v4405, %v4407
  %v4409 = vrot.slane %v4381, %v4408
  %v4410 = vcombine.low %v4388, %v4395
  %v4411 = vcombine.low %v4402, %v4409
  %v4413 = vunpack.c.l.s4 1966171168
  %v4414 = vunpack.c.0.s8 %v4413
  %v4415 = vlaneseq
  %v4416 = vshrl.u32 %v4415, 7
  %v4417 = vsub.s32 %v4414, %v4416
  %v4418 = vrot.slane %v4410, %v4417
  %v4420 = vunpack.c.l.s4 1966171168
  %v4421 = vunpack.c.0.s8 %v4420
  %v4422 = vlaneseq
  %v4423 = vshrl.u32 %v4422, 7
  %v4424 = vsub.s32 %v4421, %v4423
  %v4425 = vrot.slane %v4411, %v4424
  %v4426 = vcombine.low %v4418, %v4425
  %v4427 = vcombine.low %v2178, %v2182
  %v4428 = vcombine.low %v2186, %v2190
  %v4429 = vcombine.low %v2194, %v2198
  %v4430 = vcombine.low %v2202, %v2206
  %v4432 = vunpack.c.l.s4 1966171168
  %v4433 = vunpack.c.0.s8 %v4432
  %v4434 = vlaneseq
  %v4435 = vshrl.u32 %v4434, 7
  %v4436 = vsub.s32 %v4433, %v4435
  %v4437 = vrot.slane %v4427, %v4436
  %v4439 = vunpack.c.l.s4 1966171168
  %v4440 = vunpack.c.0.s8 %v4439
  %v4441 = vlaneseq
  %v4442 = vshrl.u32 %v4441, 7
  %v4443 = vsub.s32 %v4440, %v4442
  %v4444 = vrot.slane %v4428, %v4443
  %v4446 = vunpack.c.l.s4 1966171168
  %v4447 = vunpack.c.0.s8 %v4446
  %v4448 = vlaneseq
  %v4449 = vshrl.u32 %v4448, 7
  %v4450 = vsub.s32 %v4447, %v4449
  %v4451 = vrot.slane %v4429, %v4450
  %v4453 = vunpack.c.l.s4 1966171168
  %v4454 = vunpack.c.0.s8 %v4453
  %v4455 = vlaneseq
  %v4456 = vshrl.u32 %v4455, 7
  %v4457 = vsub.s32 %v4454, %v4456
  %v4458 = vrot.slane %v4430, %v4457
  %v4459 = vcombine.low %v4437, %v4444
  %v4460 = vcombine.low %v4451, %v4458
  %v4462 = vunpack.c.l.s4 1966171168
  %v4463 = vunpack.c.0.s8 %v4462
  %v4464 = vlaneseq
  %v4465 = vshrl.u32 %v4464, 7
  %v4466 = vsub.s32 %v4463, %v4465
  %v4467 = vrot.slane %v4459, %v4466
  %v4469 = vunpack.c.l.s4 1966171168
  %v4470 = vunpack.c.0.s8 %v4469
  %v4471 = vlaneseq
  %v4472 = vshrl.u32 %v4471, 7
  %v4473 = vsub.s32 %v4470, %v4472
  %v4474 = vrot.slane %v4460, %v4473
  %v4475 = vcombine.low %v4467, %v4474
  %v4476 = vcombine.low %v2210, %v2214
  %v4477 = vcombine.low %v2218, %v2222
  %v4478 = vcombine.low %v2226, %v2230
  %v4479 = vcombine.low %v2234, %v2238
  %v4481 = vunpack.c.l.s4 1966171168
  %v4482 = vunpack.c.0.s8 %v4481
  %v4483 = vlaneseq
  %v4484 = vshrl.u32 %v4483, 7
  %v4485 = vsub.s32 %v4482, %v4484
  %v4486 = vrot.slane %v4476, %v4485
  %v4488 = vunpack.c.l.s4 1966171168
  %v4489 = vunpack.c.0.s8 %v4488
  %v4490 = vlaneseq
  %v4491 = vshrl.u32 %v4490, 7
  %v4492 = vsub.s32 %v4489, %v4491
  %v4493 = vrot.slane %v4477, %v4492
  %v4495 = vunpack.c.l.s4 1966171168
  %v4496 = vunpack.c.0.s8 %v4495
  %v4497 = vlaneseq
  %v4498 = vshrl.u32 %v4497, 7
  %v4499 = vsub.s32 %v4496, %v4498
  %v4500 = vrot.slane %v4478, %v4499
  %v4502 = vunpack.c.l.s4 1966171168
  %v4503 = vunpack.c.0.s8 %v4502
  %v4504 = vlaneseq
  %v4505 = vshrl.u32 %v4504, 7
  %v4506 = vsub.s32 %v4503, %v4505
  %v4507 = vrot.slane %v4479, %v4506
  %v4508 = vcombine.low %v4486, %v4493
  %v4509 = vcombine.low %v4500, %v4507
  %v4511 = vunpack.c.l.s4 1966171168
  %v4512 = vunpack.c.0.s8 %v4511
  %v4513 = vlaneseq
  %v4514 = vshrl.u32 %v4513, 7
  %v4515 = vsub.s32 %v4512, %v4514
  %v4516 = vrot.slane %v4508, %v4515
  %v4518 = vunpack.c.l.s4 1966171168
  %v4519 = vunpack.c.0.s8 %v4518
  %v4520 = vlaneseq
  %v4521 = vshrl.u32 %v4520, 7
  %v4522 = vsub.s32 %v4519, %v4521
  %v4523 = vrot.slane %v4509, %v4522
  %v4524 = vcombine.low %v4516, %v4523
  %v4525 = vcombine.low %v2242, %v2246
  %v4526 = vcombine.low %v2250, %v2254
  %v4527 = vcombine.low %v2258, %v2262
  %v4528 = vcombine.low %v2266, %v2270
  %v4530 = vunpack.c.l.s4 1966171168
  %v4531 = vunpack.c.0.s8 %v4530
  %v4532 = vlaneseq
  %v4533 = vshrl.u32 %v4532, 7
  %v4534 = vsub.s32 %v4531, %v4533
  %v4535 = vrot.slane %v4525, %v4534
  %v4537 = vunpack.c.l.s4 1966171168
  %v4538 = vunpack.c.0.s8 %v4537
  %v4539 = vlaneseq
  %v4540 = vshrl.u32 %v4539, 7
  %v4541 = vsub.s32 %v4538, %v4540
  %v4542 = vrot.slane %v4526, %v4541
  %v4544 = vunpack.c.l.s4 1966171168
  %v4545 = vunpack.c.0.s8 %v4544
  %v4546 = vlaneseq
  %v4547 = vshrl.u32 %v4546, 7
  %v4548 = vsub.s32 %v4545, %v4547
  %v4549 = vrot.slane %v4527, %v4548
  %v4551 = vunpack.c.l.s4 1966171168
  %v4552 = vunpack.c.0.s8 %v4551
  %v4553 = vlaneseq
  %v4554 = vshrl.u32 %v4553, 7
  %v4555 = vsub.s32 %v4552, %v4554
  %v4556 = vrot.slane %v4528, %v4555
  %v4557 = vcombine.low %v4535, %v4542
  %v4558 = vcombine.low %v4549, %v4556
  %v4560 = vunpack.c.l.s4 1966171168
  %v4561 = vunpack.c.0.s8 %v4560
  %v4562 = vlaneseq
  %v4563 = vshrl.u32 %v4562, 7
  %v4564 = vsub.s32 %v4561, %v4563
  %v4565 = vrot.slane %v4557, %v4564
  %v4567 = vunpack.c.l.s4 1966171168
  %v4568 = vunpack.c.0.s8 %v4567
  %v4569 = vlaneseq
  %v4570 = vshrl.u32 %v4569, 7
  %v4571 = vsub.s32 %v4568, %v4570
  %v4572 = vrot.slane %v4558, %v4571
  %v4573 = vcombine.low %v4565, %v4572
  %v4574 = vcombine.low %v2274, %v2278
  %v4575 = vcombine.low %v2282, %v2286
  %v4576 = vcombine.low %v2290, %v2294
  %v4577 = vcombine.low %v2298, %v2302
  %v4579 = vunpack.c.l.s4 1966171168
  %v4580 = vunpack.c.0.s8 %v4579
  %v4581 = vlaneseq
  %v4582 = vshrl.u32 %v4581, 7
  %v4583 = vsub.s32 %v4580, %v4582
  %v4584 = vrot.slane %v4574, %v4583
  %v4586 = vunpack.c.l.s4 1966171168
  %v4587 = vunpack.c.0.s8 %v4586
  %v4588 = vlaneseq
  %v4589 = vshrl.u32 %v4588, 7
  %v4590 = vsub.s32 %v4587, %v4589
  %v4591 = vrot.slane %v4575, %v4590
  %v4593 = vunpack.c.l.s4 1966171168
  %v4594 = vunpack.c.0.s8 %v4593
  %v4595 = vlaneseq
  %v4596 = vshrl.u32 %v4595, 7
  %v4597 = vsub.s32 %v4594, %v4596
  %v4598 = vrot.slane %v4576, %v4597
  %v4600 = vunpack.c.l.s4 1966171168
  %v4601 = vunpack.c.0.s8 %v4600
  %v4602 = vlaneseq
  %v4603 = vshrl.u32 %v4602, 7
  %v4604 = vsub.s32 %v4601, %v4603
  %v4605 = vrot.slane %v4577, %v4604
  %v4606 = vcombine.low %v4584, %v4591
  %v4607 = vcombine.low %v4598, %v4605
  %v4609 = vunpack.c.l.s4 1966171168
  %v4610 = vunpack.c.0.s8 %v4609
  %v4611 = vlaneseq
  %v4612 = vshrl.u32 %v4611, 7
  %v4613 = vsub.s32 %v4610, %v4612
  %v4614 = vrot.slane %v4606, %v4613
  %v4616 = vunpack.c.l.s4 1966171168
  %v4617 = vunpack.c.0.s8 %v4616
  %v4618 = vlaneseq
  %v4619 = vshrl.u32 %v4618, 7
  %v4620 = vsub.s32 %v4617, %v4619
  %v4621 = vrot.slane %v4607, %v4620
  %v4622 = vcombine.low %v4614, %v4621
  %v4623 = vcombine.low %v2306, %v2310
  %v4624 = vcombine.low %v2314, %v2318
  %v4625 = vcombine.low %v2322, %v2326
  %v4626 = vcombine.low %v2330, %v2334
  %v4628 = vunpack.c.l.s4 1966171168
  %v4629 = vunpack.c.0.s8 %v4628
  %v4630 = vlaneseq
  %v4631 = vshrl.u32 %v4630, 7
  %v4632 = vsub.s32 %v4629, %v4631
  %v4633 = vrot.slane %v4623, %v4632
  %v4635 = vunpack.c.l.s4 1966171168
  %v4636 = vunpack.c.0.s8 %v4635
  %v4637 = vlaneseq
  %v4638 = vshrl.u32 %v4637, 7
  %v4639 = vsub.s32 %v4636, %v4638
  %v4640 = vrot.slane %v4624, %v4639
  %v4642 = vunpack.c.l.s4 1966171168
  %v4643 = vunpack.c.0.s8 %v4642
  %v4644 = vlaneseq
  %v4645 = vshrl.u32 %v4644, 7
  %v4646 = vsub.s32 %v4643, %v4645
  %v4647 = vrot.slane %v4625, %v4646
  %v4649 = vunpack.c.l.s4 1966171168
  %v4650 = vunpack.c.0.s8 %v4649
  %v4651 = vlaneseq
  %v4652 = vshrl.u32 %v4651, 7
  %v4653 = vsub.s32 %v4650, %v4652
  %v4654 = vrot.slane %v4626, %v4653
  %v4655 = vcombine.low %v4633, %v4640
  %v4656 = vcombine.low %v4647, %v4654
  %v4658 = vunpack.c.l.s4 1966171168
  %v4659 = vunpack.c.0.s8 %v4658
  %v4660 = vlaneseq
  %v4661 = vshrl.u32 %v4660, 7
  %v4662 = vsub.s32 %v4659, %v4661
  %v4663 = vrot.slane %v4655, %v4662
  %v4665 = vunpack.c.l.s4 1966171168
  %v4666 = vunpack.c.0.s8 %v4665
  %v4667 = vlaneseq
  %v4668 = vshrl.u32 %v4667, 7
  %v4669 = vsub.s32 %v4666, %v4668
  %v4670 = vrot.slane %v4656, %v4669
  %v4671 = vcombine.low %v4663, %v4670
  %v4672 = vcombine.low %v2338, %v2342
  %v4673 = vcombine.low %v2346, %v2350
  %v4674 = vcombine.low %v2354, %v2358
  %v4675 = vcombine.low %v2362, %v2366
  %v4677 = vunpack.c.l.s4 1966171168
  %v4678 = vunpack.c.0.s8 %v4677
  %v4679 = vlaneseq
  %v4680 = vshrl.u32 %v4679, 7
  %v4681 = vsub.s32 %v4678, %v4680
  %v4682 = vrot.slane %v4672, %v4681
  %v4684 = vunpack.c.l.s4 1966171168
  %v4685 = vunpack.c.0.s8 %v4684
  %v4686 = vlaneseq
  %v4687 = vshrl.u32 %v4686, 7
  %v4688 = vsub.s32 %v4685, %v4687
  %v4689 = vrot.slane %v4673, %v4688
  %v4691 = vunpack.c.l.s4 1966171168
  %v4692 = vunpack.c.0.s8 %v4691
  %v4693 = vlaneseq
  %v4694 = vshrl.u32 %v4693, 7
  %v4695 = vsub.s32 %v4692, %v4694
  %v4696 = vrot.slane %v4674, %v4695
  %v4698 = vunpack.c.l.s4 1966171168
  %v4699 = vunpack.c.0.s8 %v4698
  %v4700 = vlaneseq
  %v4701 = vshrl.u32 %v4700, 7
  %v4702 = vsub.s32 %v4699, %v4701
  %v4703 = vrot.slane %v4675, %v4702
  %v4704 = vcombine.low %v4682, %v4689
  %v4705 = vcombine.low %v4696, %v4703
  %v4707 = vunpack.c.l.s4 1966171168
  %v4708 = vunpack.c.0.s8 %v4707
  %v4709 = vlaneseq
  %v4710 = vshrl.u32 %v4709, 7
  %v4711 = vsub.s32 %v4708, %v4710
  %v4712 = vrot.slane %v4704, %v4711
  %v4714 = vunpack.c.l.s4 1966171168
  %v4715 = vunpack.c.0.s8 %v4714
  %v4716 = vlaneseq
  %v4717 = vshrl.u32 %v4716, 7
  %v4718 = vsub.s32 %v4715, %v4717
  %v4719 = vrot.slane %v4705, %v4718
  %v4720 = vcombine.low %v4712, %v4719
  %v4721 = vcombine.low %v2370, %v2374
  %v4722 = vcombine.low %v2378, %v2382
  %v4723 = vcombine.low %v2386, %v2390
  %v4724 = vcombine.low %v2394, %v2398
  %v4726 = vunpack.c.l.s4 1966171168
  %v4727 = vunpack.c.0.s8 %v4726
  %v4728 = vlaneseq
  %v4729 = vshrl.u32 %v4728, 7
  %v4730 = vsub.s32 %v4727, %v4729
  %v4731 = vrot.slane %v4721, %v4730
  %v4733 = vunpack.c.l.s4 1966171168
  %v4734 = vunpack.c.0.s8 %v4733
  %v4735 = vlaneseq
  %v4736 = vshrl.u32 %v4735, 7
  %v4737 = vsub.s32 %v4734, %v4736
  %v4738 = vrot.slane %v4722, %v4737
  %v4740 = vunpack.c.l.s4 1966171168
  %v4741 = vunpack.c.0.s8 %v4740
  %v4742 = vlaneseq
  %v4743 = vshrl.u32 %v4742, 7
  %v4744 = vsub.s32 %v4741, %v4743
  %v4745 = vrot.slane %v4723, %v4744
  %v4747 = vunpack.c.l.s4 1966171168
  %v4748 = vunpack.c.0.s8 %v4747
  %v4749 = vlaneseq
  %v4750 = vshrl.u32 %v4749, 7
  %v4751 = vsub.s32 %v4748, %v4750
  %v4752 = vrot.slane %v4724, %v4751
  %v4753 = vcombine.low %v4731, %v4738
  %v4754 = vcombine.low %v4745, %v4752
  %v4756 = vunpack.c.l.s4 1966171168
  %v4757 = vunpack.c.0.s8 %v4756
  %v4758 = vlaneseq
  %v4759 = vshrl.u32 %v4758, 7
  %v4760 = vsub.s32 %v4757, %v4759
  %v4761 = vrot.slane %v4753, %v4760
  %v4763 = vunpack.c.l.s4 1966171168
  %v4764 = vunpack.c.0.s8 %v4763
  %v4765 = vlaneseq
  %v4766 = vshrl.u32 %v4765, 7
  %v4767 = vsub.s32 %v4764, %v4766
  %v4768 = vrot.slane %v4754, %v4767
  %v4769 = vcombine.low %v4761, %v4768
  %v4770 = vcombine.low %v2402, %v2406
  %v4771 = vcombine.low %v2410, %v2414
  %v4772 = vcombine.low %v2418, %v2422
  %v4773 = vcombine.low %v2426, %v2430
  %v4775 = vunpack.c.l.s4 1966171168
  %v4776 = vunpack.c.0.s8 %v4775
  %v4777 = vlaneseq
  %v4778 = vshrl.u32 %v4777, 7
  %v4779 = vsub.s32 %v4776, %v4778
  %v4780 = vrot.slane %v4770, %v4779
  %v4782 = vunpack.c.l.s4 1966171168
  %v4783 = vunpack.c.0.s8 %v4782
  %v4784 = vlaneseq
  %v4785 = vshrl.u32 %v4784, 7
  %v4786 = vsub.s32 %v4783, %v4785
  %v4787 = vrot.slane %v4771, %v4786
  %v4789 = vunpack.c.l.s4 1966171168
  %v4790 = vunpack.c.0.s8 %v4789
  %v4791 = vlaneseq
  %v4792 = vshrl.u32 %v4791, 7
  %v4793 = vsub.s32 %v4790, %v4792
  %v4794 = vrot.slane %v4772, %v4793
  %v4796 = vunpack.c.l.s4 1966171168
  %v4797 = vunpack.c.0.s8 %v4796
  %v4798 = vlaneseq
  %v4799 = vshrl.u32 %v4798, 7
  %v4800 = vsub.s32 %v4797, %v4799
  %v4801 = vrot.slane %v4773, %v4800
  %v4802 = vcombine.low %v4780, %v4787
  %v4803 = vcombine.low %v4794, %v4801
  %v4805 = vunpack.c.l.s4 1966171168
  %v4806 = vunpack.c.0.s8 %v4805
  %v4807 = vlaneseq
  %v4808 = vshrl.u32 %v4807, 7
  %v4809 = vsub.s32 %v4806, %v4808
  %v4810 = vrot.slane %v4802, %v4809
  %v4812 = vunpack.c.l.s4 1966171168
  %v4813 = vunpack.c.0.s8 %v4812
  %v4814 = vlaneseq
  %v4815 = vshrl.u32 %v4814, 7
  %v4816 = vsub.s32 %v4813, %v4815
  %v4817 = vrot.slane %v4803, %v4816
  %v4818 = vcombine.low %v4810, %v4817
  %v4819 = vcombine.low %v2434, %v2438
  %v4820 = vcombine.low %v2442, %v2446
  %v4821 = vcombine.low %v2450, %v2454
  %v4822 = vcombine.low %v2458, %v2462
  %v4824 = vunpack.c.l.s4 1966171168
  %v4825 = vunpack.c.0.s8 %v4824
  %v4826 = vlaneseq
  %v4827 = vshrl.u32 %v4826, 7
  %v4828 = vsub.s32 %v4825, %v4827
  %v4829 = vrot.slane %v4819, %v4828
  %v4831 = vunpack.c.l.s4 1966171168
  %v4832 = vunpack.c.0.s8 %v4831
  %v4833 = vlaneseq
  %v4834 = vshrl.u32 %v4833, 7
  %v4835 = vsub.s32 %v4832, %v4834
  %v4836 = vrot.slane %v4820, %v4835
  %v4838 = vunpack.c.l.s4 1966171168
  %v4839 = vunpack.c.0.s8 %v4838
  %v4840 = vlaneseq
  %v4841 = vshrl.u32 %v4840, 7
  %v4842 = vsub.s32 %v4839, %v4841
  %v4843 = vrot.slane %v4821, %v4842
  %v4845 = vunpack.c.l.s4 1966171168
  %v4846 = vunpack.c.0.s8 %v4845
  %v4847 = vlaneseq
  %v4848 = vshrl.u32 %v4847, 7
  %v4849 = vsub.s32 %v4846, %v4848
  %v4850 = vrot.slane %v4822, %v4849
  %v4851 = vcombine.low %v4829, %v4836
  %v4852 = vcombine.low %v4843, %v4850
  %v4854 = vunpack.c.l.s4 1966171168
  %v4855 = vunpack.c.0.s8 %v4854
  %v4856 = vlaneseq
  %v4857 = vshrl.u32 %v4856, 7
  %v4858 = vsub.s32 %v4855, %v4857
  %v4859 = vrot.slane %v4851, %v4858
  %v4861 = vunpack.c.l.s4 1966171168
  %v4862 = vunpack.c.0.s8 %v4861
  %v4863 = vlaneseq
  %v4864 = vshrl.u32 %v4863, 7
  %v4865 = vsub.s32 %v4862, %v4864
  %v4866 = vrot.slane %v4852, %v4865
  %v4867 = vcombine.low %v4859, %v4866
  %v4868 = vcombine.low %v2466, %v2470
  %v4869 = vcombine.low %v2474, %v2478
  %v4870 = vcombine.low %v2482, %v2486
  %v4871 = vcombine.low %v2490, %v2494
  %v4873 = vunpack.c.l.s4 1966171168
  %v4874 = vunpack.c.0.s8 %v4873
  %v4875 = vlaneseq
  %v4876 = vshrl.u32 %v4875, 7
  %v4877 = vsub.s32 %v4874, %v4876
  %v4878 = vrot.slane %v4868, %v4877
  %v4880 = vunpack.c.l.s4 1966171168
  %v4881 = vunpack.c.0.s8 %v4880
  %v4882 = vlaneseq
  %v4883 = vshrl.u32 %v4882, 7
  %v4884 = vsub.s32 %v4881, %v4883
  %v4885 = vrot.slane %v4869, %v4884
  %v4887 = vunpack.c.l.s4 1966171168
  %v4888 = vunpack.c.0.s8 %v4887
  %v4889 = vlaneseq
  %v4890 = vshrl.u32 %v4889, 7
  %v4891 = vsub.s32 %v4888, %v4890
  %v4892 = vrot.slane %v4870, %v4891
  %v4894 = vunpack.c.l.s4 1966171168
  %v4895 = vunpack.c.0.s8 %v4894
  %v4896 = vlaneseq
  %v4897 = vshrl.u32 %v4896, 7
  %v4898 = vsub.s32 %v4895, %v4897
  %v4899 = vrot.slane %v4871, %v4898
  %v4900 = vcombine.low %v4878, %v4885
  %v4901 = vcombine.low %v4892, %v4899
  %v4903 = vunpack.c.l.s4 1966171168
  %v4904 = vunpack.c.0.s8 %v4903
  %v4905 = vlaneseq
  %v4906 = vshrl.u32 %v4905, 7
  %v4907 = vsub.s32 %v4904, %v4906
  %v4908 = vrot.slane %v4900, %v4907
  %v4910 = vunpack.c.l.s4 1966171168
  %v4911 = vunpack.c.0.s8 %v4910
  %v4912 = vlaneseq
  %v4913 = vshrl.u32 %v4912, 7
  %v4914 = vsub.s32 %v4911, %v4913
  %v4915 = vrot.slane %v4901, %v4914
  %v4916 = vcombine.low %v4908, %v4915
  %v4917 = vcombine.low %v2498, %v2502
  %v4918 = vcombine.low %v2506, %v2510
  %v4919 = vcombine.low %v2514, %v2518
  %v4920 = vcombine.low %v2522, %v2526
  %v4922 = vunpack.c.l.s4 1966171168
  %v4923 = vunpack.c.0.s8 %v4922
  %v4924 = vlaneseq
  %v4925 = vshrl.u32 %v4924, 7
  %v4926 = vsub.s32 %v4923, %v4925
  %v4927 = vrot.slane %v4917, %v4926
  %v4929 = vunpack.c.l.s4 1966171168
  %v4930 = vunpack.c.0.s8 %v4929
  %v4931 = vlaneseq
  %v4932 = vshrl.u32 %v4931, 7
  %v4933 = vsub.s32 %v4930, %v4932
  %v4934 = vrot.slane %v4918, %v4933
  %v4936 = vunpack.c.l.s4 1966171168
  %v4937 = vunpack.c.0.s8 %v4936
  %v4938 = vlaneseq
  %v4939 = vshrl.u32 %v4938, 7
  %v4940 = vsub.s32 %v4937, %v4939
  %v4941 = vrot.slane %v4919, %v4940
  %v4943 = vunpack.c.l.s4 1966171168
  %v4944 = vunpack.c.0.s8 %v4943
  %v4945 = vlaneseq
  %v4946 = vshrl.u32 %v4945, 7
  %v4947 = vsub.s32 %v4944, %v4946
  %v4948 = vrot.slane %v4920, %v4947
  %v4949 = vcombine.low %v4927, %v4934
  %v4950 = vcombine.low %v4941, %v4948
  %v4952 = vunpack.c.l.s4 1966171168
  %v4953 = vunpack.c.0.s8 %v4952
  %v4954 = vlaneseq
  %v4955 = vshrl.u32 %v4954, 7
  %v4956 = vsub.s32 %v4953, %v4955
  %v4957 = vrot.slane %v4949, %v4956
  %v4959 = vunpack.c.l.s4 1966171168
  %v4960 = vunpack.c.0.s8 %v4959
  %v4961 = vlaneseq
  %v4962 = vshrl.u32 %v4961, 7
  %v4963 = vsub.s32 %v4960, %v4962
  %v4964 = vrot.slane %v4950, %v4963
  %v4965 = vcombine.low %v4957, %v4964
  %v4966 = vcombine.low %v2530, %v2534
  %v4967 = vcombine.low %v2538, %v2542
  %v4968 = vcombine.low %v2546, %v2550
  %v4969 = vcombine.low %v2554, %v2558
  %v4971 = vunpack.c.l.s4 1966171168
  %v4972 = vunpack.c.0.s8 %v4971
  %v4973 = vlaneseq
  %v4974 = vshrl.u32 %v4973, 7
  %v4975 = vsub.s32 %v4972, %v4974
  %v4976 = vrot.slane %v4966, %v4975
  %v4978 = vunpack.c.l.s4 1966171168
  %v4979 = vunpack.c.0.s8 %v4978
  %v4980 = vlaneseq
  %v4981 = vshrl.u32 %v4980, 7
  %v4982 = vsub.s32 %v4979, %v4981
  %v4983 = vrot.slane %v4967, %v4982
  %v4985 = vunpack.c.l.s4 1966171168
  %v4986 = vunpack.c.0.s8 %v4985
  %v4987 = vlaneseq
  %v4988 = vshrl.u32 %v4987, 7
  %v4989 = vsub.s32 %v4986, %v4988
  %v4990 = vrot.slane %v4968, %v4989
  %v4992 = vunpack.c.l.s4 1966171168
  %v4993 = vunpack.c.0.s8 %v4992
  %v4994 = vlaneseq
  %v4995 = vshrl.u32 %v4994, 7
  %v4996 = vsub.s32 %v4993, %v4995
  %v4997 = vrot.slane %v4969, %v4996
  %v4998 = vcombine.low %v4976, %v4983
  %v4999 = vcombine.low %v4990, %v4997
  %v5001 = vunpack.c.l.s4 1966171168
  %v5002 = vunpack.c.0.s8 %v5001
  %v5003 = vlaneseq
  %v5004 = vshrl.u32 %v5003, 7
  %v5005 = vsub.s32 %v5002, %v5004
  %v5006 = vrot.slane %v4998, %v5005
  %v5008 = vunpack.c.l.s4 1966171168
  %v5009 = vunpack.c.0.s8 %v5008
  %v5010 = vlaneseq
  %v5011 = vshrl.u32 %v5010, 7
  %v5012 = vsub.s32 %v5009, %v5011
  %v5013 = vrot.slane %v4999, %v5012
  %v5014 = vcombine.low %v5006, %v5013
  %v5015 = vcombine.low %v2562, %v2566
  %v5016 = vcombine.low %v2570, %v2574
  %v5017 = vcombine.low %v2578, %v2582
  %v5018 = vcombine.low %v2586, %v2590
  %v5020 = vunpack.c.l.s4 1966171168
  %v5021 = vunpack.c.0.s8 %v5020
  %v5022 = vlaneseq
  %v5023 = vshrl.u32 %v5022, 7
  %v5024 = vsub.s32 %v5021, %v5023
  %v5025 = vrot.slane %v5015, %v5024
  %v5027 = vunpack.c.l.s4 1966171168
  %v5028 = vunpack.c.0.s8 %v5027
  %v5029 = vlaneseq
  %v5030 = vshrl.u32 %v5029, 7
  %v5031 = vsub.s32 %v5028, %v5030
  %v5032 = vrot.slane %v5016, %v5031
  %v5034 = vunpack.c.l.s4 1966171168
  %v5035 = vunpack.c.0.s8 %v5034
  %v5036 = vlaneseq
  %v5037 = vshrl.u32 %v5036, 7
  %v5038 = vsub.s32 %v5035, %v5037
  %v5039 = vrot.slane %v5017, %v5038
  %v5041 = vunpack.c.l.s4 1966171168
  %v5042 = vunpack.c.0.s8 %v5041
  %v5043 = vlaneseq
  %v5044 = vshrl.u32 %v5043, 7
  %v5045 = vsub.s32 %v5042, %v5044
  %v5046 = vrot.slane %v5018, %v5045
  %v5047 = vcombine.low %v5025, %v5032
  %v5048 = vcombine.low %v5039, %v5046
  %v5050 = vunpack.c.l.s4 1966171168
  %v5051 = vunpack.c.0.s8 %v5050
  %v5052 = vlaneseq
  %v5053 = vshrl.u32 %v5052, 7
  %v5054 = vsub.s32 %v5051, %v5053
  %v5055 = vrot.slane %v5047, %v5054
  %v5057 = vunpack.c.l.s4 1966171168
  %v5058 = vunpack.c.0.s8 %v5057
  %v5059 = vlaneseq
  %v5060 = vshrl.u32 %v5059, 7
  %v5061 = vsub.s32 %v5058, %v5060
  %v5062 = vrot.slane %v5048, %v5061
  %v5063 = vcombine.low %v5055, %v5062
  %v5064 = vcombine.low %v2594, %v2598
  %v5065 = vcombine.low %v2602, %v2606
  %v5066 = vcombine.low %v2610, %v2614
  %v5067 = vcombine.low %v2618, %v2622
  %v5069 = vunpack.c.l.s4 1966171168
  %v5070 = vunpack.c.0.s8 %v5069
  %v5071 = vlaneseq
  %v5072 = vshrl.u32 %v5071, 7
  %v5073 = vsub.s32 %v5070, %v5072
  %v5074 = vrot.slane %v5064, %v5073
  %v5076 = vunpack.c.l.s4 1966171168
  %v5077 = vunpack.c.0.s8 %v5076
  %v5078 = vlaneseq
  %v5079 = vshrl.u32 %v5078, 7
  %v5080 = vsub.s32 %v5077, %v5079
  %v5081 = vrot.slane %v5065, %v5080
  %v5083 = vunpack.c.l.s4 1966171168
  %v5084 = vunpack.c.0.s8 %v5083
  %v5085 = vlaneseq
  %v5086 = vshrl.u32 %v5085, 7
  %v5087 = vsub.s32 %v5084, %v5086
  %v5088 = vrot.slane %v5066, %v5087
  %v5090 = vunpack.c.l.s4 1966171168
  %v5091 = vunpack.c.0.s8 %v5090
  %v5092 = vlaneseq
  %v5093 = vshrl.u32 %v5092, 7
  %v5094 = vsub.s32 %v5091, %v5093
  %v5095 = vrot.slane %v5067, %v5094
  %v5096 = vcombine.low %v5074, %v5081
  %v5097 = vcombine.low %v5088, %v5095
  %v5099 = vunpack.c.l.s4 1966171168
  %v5100 = vunpack.c.0.s8 %v5099
  %v5101 = vlaneseq
  %v5102 = vshrl.u32 %v5101, 7
  %v5103 = vsub.s32 %v5100, %v5102
  %v5104 = vrot.slane %v5096, %v5103
  %v5106 = vunpack.c.l.s4 1966171168
  %v5107 = vunpack.c.0.s8 %v5106
  %v5108 = vlaneseq
  %v5109 = vshrl.u32 %v5108, 7
  %v5110 = vsub.s32 %v5107, %v5109
  %v5111 = vrot.slane %v5097, %v5110
  %v5112 = vcombine.low %v5104, %v5111
  %v5113 = vcombine.low %v2626, %v2630
  %v5114 = vcombine.low %v2634, %v2638
  %v5115 = vcombine.low %v2642, %v2646
  %v5116 = vcombine.low %v2650, %v2654
  %v5118 = vunpack.c.l.s4 1966171168
  %v5119 = vunpack.c.0.s8 %v5118
  %v5120 = vlaneseq
  %v5121 = vshrl.u32 %v5120, 7
  %v5122 = vsub.s32 %v5119, %v5121
  %v5123 = vrot.slane %v5113, %v5122
  %v5125 = vunpack.c.l.s4 1966171168
  %v5126 = vunpack.c.0.s8 %v5125
  %v5127 = vlaneseq
  %v5128 = vshrl.u32 %v5127, 7
  %v5129 = vsub.s32 %v5126, %v5128
  %v5130 = vrot.slane %v5114, %v5129
  %v5132 = vunpack.c.l.s4 1966171168
  %v5133 = vunpack.c.0.s8 %v5132
  %v5134 = vlaneseq
  %v5135 = vshrl.u32 %v5134, 7
  %v5136 = vsub.s32 %v5133, %v5135
  %v5137 = vrot.slane %v5115, %v5136
  %v5139 = vunpack.c.l.s4 1966171168
  %v5140 = vunpack.c.0.s8 %v5139
  %v5141 = vlaneseq
  %v5142 = vshrl.u32 %v5141, 7
  %v5143 = vsub.s32 %v5140, %v5142
  %v5144 = vrot.slane %v5116, %v5143
  %v5145 = vcombine.low %v5123, %v5130
  %v5146 = vcombine.low %v5137, %v5144
  %v5148 = vunpack.c.l.s4 1966171168
  %v5149 = vunpack.c.0.s8 %v5148
  %v5150 = vlaneseq
  %v5151 = vshrl.u32 %v5150, 7
  %v5152 = vsub.s32 %v5149, %v5151
  %v5153 = vrot.slane %v5145, %v5152
  %v5155 = vunpack.c.l.s4 1966171168
  %v5156 = vunpack.c.0.s8 %v5155
  %v5157 = vlaneseq
  %v5158 = vshrl.u32 %v5157, 7
  %v5159 = vsub.s32 %v5156, %v5158
  %v5160 = vrot.slane %v5146, %v5159
  %v5161 = vcombine.low %v5153, %v5160
  %v5162 = vcombine.low %v2658, %v2662
  %v5163 = vcombine.low %v2666, %v2670
  %v5164 = vcombine.low %v2674, %v2678
  %v5165 = vcombine.low %v2682, %v2686
  %v5167 = vunpack.c.l.s4 1966171168
  %v5168 = vunpack.c.0.s8 %v5167
  %v5169 = vlaneseq
  %v5170 = vshrl.u32 %v5169, 7
  %v5171 = vsub.s32 %v5168, %v5170
  %v5172 = vrot.slane %v5162, %v5171
  %v5174 = vunpack.c.l.s4 1966171168
  %v5175 = vunpack.c.0.s8 %v5174
  %v5176 = vlaneseq
  %v5177 = vshrl.u32 %v5176, 7
  %v5178 = vsub.s32 %v5175, %v5177
  %v5179 = vrot.slane %v5163, %v5178
  %v5181 = vunpack.c.l.s4 1966171168
  %v5182 = vunpack.c.0.s8 %v5181
  %v5183 = vlaneseq
  %v5184 = vshrl.u32 %v5183, 7
  %v5185 = vsub.s32 %v5182, %v5184
  %v5186 = vrot.slane %v5164, %v5185
  %v5188 = vunpack.c.l.s4 1966171168
  %v5189 = vunpack.c.0.s8 %v5188
  %v5190 = vlaneseq
  %v5191 = vshrl.u32 %v5190, 7
  %v5192 = vsub.s32 %v5189, %v5191
  %v5193 = vrot.slane %v5165, %v5192
  %v5194 = vcombine.low %v5172, %v5179
  %v5195 = vcombine.low %v5186, %v5193
  %v5197 = vunpack.c.l.s4 1966171168
  %v5198 = vunpack.c.0.s8 %v5197
  %v5199 = vlaneseq
  %v5200 = vshrl.u32 %v5199, 7
  %v5201 = vsub.s32 %v5198, %v5200
  %v5202 = vrot.slane %v5194, %v5201
  %v5204 = vunpack.c.l.s4 1966171168
  %v5205 = vunpack.c.0.s8 %v5204
  %v5206 = vlaneseq
  %v5207 = vshrl.u32 %v5206, 7
  %v5208 = vsub.s32 %v5205, %v5207
  %v5209 = vrot.slane %v5195, %v5208
  %v5210 = vcombine.low %v5202, %v5209
  %v5211 = vcombine.low %v2690, %v2694
  %v5212 = vcombine.low %v2698, %v2702
  %v5213 = vcombine.low %v2706, %v2710
  %v5214 = vcombine.low %v2714, %v2718
  %v5216 = vunpack.c.l.s4 1966171168
  %v5217 = vunpack.c.0.s8 %v5216
  %v5218 = vlaneseq
  %v5219 = vshrl.u32 %v5218, 7
  %v5220 = vsub.s32 %v5217, %v5219
  %v5221 = vrot.slane %v5211, %v5220
  %v5223 = vunpack.c.l.s4 1966171168
  %v5224 = vunpack.c.0.s8 %v5223
  %v5225 = vlaneseq
  %v5226 = vshrl.u32 %v5225, 7
  %v5227 = vsub.s32 %v5224, %v5226
  %v5228 = vrot.slane %v5212, %v5227
  %v5230 = vunpack.c.l.s4 1966171168
  %v5231 = vunpack.c.0.s8 %v5230
  %v5232 = vlaneseq
  %v5233 = vshrl.u32 %v5232, 7
  %v5234 = vsub.s32 %v5231, %v5233
  %v5235 = vrot.slane %v5213, %v5234
  %v5237 = vunpack.c.l.s4 1966171168
  %v5238 = vunpack.c.0.s8 %v5237
  %v5239 = vlaneseq
  %v5240 = vshrl.u32 %v5239, 7
  %v5241 = vsub.s32 %v5238, %v5240
  %v5242 = vrot.slane %v5214, %v5241
  %v5243 = vcombine.low %v5221, %v5228
  %v5244 = vcombine.low %v5235, %v5242
  %v5246 = vunpack.c.l.s4 1966171168
  %v5247 = vunpack.c.0.s8 %v5246
  %v5248 = vlaneseq
  %v5249 = vshrl.u32 %v5248, 7
  %v5250 = vsub.s32 %v5247, %v5249
  %v5251 = vrot.slane %v5243, %v5250
  %v5253 = vunpack.c.l.s4 1966171168
  %v5254 = vunpack.c.0.s8 %v5253
  %v5255 = vlaneseq
  %v5256 = vshrl.u32 %v5255, 7
  %v5257 = vsub.s32 %v5254, %v5256
  %v5258 = vrot.slane %v5244, %v5257
  %v5259 = vcombine.low %v5251, %v5258
  %v5260 = vcombine.low %v2722, %v2726
  %v5261 = vcombine.low %v2730, %v2734
  %v5262 = vcombine.low %v2738, %v2742
  %v5263 = vcombine.low %v2746, %v2750
  %v5265 = vunpack.c.l.s4 1966171168
  %v5266 = vunpack.c.0.s8 %v5265
  %v5267 = vlaneseq
  %v5268 = vshrl.u32 %v5267, 7
  %v5269 = vsub.s32 %v5266, %v5268
  %v5270 = vrot.slane %v5260, %v5269
  %v5272 = vunpack.c.l.s4 1966171168
  %v5273 = vunpack.c.0.s8 %v5272
  %v5274 = vlaneseq
  %v5275 = vshrl.u32 %v5274, 7
  %v5276 = vsub.s32 %v5273, %v5275
  %v5277 = vrot.slane %v5261, %v5276
  %v5279 = vunpack.c.l.s4 1966171168
  %v5280 = vunpack.c.0.s8 %v5279
  %v5281 = vlaneseq
  %v5282 = vshrl.u32 %v5281, 7
  %v5283 = vsub.s32 %v5280, %v5282
  %v5284 = vrot.slane %v5262, %v5283
  %v5286 = vunpack.c.l.s4 1966171168
  %v5287 = vunpack.c.0.s8 %v5286
  %v5288 = vlaneseq
  %v5289 = vshrl.u32 %v5288, 7
  %v5290 = vsub.s32 %v5287, %v5289
  %v5291 = vrot.slane %v5263, %v5290
  %v5292 = vcombine.low %v5270, %v5277
  %v5293 = vcombine.low %v5284, %v5291
  %v5295 = vunpack.c.l.s4 1966171168
  %v5296 = vunpack.c.0.s8 %v5295
  %v5297 = vlaneseq
  %v5298 = vshrl.u32 %v5297, 7
  %v5299 = vsub.s32 %v5296, %v5298
  %v5300 = vrot.slane %v5292, %v5299
  %v5302 = vunpack.c.l.s4 1966171168
  %v5303 = vunpack.c.0.s8 %v5302
  %v5304 = vlaneseq
  %v5305 = vshrl.u32 %v5304, 7
  %v5306 = vsub.s32 %v5303, %v5305
  %v5307 = vrot.slane %v5293, %v5306
  %v5308 = vcombine.low %v5300, %v5307
  %v5309 = vcombine.low %v2754, %v2758
  %v5310 = vcombine.low %v2762, %v2766
  %v5311 = vcombine.low %v2770, %v2774
  %v5312 = vcombine.low %v2778, %v2782
  %v5314 = vunpack.c.l.s4 1966171168
  %v5315 = vunpack.c.0.s8 %v5314
  %v5316 = vlaneseq
  %v5317 = vshrl.u32 %v5316, 7
  %v5318 = vsub.s32 %v5315, %v5317
  %v5319 = vrot.slane %v5309, %v5318
  %v5321 = vunpack.c.l.s4 1966171168
  %v5322 = vunpack.c.0.s8 %v5321
  %v5323 = vlaneseq
  %v5324 = vshrl.u32 %v5323, 7
  %v5325 = vsub.s32 %v5322, %v5324
  %v5326 = vrot.slane %v5310, %v5325
  %v5328 = vunpack.c.l.s4 1966171168
  %v5329 = vunpack.c.0.s8 %v5328
  %v5330 = vlaneseq
  %v5331 = vshrl.u32 %v5330, 7
  %v5332 = vsub.s32 %v5329, %v5331
  %v5333 = vrot.slane %v5311, %v5332
  %v5335 = vunpack.c.l.s4 1966171168
  %v5336 = vunpack.c.0.s8 %v5335
  %v5337 = vlaneseq
  %v5338 = vshrl.u32 %v5337, 7
  %v5339 = vsub.s32 %v5336, %v5338
  %v5340 = vrot.slane %v5312, %v5339
  %v5341 = vcombine.low %v5319, %v5326
  %v5342 = vcombine.low %v5333, %v5340
  %v5344 = vunpack.c.l.s4 1966171168
  %v5345 = vunpack.c.0.s8 %v5344
  %v5346 = vlaneseq
  %v5347 = vshrl.u32 %v5346, 7
  %v5348 = vsub.s32 %v5345, %v5347
  %v5349 = vrot.slane %v5341, %v5348
  %v5351 = vunpack.c.l.s4 1966171168
  %v5352 = vunpack.c.0.s8 %v5351
  %v5353 = vlaneseq
  %v5354 = vshrl.u32 %v5353, 7
  %v5355 = vsub.s32 %v5352, %v5354
  %v5356 = vrot.slane %v5342, %v5355
  %v5357 = vcombine.low %v5349, %v5356
  %v5358 = vcombine.low %v2786, %v2790
  %v5359 = vcombine.low %v2794, %v2798
  %v5360 = vcombine.low %v2802, %v2806
  %v5361 = vcombine.low %v2810, %v2814
  %v5363 = vunpack.c.l.s4 1966171168
  %v5364 = vunpack.c.0.s8 %v5363
  %v5365 = vlaneseq
  %v5366 = vshrl.u32 %v5365, 7
  %v5367 = vsub.s32 %v5364, %v5366
  %v5368 = vrot.slane %v5358, %v5367
  %v5370 = vunpack.c.l.s4 1966171168
  %v5371 = vunpack.c.0.s8 %v5370
  %v5372 = vlaneseq
  %v5373 = vshrl.u32 %v5372, 7
  %v5374 = vsub.s32 %v5371, %v5373
  %v5375 = vrot.slane %v5359, %v5374
  %v5377 = vunpack.c.l.s4 1966171168
  %v5378 = vunpack.c.0.s8 %v5377
  %v5379 = vlaneseq
  %v5380 = vshrl.u32 %v5379, 7
  %v5381 = vsub.s32 %v5378, %v5380
  %v5382 = vrot.slane %v5360, %v5381
  %v5384 = vunpack.c.l.s4 1966171168
  %v5385 = vunpack.c.0.s8 %v5384
  %v5386 = vlaneseq
  %v5387 = vshrl.u32 %v5386, 7
  %v5388 = vsub.s32 %v5385, %v5387
  %v5389 = vrot.slane %v5361, %v5388
  %v5390 = vcombine.low %v5368, %v5375
  %v5391 = vcombine.low %v5382, %v5389
  %v5393 = vunpack.c.l.s4 1966171168
  %v5394 = vunpack.c.0.s8 %v5393
  %v5395 = vlaneseq
  %v5396 = vshrl.u32 %v5395, 7
  %v5397 = vsub.s32 %v5394, %v5396
  %v5398 = vrot.slane %v5390, %v5397
  %v5400 = vunpack.c.l.s4 1966171168
  %v5401 = vunpack.c.0.s8 %v5400
  %v5402 = vlaneseq
  %v5403 = vshrl.u32 %v5402, 7
  %v5404 = vsub.s32 %v5401, %v5403
  %v5405 = vrot.slane %v5391, %v5404
  %v5406 = vcombine.low %v5398, %v5405
  %v5407 = vcombine.low %v2818, %v2822
  %v5408 = vcombine.low %v2826, %v2830
  %v5409 = vcombine.low %v2834, %v2838
  %v5410 = vcombine.low %v2842, %v2846
  %v5412 = vunpack.c.l.s4 1966171168
  %v5413 = vunpack.c.0.s8 %v5412
  %v5414 = vlaneseq
  %v5415 = vshrl.u32 %v5414, 7
  %v5416 = vsub.s32 %v5413, %v5415
  %v5417 = vrot.slane %v5407, %v5416
  %v5419 = vunpack.c.l.s4 1966171168
  %v5420 = vunpack.c.0.s8 %v5419
  %v5421 = vlaneseq
  %v5422 = vshrl.u32 %v5421, 7
  %v5423 = vsub.s32 %v5420, %v5422
  %v5424 = vrot.slane %v5408, %v5423
  %v5426 = vunpack.c.l.s4 1966171168
  %v5427 = vunpack.c.0.s8 %v5426
  %v5428 = vlaneseq
  %v5429 = vshrl.u32 %v5428, 7
  %v5430 = vsub.s32 %v5427, %v5429
  %v5431 = vrot.slane %v5409, %v5430
  %v5433 = vunpack.c.l.s4 1966171168
  %v5434 = vunpack.c.0.s8 %v5433
  %v5435 = vlaneseq
  %v5436 = vshrl.u32 %v5435, 7
  %v5437 = vsub.s32 %v5434, %v5436
  %v5438 = vrot.slane %v5410, %v5437
  %v5439 = vcombine.low %v5417, %v5424
  %v5440 = vcombine.low %v5431, %v5438
  %v5442 = vunpack.c.l.s4 1966171168
  %v5443 = vunpack.c.0.s8 %v5442
  %v5444 = vlaneseq
  %v5445 = vshrl.u32 %v5444, 7
  %v5446 = vsub.s32 %v5443, %v5445
  %v5447 = vrot.slane %v5439, %v5446
  %v5449 = vunpack.c.l.s4 1966171168
  %v5450 = vunpack.c.0.s8 %v5449
  %v5451 = vlaneseq
  %v5452 = vshrl.u32 %v5451, 7
  %v5453 = vsub.s32 %v5450, %v5452
  %v5454 = vrot.slane %v5440, %v5453
  %v5455 = vcombine.low %v5447, %v5454
  %v5456 = vcombine.low %v2850, %v2854
  %v5457 = vcombine.low %v2858, %v2862
  %v5458 = vcombine.low %v2866, %v2870
  %v5459 = vcombine.low %v2874, %v2878
  %v5461 = vunpack.c.l.s4 1966171168
  %v5462 = vunpack.c.0.s8 %v5461
  %v5463 = vlaneseq
  %v5464 = vshrl.u32 %v5463, 7
  %v5465 = vsub.s32 %v5462, %v5464
  %v5466 = vrot.slane %v5456, %v5465
  %v5468 = vunpack.c.l.s4 1966171168
  %v5469 = vunpack.c.0.s8 %v5468
  %v5470 = vlaneseq
  %v5471 = vshrl.u32 %v5470, 7
  %v5472 = vsub.s32 %v5469, %v5471
  %v5473 = vrot.slane %v5457, %v5472
  %v5475 = vunpack.c.l.s4 1966171168
  %v5476 = vunpack.c.0.s8 %v5475
  %v5477 = vlaneseq
  %v5478 = vshrl.u32 %v5477, 7
  %v5479 = vsub.s32 %v5476, %v5478
  %v5480 = vrot.slane %v5458, %v5479
  %v5482 = vunpack.c.l.s4 1966171168
  %v5483 = vunpack.c.0.s8 %v5482
  %v5484 = vlaneseq
  %v5485 = vshrl.u32 %v5484, 7
  %v5486 = vsub.s32 %v5483, %v5485
  %v5487 = vrot.slane %v5459, %v5486
  %v5488 = vcombine.low %v5466, %v5473
  %v5489 = vcombine.low %v5480, %v5487
  %v5491 = vunpack.c.l.s4 1966171168
  %v5492 = vunpack.c.0.s8 %v5491
  %v5493 = vlaneseq
  %v5494 = vshrl.u32 %v5493, 7
  %v5495 = vsub.s32 %v5492, %v5494
  %v5496 = vrot.slane %v5488, %v5495
  %v5498 = vunpack.c.l.s4 1966171168
  %v5499 = vunpack.c.0.s8 %v5498
  %v5500 = vlaneseq
  %v5501 = vshrl.u32 %v5500, 7
  %v5502 = vsub.s32 %v5499, %v5501
  %v5503 = vrot.slane %v5489, %v5502
  %v5504 = vcombine.low %v5496, %v5503
  %v5505 = vcombine.low %v2882, %v2886
  %v5506 = vcombine.low %v2890, %v2894
  %v5507 = vcombine.low %v2898, %v2902
  %v5508 = vcombine.low %v2906, %v2910
  %v5510 = vunpack.c.l.s4 1966171168
  %v5511 = vunpack.c.0.s8 %v5510
  %v5512 = vlaneseq
  %v5513 = vshrl.u32 %v5512, 7
  %v5514 = vsub.s32 %v5511, %v5513
  %v5515 = vrot.slane %v5505, %v5514
  %v5517 = vunpack.c.l.s4 1966171168
  %v5518 = vunpack.c.0.s8 %v5517
  %v5519 = vlaneseq
  %v5520 = vshrl.u32 %v5519, 7
  %v5521 = vsub.s32 %v5518, %v5520
  %v5522 = vrot.slane %v5506, %v5521
  %v5524 = vunpack.c.l.s4 1966171168
  %v5525 = vunpack.c.0.s8 %v5524
  %v5526 = vlaneseq
  %v5527 = vshrl.u32 %v5526, 7
  %v5528 = vsub.s32 %v5525, %v5527
  %v5529 = vrot.slane %v5507, %v5528
  %v5531 = vunpack.c.l.s4 1966171168
  %v5532 = vunpack.c.0.s8 %v5531
  %v5533 = vlaneseq
  %v5534 = vshrl.u32 %v5533, 7
  %v5535 = vsub.s32 %v5532, %v5534
  %v5536 = vrot.slane %v5508, %v5535
  %v5537 = vcombine.low %v5515, %v5522
  %v5538 = vcombine.low %v5529, %v5536
  %v5540 = vunpack.c.l.s4 1966171168
  %v5541 = vunpack.c.0.s8 %v5540
  %v5542 = vlaneseq
  %v5543 = vshrl.u32 %v5542, 7
  %v5544 = vsub.s32 %v5541, %v5543
  %v5545 = vrot.slane %v5537, %v5544
  %v5547 = vunpack.c.l.s4 1966171168
  %v5548 = vunpack.c.0.s8 %v5547
  %v5549 = vlaneseq
  %v5550 = vshrl.u32 %v5549, 7
  %v5551 = vsub.s32 %v5548, %v5550
  %v5552 = vrot.slane %v5538, %v5551
  %v5553 = vcombine.low %v5545, %v5552
  %v5554 = vcombine.low %v2914, %v2918
  %v5555 = vcombine.low %v2922, %v2926
  %v5556 = vcombine.low %v2930, %v2934
  %v5557 = vcombine.low %v2938, %v2942
  %v5559 = vunpack.c.l.s4 1966171168
  %v5560 = vunpack.c.0.s8 %v5559
  %v5561 = vlaneseq
  %v5562 = vshrl.u32 %v5561, 7
  %v5563 = vsub.s32 %v5560, %v5562
  %v5564 = vrot.slane %v5554, %v5563
  %v5566 = vunpack.c.l.s4 1966171168
  %v5567 = vunpack.c.0.s8 %v5566
  %v5568 = vlaneseq
  %v5569 = vshrl.u32 %v5568, 7
  %v5570 = vsub.s32 %v5567, %v5569
  %v5571 = vrot.slane %v5555, %v5570
  %v5573 = vunpack.c.l.s4 1966171168
  %v5574 = vunpack.c.0.s8 %v5573
  %v5575 = vlaneseq
  %v5576 = vshrl.u32 %v5575, 7
  %v5577 = vsub.s32 %v5574, %v5576
  %v5578 = vrot.slane %v5556, %v5577
  %v5580 = vunpack.c.l.s4 1966171168
  %v5581 = vunpack.c.0.s8 %v5580
  %v5582 = vlaneseq
  %v5583 = vshrl.u32 %v5582, 7
  %v5584 = vsub.s32 %v5581, %v5583
  %v5585 = vrot.slane %v5557, %v5584
  %v5586 = vcombine.low %v5564, %v5571
  %v5587 = vcombine.low %v5578, %v5585
  %v5589 = vunpack.c.l.s4 1966171168
  %v5590 = vunpack.c.0.s8 %v5589
  %v5591 = vlaneseq
  %v5592 = vshrl.u32 %v5591, 7
  %v5593 = vsub.s32 %v5590, %v5592
  %v5594 = vrot.slane %v5586, %v5593
  %v5596 = vunpack.c.l.s4 1966171168
  %v5597 = vunpack.c.0.s8 %v5596
  %v5598 = vlaneseq
  %v5599 = vshrl.u32 %v5598, 7
  %v5600 = vsub.s32 %v5597, %v5599
  %v5601 = vrot.slane %v5587, %v5600
  %v5602 = vcombine.low %v5594, %v5601
  %v5603 = vcombine.low %v2946, %v2950
  %v5604 = vcombine.low %v2954, %v2958
  %v5605 = vcombine.low %v2962, %v2966
  %v5606 = vcombine.low %v2970, %v2974
  %v5608 = vunpack.c.l.s4 1966171168
  %v5609 = vunpack.c.0.s8 %v5608
  %v5610 = vlaneseq
  %v5611 = vshrl.u32 %v5610, 7
  %v5612 = vsub.s32 %v5609, %v5611
  %v5613 = vrot.slane %v5603, %v5612
  %v5615 = vunpack.c.l.s4 1966171168
  %v5616 = vunpack.c.0.s8 %v5615
  %v5617 = vlaneseq
  %v5618 = vshrl.u32 %v5617, 7
  %v5619 = vsub.s32 %v5616, %v5618
  %v5620 = vrot.slane %v5604, %v5619
  %v5622 = vunpack.c.l.s4 1966171168
  %v5623 = vunpack.c.0.s8 %v5622
  %v5624 = vlaneseq
  %v5625 = vshrl.u32 %v5624, 7
  %v5626 = vsub.s32 %v5623, %v5625
  %v5627 = vrot.slane %v5605, %v5626
  %v5629 = vunpack.c.l.s4 1966171168
  %v5630 = vunpack.c.0.s8 %v5629
  %v5631 = vlaneseq
  %v5632 = vshrl.u32 %v5631, 7
  %v5633 = vsub.s32 %v5630, %v5632
  %v5634 = vrot.slane %v5606, %v5633
  %v5635 = vcombine.low %v5613, %v5620
  %v5636 = vcombine.low %v5627, %v5634
  %v5638 = vunpack.c.l.s4 1966171168
  %v5639 = vunpack.c.0.s8 %v5638
  %v5640 = vlaneseq
  %v5641 = vshrl.u32 %v5640, 7
  %v5642 = vsub.s32 %v5639, %v5641
  %v5643 = vrot.slane %v5635, %v5642
  %v5645 = vunpack.c.l.s4 1966171168
  %v5646 = vunpack.c.0.s8 %v5645
  %v5647 = vlaneseq
  %v5648 = vshrl.u32 %v5647, 7
  %v5649 = vsub.s32 %v5646, %v5648
  %v5650 = vrot.slane %v5636, %v5649
  %v5651 = vcombine.low %v5643, %v5650
  %v5652 = vcombine.low %v2978, %v2982
  %v5653 = vcombine.low %v2986, %v2990
  %v5654 = vcombine.low %v2994, %v2998
  %v5655 = vcombine.low %v3002, %v3006
  %v5657 = vunpack.c.l.s4 1966171168
  %v5658 = vunpack.c.0.s8 %v5657
  %v5659 = vlaneseq
  %v5660 = vshrl.u32 %v5659, 7
  %v5661 = vsub.s32 %v5658, %v5660
  %v5662 = vrot.slane %v5652, %v5661
  %v5664 = vunpack.c.l.s4 1966171168
  %v5665 = vunpack.c.0.s8 %v5664
  %v5666 = vlaneseq
  %v5667 = vshrl.u32 %v5666, 7
  %v5668 = vsub.s32 %v5665, %v5667
  %v5669 = vrot.slane %v5653, %v5668
  %v5671 = vunpack.c.l.s4 1966171168
  %v5672 = vunpack.c.0.s8 %v5671
  %v5673 = vlaneseq
  %v5674 = vshrl.u32 %v5673, 7
  %v5675 = vsub.s32 %v5672, %v5674
  %v5676 = vrot.slane %v5654, %v5675
  %v5678 = vunpack.c.l.s4 1966171168
  %v5679 = vunpack.c.0.s8 %v5678
  %v5680 = vlaneseq
  %v5681 = vshrl.u32 %v5680, 7
  %v5682 = vsub.s32 %v5679, %v5681
  %v5683 = vrot.slane %v5655, %v5682
  %v5684 = vcombine.low %v5662, %v5669
  %v5685 = vcombine.low %v5676, %v5683
  %v5687 = vunpack.c.l.s4 1966171168
  %v5688 = vunpack.c.0.s8 %v5687
  %v5689 = vlaneseq
  %v5690 = vshrl.u32 %v5689, 7
  %v5691 = vsub.s32 %v5688, %v5690
  %v5692 = vrot.slane %v5684, %v5691
  %v5694 = vunpack.c.l.s4 1966171168
  %v5695 = vunpack.c.0.s8 %v5694
  %v5696 = vlaneseq
  %v5697 = vshrl.u32 %v5696, 7
  %v5698 = vsub.s32 %v5695, %v5697
  %v5699 = vrot.slane %v5685, %v5698
  %v5700 = vcombine.low %v5692, %v5699
  %v5701 = vcombine.low %v3010, %v3014
  %v5702 = vcombine.low %v3018, %v3022
  %v5703 = vcombine.low %v3026, %v3030
  %v5704 = vcombine.low %v3034, %v3038
  %v5706 = vunpack.c.l.s4 1966171168
  %v5707 = vunpack.c.0.s8 %v5706
  %v5708 = vlaneseq
  %v5709 = vshrl.u32 %v5708, 7
  %v5710 = vsub.s32 %v5707, %v5709
  %v5711 = vrot.slane %v5701, %v5710
  %v5713 = vunpack.c.l.s4 1966171168
  %v5714 = vunpack.c.0.s8 %v5713
  %v5715 = vlaneseq
  %v5716 = vshrl.u32 %v5715, 7
  %v5717 = vsub.s32 %v5714, %v5716
  %v5718 = vrot.slane %v5702, %v5717
  %v5720 = vunpack.c.l.s4 1966171168
  %v5721 = vunpack.c.0.s8 %v5720
  %v5722 = vlaneseq
  %v5723 = vshrl.u32 %v5722, 7
  %v5724 = vsub.s32 %v5721, %v5723
  %v5725 = vrot.slane %v5703, %v5724
  %v5727 = vunpack.c.l.s4 1966171168
  %v5728 = vunpack.c.0.s8 %v5727
  %v5729 = vlaneseq
  %v5730 = vshrl.u32 %v5729, 7
  %v5731 = vsub.s32 %v5728, %v5730
  %v5732 = vrot.slane %v5704, %v5731
  %v5733 = vcombine.low %v5711, %v5718
  %v5734 = vcombine.low %v5725, %v5732
  %v5736 = vunpack.c.l.s4 1966171168
  %v5737 = vunpack.c.0.s8 %v5736
  %v5738 = vlaneseq
  %v5739 = vshrl.u32 %v5738, 7
  %v5740 = vsub.s32 %v5737, %v5739
  %v5741 = vrot.slane %v5733, %v5740
  %v5743 = vunpack.c.l.s4 1966171168
  %v5744 = vunpack.c.0.s8 %v5743
  %v5745 = vlaneseq
  %v5746 = vshrl.u32 %v5745, 7
  %v5747 = vsub.s32 %v5744, %v5746
  %v5748 = vrot.slane %v5734, %v5747
  %v5749 = vcombine.low %v5741, %v5748
  %v5750 = vcombine.low %v3042, %v3046
  %v5751 = vcombine.low %v3050, %v3054
  %v5752 = vcombine.low %v3058, %v3062
  %v5753 = vcombine.low %v3066, %v3070
  %v5755 = vunpack.c.l.s4 1966171168
  %v5756 = vunpack.c.0.s8 %v5755
  %v5757 = vlaneseq
  %v5758 = vshrl.u32 %v5757, 7
  %v5759 = vsub.s32 %v5756, %v5758
  %v5760 = vrot.slane %v5750, %v5759
  %v5762 = vunpack.c.l.s4 1966171168
  %v5763 = vunpack.c.0.s8 %v5762
  %v5764 = vlaneseq
  %v5765 = vshrl.u32 %v5764, 7
  %v5766 = vsub.s32 %v5763, %v5765
  %v5767 = vrot.slane %v5751, %v5766
  %v5769 = vunpack.c.l.s4 1966171168
  %v5770 = vunpack.c.0.s8 %v5769
  %v5771 = vlaneseq
  %v5772 = vshrl.u32 %v5771, 7
  %v5773 = vsub.s32 %v5770, %v5772
  %v5774 = vrot.slane %v5752, %v5773
  %v5776 = vunpack.c.l.s4 1966171168
  %v5777 = vunpack.c.0.s8 %v5776
  %v5778 = vlaneseq
  %v5779 = vshrl.u32 %v5778, 7
  %v5780 = vsub.s32 %v5777, %v5779
  %v5781 = vrot.slane %v5753, %v5780
  %v5782 = vcombine.low %v5760, %v5767
  %v5783 = vcombine.low %v5774, %v5781
  %v5785 = vunpack.c.l.s4 1966171168
  %v5786 = vunpack.c.0.s8 %v5785
  %v5787 = vlaneseq
  %v5788 = vshrl.u32 %v5787, 7
  %v5789 = vsub.s32 %v5786, %v5788
  %v5790 = vrot.slane %v5782, %v5789
  %v5792 = vunpack.c.l.s4 1966171168
  %v5793 = vunpack.c.0.s8 %v5792
  %v5794 = vlaneseq
  %v5795 = vshrl.u32 %v5794, 7
  %v5796 = vsub.s32 %v5793, %v5795
  %v5797 = vrot.slane %v5783, %v5796
  %v5798 = vcombine.low %v5790, %v5797
  %v5799 = vcombine.low %v3074, %v3078
  %v5800 = vcombine.low %v3082, %v3086
  %v5801 = vcombine.low %v3090, %v3094
  %v5802 = vcombine.low %v3098, %v3102
  %v5804 = vunpack.c.l.s4 1966171168
  %v5805 = vunpack.c.0.s8 %v5804
  %v5806 = vlaneseq
  %v5807 = vshrl.u32 %v5806, 7
  %v5808 = vsub.s32 %v5805, %v5807
  %v5809 = vrot.slane %v5799, %v5808
  %v5811 = vunpack.c.l.s4 1966171168
  %v5812 = vunpack.c.0.s8 %v5811
  %v5813 = vlaneseq
  %v5814 = vshrl.u32 %v5813, 7
  %v5815 = vsub.s32 %v5812, %v5814
  %v5816 = vrot.slane %v5800, %v5815
  %v5818 = vunpack.c.l.s4 1966171168
  %v5819 = vunpack.c.0.s8 %v5818
  %v5820 = vlaneseq
  %v5821 = vshrl.u32 %v5820, 7
  %v5822 = vsub.s32 %v5819, %v5821
  %v5823 = vrot.slane %v5801, %v5822
  %v5825 = vunpack.c.l.s4 1966171168
  %v5826 = vunpack.c.0.s8 %v5825
  %v5827 = vlaneseq
  %v5828 = vshrl.u32 %v5827, 7
  %v5829 = vsub.s32 %v5826, %v5828
  %v5830 = vrot.slane %v5802, %v5829
  %v5831 = vcombine.low %v5809, %v5816
  %v5832 = vcombine.low %v5823, %v5830
  %v5834 = vunpack.c.l.s4 1966171168
  %v5835 = vunpack.c.0.s8 %v5834
  %v5836 = vlaneseq
  %v5837 = vshrl.u32 %v5836, 7
  %v5838 = vsub.s32 %v5835, %v5837
  %v5839 = vrot.slane %v5831, %v5838
  %v5841 = vunpack.c.l.s4 1966171168
  %v5842 = vunpack.c.0.s8 %v5841
  %v5843 = vlaneseq
  %v5844 = vshrl.u32 %v5843, 7
  %v5845 = vsub.s32 %v5842, %v5844
  %v5846 = vrot.slane %v5832, %v5845
  %v5847 = vcombine.low %v5839, %v5846
  %v5848 = vcombine.low %v3106, %v3110
  %v5849 = vcombine.low %v3114, %v3118
  %v5850 = vcombine.low %v3122, %v3126
  %v5851 = vcombine.low %v3130, %v3134
  %v5853 = vunpack.c.l.s4 1966171168
  %v5854 = vunpack.c.0.s8 %v5853
  %v5855 = vlaneseq
  %v5856 = vshrl.u32 %v5855, 7
  %v5857 = vsub.s32 %v5854, %v5856
  %v5858 = vrot.slane %v5848, %v5857
  %v5860 = vunpack.c.l.s4 1966171168
  %v5861 = vunpack.c.0.s8 %v5860
  %v5862 = vlaneseq
  %v5863 = vshrl.u32 %v5862, 7
  %v5864 = vsub.s32 %v5861, %v5863
  %v5865 = vrot.slane %v5849, %v5864
  %v5867 = vunpack.c.l.s4 1966171168
  %v5868 = vunpack.c.0.s8 %v5867
  %v5869 = vlaneseq
  %v5870 = vshrl.u32 %v5869, 7
  %v5871 = vsub.s32 %v5868, %v5870
  %v5872 = vrot.slane %v5850, %v5871
  %v5874 = vunpack.c.l.s4 1966171168
  %v5875 = vunpack.c.0.s8 %v5874
  %v5876 = vlaneseq
  %v5877 = vshrl.u32 %v5876, 7
  %v5878 = vsub.s32 %v5875, %v5877
  %v5879 = vrot.slane %v5851, %v5878
  %v5880 = vcombine.low %v5858, %v5865
  %v5881 = vcombine.low %v5872, %v5879
  %v5883 = vunpack.c.l.s4 1966171168
  %v5884 = vunpack.c.0.s8 %v5883
  %v5885 = vlaneseq
  %v5886 = vshrl.u32 %v5885, 7
  %v5887 = vsub.s32 %v5884, %v5886
  %v5888 = vrot.slane %v5880, %v5887
  %v5890 = vunpack.c.l.s4 1966171168
  %v5891 = vunpack.c.0.s8 %v5890
  %v5892 = vlaneseq
  %v5893 = vshrl.u32 %v5892, 7
  %v5894 = vsub.s32 %v5891, %v5893
  %v5895 = vrot.slane %v5881, %v5894
  %v5896 = vcombine.low %v5888, %v5895
  %v5897 = vcombine.low %v3138, %v3142
  %v5898 = vcombine.low %v3146, %v3150
  %v5899 = vcombine.low %v3154, %v3158
  %v5900 = vcombine.low %v3162, %v3166
  %v5902 = vunpack.c.l.s4 1966171168
  %v5903 = vunpack.c.0.s8 %v5902
  %v5904 = vlaneseq
  %v5905 = vshrl.u32 %v5904, 7
  %v5906 = vsub.s32 %v5903, %v5905
  %v5907 = vrot.slane %v5897, %v5906
  %v5909 = vunpack.c.l.s4 1966171168
  %v5910 = vunpack.c.0.s8 %v5909
  %v5911 = vlaneseq
  %v5912 = vshrl.u32 %v5911, 7
  %v5913 = vsub.s32 %v5910, %v5912
  %v5914 = vrot.slane %v5898, %v5913
  %v5916 = vunpack.c.l.s4 1966171168
  %v5917 = vunpack.c.0.s8 %v5916
  %v5918 = vlaneseq
  %v5919 = vshrl.u32 %v5918, 7
  %v5920 = vsub.s32 %v5917, %v5919
  %v5921 = vrot.slane %v5899, %v5920
  %v5923 = vunpack.c.l.s4 1966171168
  %v5924 = vunpack.c.0.s8 %v5923
  %v5925 = vlaneseq
  %v5926 = vshrl.u32 %v5925, 7
  %v5927 = vsub.s32 %v5924, %v5926
  %v5928 = vrot.slane %v5900, %v5927
  %v5929 = vcombine.low %v5907, %v5914
  %v5930 = vcombine.low %v5921, %v5928
  %v5932 = vunpack.c.l.s4 1966171168
  %v5933 = vunpack.c.0.s8 %v5932
  %v5934 = vlaneseq
  %v5935 = vshrl.u32 %v5934, 7
  %v5936 = vsub.s32 %v5933, %v5935
  %v5937 = vrot.slane %v5929, %v5936
  %v5939 = vunpack.c.l.s4 1966171168
  %v5940 = vunpack.c.0.s8 %v5939
  %v5941 = vlaneseq
  %v5942 = vshrl.u32 %v5941, 7
  %v5943 = vsub.s32 %v5940, %v5942
  %v5944 = vrot.slane %v5930, %v5943
  %v5945 = vcombine.low %v5937, %v5944
  %v5946 = vcombine.low %v3170, %v3174
  %v5947 = vcombine.low %v3178, %v3182
  %v5948 = vcombine.low %v3186, %v3190
  %v5949 = vcombine.low %v3194, %v3198
  %v5951 = vunpack.c.l.s4 1966171168
  %v5952 = vunpack.c.0.s8 %v5951
  %v5953 = vlaneseq
  %v5954 = vshrl.u32 %v5953, 7
  %v5955 = vsub.s32 %v5952, %v5954
  %v5956 = vrot.slane %v5946, %v5955
  %v5958 = vunpack.c.l.s4 1966171168
  %v5959 = vunpack.c.0.s8 %v5958
  %v5960 = vlaneseq
  %v5961 = vshrl.u32 %v5960, 7
  %v5962 = vsub.s32 %v5959, %v5961
  %v5963 = vrot.slane %v5947, %v5962
  %v5965 = vunpack.c.l.s4 1966171168
  %v5966 = vunpack.c.0.s8 %v5965
  %v5967 = vlaneseq
  %v5968 = vshrl.u32 %v5967, 7
  %v5969 = vsub.s32 %v5966, %v5968
  %v5970 = vrot.slane %v5948, %v5969
  %v5972 = vunpack.c.l.s4 1966171168
  %v5973 = vunpack.c.0.s8 %v5972
  %v5974 = vlaneseq
  %v5975 = vshrl.u32 %v5974, 7
  %v5976 = vsub.s32 %v5973, %v5975
  %v5977 = vrot.slane %v5949, %v5976
  %v5978 = vcombine.low %v5956, %v5963
  %v5979 = vcombine.low %v5970, %v5977
  %v5981 = vunpack.c.l.s4 1966171168
  %v5982 = vunpack.c.0.s8 %v5981
  %v5983 = vlaneseq
  %v5984 = vshrl.u32 %v5983, 7
  %v5985 = vsub.s32 %v5982, %v5984
  %v5986 = vrot.slane %v5978, %v5985
  %v5988 = vunpack.c.l.s4 1966171168
  %v5989 = vunpack.c.0.s8 %v5988
  %v5990 = vlaneseq
  %v5991 = vshrl.u32 %v5990, 7
  %v5992 = vsub.s32 %v5989, %v5991
  %v5993 = vrot.slane %v5979, %v5992
  %v5994 = vcombine.low %v5986, %v5993
  %v5995 = vcombine.low %v3202, %v3206
  %v5996 = vcombine.low %v3210, %v3214
  %v5997 = vcombine.low %v3218, %v3222
  %v5998 = vcombine.low %v3226, %v3230
  %v6000 = vunpack.c.l.s4 1966171168
  %v6001 = vunpack.c.0.s8 %v6000
  %v6002 = vlaneseq
  %v6003 = vshrl.u32 %v6002, 7
  %v6004 = vsub.s32 %v6001, %v6003
  %v6005 = vrot.slane %v5995, %v6004
  %v6007 = vunpack.c.l.s4 1966171168
  %v6008 = vunpack.c.0.s8 %v6007
  %v6009 = vlaneseq
  %v6010 = vshrl.u32 %v6009, 7
  %v6011 = vsub.s32 %v6008, %v6010
  %v6012 = vrot.slane %v5996, %v6011
  %v6014 = vunpack.c.l.s4 1966171168
  %v6015 = vunpack.c.0.s8 %v6014
  %v6016 = vlaneseq
  %v6017 = vshrl.u32 %v6016, 7
  %v6018 = vsub.s32 %v6015, %v6017
  %v6019 = vrot.slane %v5997, %v6018
  %v6021 = vunpack.c.l.s4 1966171168
  %v6022 = vunpack.c.0.s8 %v6021
  %v6023 = vlaneseq
  %v6024 = vshrl.u32 %v6023, 7
  %v6025 = vsub.s32 %v6022, %v6024
  %v6026 = vrot.slane %v5998, %v6025
  %v6027 = vcombine.low %v6005, %v6012
  %v6028 = vcombine.low %v6019, %v6026
  %v6030 = vunpack.c.l.s4 1966171168
  %v6031 = vunpack.c.0.s8 %v6030
  %v6032 = vlaneseq
  %v6033 = vshrl.u32 %v6032, 7
  %v6034 = vsub.s32 %v6031, %v6033
  %v6035 = vrot.slane %v6027, %v6034
  %v6037 = vunpack.c.l.s4 1966171168
  %v6038 = vunpack.c.0.s8 %v6037
  %v6039 = vlaneseq
  %v6040 = vshrl.u32 %v6039, 7
  %v6041 = vsub.s32 %v6038, %v6040
  %v6042 = vrot.slane %v6028, %v6041
  %v6043 = vcombine.low %v6035, %v6042
  %v6044 = vcombine.low %v3234, %v3238
  %v6045 = vcombine.low %v3242, %v3246
  %v6046 = vcombine.low %v3250, %v3254
  %v6047 = vcombine.low %v3258, %v3262
  %v6049 = vunpack.c.l.s4 1966171168
  %v6050 = vunpack.c.0.s8 %v6049
  %v6051 = vlaneseq
  %v6052 = vshrl.u32 %v6051, 7
  %v6053 = vsub.s32 %v6050, %v6052
  %v6054 = vrot.slane %v6044, %v6053
  %v6056 = vunpack.c.l.s4 1966171168
  %v6057 = vunpack.c.0.s8 %v6056
  %v6058 = vlaneseq
  %v6059 = vshrl.u32 %v6058, 7
  %v6060 = vsub.s32 %v6057, %v6059
  %v6061 = vrot.slane %v6045, %v6060
  %v6063 = vunpack.c.l.s4 1966171168
  %v6064 = vunpack.c.0.s8 %v6063
  %v6065 = vlaneseq
  %v6066 = vshrl.u32 %v6065, 7
  %v6067 = vsub.s32 %v6064, %v6066
  %v6068 = vrot.slane %v6046, %v6067
  %v6070 = vunpack.c.l.s4 1966171168
  %v6071 = vunpack.c.0.s8 %v6070
  %v6072 = vlaneseq
  %v6073 = vshrl.u32 %v6072, 7
  %v6074 = vsub.s32 %v6071, %v6073
  %v6075 = vrot.slane %v6047, %v6074
  %v6076 = vcombine.low %v6054, %v6061
  %v6077 = vcombine.low %v6068, %v6075
  %v6079 = vunpack.c.l.s4 1966171168
  %v6080 = vunpack.c.0.s8 %v6079
  %v6081 = vlaneseq
  %v6082 = vshrl.u32 %v6081, 7
  %v6083 = vsub.s32 %v6080, %v6082
  %v6084 = vrot.slane %v6076, %v6083
  %v6086 = vunpack.c.l.s4 1966171168
  %v6087 = vunpack.c.0.s8 %v6086
  %v6088 = vlaneseq
  %v6089 = vshrl.u32 %v6088, 7
  %v6090 = vsub.s32 %v6087, %v6089
  %v6091 = vrot.slane %v6077, %v6090
  %v6092 = vcombine.low %v6084, %v6091
  %v6093 = vcombine.low %v3266, %v3270
  %v6094 = vcombine.low %v3274, %v3278
  %v6095 = vcombine.low %v3282, %v3286
  %v6096 = vcombine.low %v3290, %v3294
  %v6098 = vunpack.c.l.s4 1966171168
  %v6099 = vunpack.c.0.s8 %v6098
  %v6100 = vlaneseq
  %v6101 = vshrl.u32 %v6100, 7
  %v6102 = vsub.s32 %v6099, %v6101
  %v6103 = vrot.slane %v6093, %v6102
  %v6105 = vunpack.c.l.s4 1966171168
  %v6106 = vunpack.c.0.s8 %v6105
  %v6107 = vlaneseq
  %v6108 = vshrl.u32 %v6107, 7
  %v6109 = vsub.s32 %v6106, %v6108
  %v6110 = vrot.slane %v6094, %v6109
  %v6112 = vunpack.c.l.s4 1966171168
  %v6113 = vunpack.c.0.s8 %v6112
  %v6114 = vlaneseq
  %v6115 = vshrl.u32 %v6114, 7
  %v6116 = vsub.s32 %v6113, %v6115
  %v6117 = vrot.slane %v6095, %v6116
  %v6119 = vunpack.c.l.s4 1966171168
  %v6120 = vunpack.c.0.s8 %v6119
  %v6121 = vlaneseq
  %v6122 = vshrl.u32 %v6121, 7
  %v6123 = vsub.s32 %v6120, %v6122
  %v6124 = vrot.slane %v6096, %v6123
  %v6125 = vcombine.low %v6103, %v6110
  %v6126 = vcombine.low %v6117, %v6124
  %v6128 = vunpack.c.l.s4 1966171168
  %v6129 = vunpack.c.0.s8 %v6128
  %v6130 = vlaneseq
  %v6131 = vshrl.u32 %v6130, 7
  %v6132 = vsub.s32 %v6129, %v6131
  %v6133 = vrot.slane %v6125, %v6132
  %v6135 = vunpack.c.l.s4 1966171168
  %v6136 = vunpack.c.0.s8 %v6135
  %v6137 = vlaneseq
  %v6138 = vshrl.u32 %v6137, 7
  %v6139 = vsub.s32 %v6136, %v6138
  %v6140 = vrot.slane %v6126, %v6139
  %v6141 = vcombine.low %v6133, %v6140
  %v6142 = vcombine.low %v3298, %v3302
  %v6143 = vcombine.low %v3306, %v3310
  %v6144 = vcombine.low %v3314, %v3318
  %v6145 = vcombine.low %v3322, %v3326
  %v6147 = vunpack.c.l.s4 1966171168
  %v6148 = vunpack.c.0.s8 %v6147
  %v6149 = vlaneseq
  %v6150 = vshrl.u32 %v6149, 7
  %v6151 = vsub.s32 %v6148, %v6150
  %v6152 = vrot.slane %v6142, %v6151
  %v6154 = vunpack.c.l.s4 1966171168
  %v6155 = vunpack.c.0.s8 %v6154
  %v6156 = vlaneseq
  %v6157 = vshrl.u32 %v6156, 7
  %v6158 = vsub.s32 %v6155, %v6157
  %v6159 = vrot.slane %v6143, %v6158
  %v6161 = vunpack.c.l.s4 1966171168
  %v6162 = vunpack.c.0.s8 %v6161
  %v6163 = vlaneseq
  %v6164 = vshrl.u32 %v6163, 7
  %v6165 = vsub.s32 %v6162, %v6164
  %v6166 = vrot.slane %v6144, %v6165
  %v6168 = vunpack.c.l.s4 1966171168
  %v6169 = vunpack.c.0.s8 %v6168
  %v6170 = vlaneseq
  %v6171 = vshrl.u32 %v6170, 7
  %v6172 = vsub.s32 %v6169, %v6171
  %v6173 = vrot.slane %v6145, %v6172
  %v6174 = vcombine.low %v6152, %v6159
  %v6175 = vcombine.low %v6166, %v6173
  %v6177 = vunpack.c.l.s4 1966171168
  %v6178 = vunpack.c.0.s8 %v6177
  %v6179 = vlaneseq
  %v6180 = vshrl.u32 %v6179, 7
  %v6181 = vsub.s32 %v6178, %v6180
  %v6182 = vrot.slane %v6174, %v6181
  %v6184 = vunpack.c.l.s4 1966171168
  %v6185 = vunpack.c.0.s8 %v6184
  %v6186 = vlaneseq
  %v6187 = vshrl.u32 %v6186, 7
  %v6188 = vsub.s32 %v6185, %v6187
  %v6189 = vrot.slane %v6175, %v6188
  %v6190 = vcombine.low %v6182, %v6189
  %v6191 = vcombine.low %v3330, %v3334
  %v6192 = vcombine.low %v3338, %v3342
  %v6193 = vcombine.low %v3346, %v3350
  %v6194 = vcombine.low %v3354, %v3358
  %v6196 = vunpack.c.l.s4 1966171168
  %v6197 = vunpack.c.0.s8 %v6196
  %v6198 = vlaneseq
  %v6199 = vshrl.u32 %v6198, 7
  %v6200 = vsub.s32 %v6197, %v6199
  %v6201 = vrot.slane %v6191, %v6200
  %v6203 = vunpack.c.l.s4 1966171168
  %v6204 = vunpack.c.0.s8 %v6203
  %v6205 = vlaneseq
  %v6206 = vshrl.u32 %v6205, 7
  %v6207 = vsub.s32 %v6204, %v6206
  %v6208 = vrot.slane %v6192, %v6207
  %v6210 = vunpack.c.l.s4 1966171168
  %v6211 = vunpack.c.0.s8 %v6210
  %v6212 = vlaneseq
  %v6213 = vshrl.u32 %v6212, 7
  %v6214 = vsub.s32 %v6211, %v6213
  %v6215 = vrot.slane %v6193, %v6214
  %v6217 = vunpack.c.l.s4 1966171168
  %v6218 = vunpack.c.0.s8 %v6217
  %v6219 = vlaneseq
  %v6220 = vshrl.u32 %v6219, 7
  %v6221 = vsub.s32 %v6218, %v6220
  %v6222 = vrot.slane %v6194, %v6221
  %v6223 = vcombine.low %v6201, %v6208
  %v6224 = vcombine.low %v6215, %v6222
  %v6226 = vunpack.c.l.s4 1966171168
  %v6227 = vunpack.c.0.s8 %v6226
  %v6228 = vlaneseq
  %v6229 = vshrl.u32 %v6228, 7
  %v6230 = vsub.s32 %v6227, %v6229
  %v6231 = vrot.slane %v6223, %v6230
  %v6233 = vunpack.c.l.s4 1966171168
  %v6234 = vunpack.c.0.s8 %v6233
  %v6235 = vlaneseq
  %v6236 = vshrl.u32 %v6235, 7
  %v6237 = vsub.s32 %v6234, %v6236
  %v6238 = vrot.slane %v6224, %v6237
  %v6239 = vcombine.low %v6231, %v6238
  %v6240 = vcombine.low %v3362, %v3366
  %v6241 = vcombine.low %v3370, %v3374
  %v6242 = vcombine.low %v3378, %v3382
  %v6243 = vcombine.low %v3386, %v3390
  %v6245 = vunpack.c.l.s4 1966171168
  %v6246 = vunpack.c.0.s8 %v6245
  %v6247 = vlaneseq
  %v6248 = vshrl.u32 %v6247, 7
  %v6249 = vsub.s32 %v6246, %v6248
  %v6250 = vrot.slane %v6240, %v6249
  %v6252 = vunpack.c.l.s4 1966171168
  %v6253 = vunpack.c.0.s8 %v6252
  %v6254 = vlaneseq
  %v6255 = vshrl.u32 %v6254, 7
  %v6256 = vsub.s32 %v6253, %v6255
  %v6257 = vrot.slane %v6241, %v6256
  %v6259 = vunpack.c.l.s4 1966171168
  %v6260 = vunpack.c.0.s8 %v6259
  %v6261 = vlaneseq
  %v6262 = vshrl.u32 %v6261, 7
  %v6263 = vsub.s32 %v6260, %v6262
  %v6264 = vrot.slane %v6242, %v6263
  %v6266 = vunpack.c.l.s4 1966171168
  %v6267 = vunpack.c.0.s8 %v6266
  %v6268 = vlaneseq
  %v6269 = vshrl.u32 %v6268, 7
  %v6270 = vsub.s32 %v6267, %v6269
  %v6271 = vrot.slane %v6243, %v6270
  %v6272 = vcombine.low %v6250, %v6257
  %v6273 = vcombine.low %v6264, %v6271
  %v6275 = vunpack.c.l.s4 1966171168
  %v6276 = vunpack.c.0.s8 %v6275
  %v6277 = vlaneseq
  %v6278 = vshrl.u32 %v6277, 7
  %v6279 = vsub.s32 %v6276, %v6278
  %v6280 = vrot.slane %v6272, %v6279
  %v6282 = vunpack.c.l.s4 1966171168
  %v6283 = vunpack.c.0.s8 %v6282
  %v6284 = vlaneseq
  %v6285 = vshrl.u32 %v6284, 7
  %v6286 = vsub.s32 %v6283, %v6285
  %v6287 = vrot.slane %v6273, %v6286
  %v6288 = vcombine.low %v6280, %v6287
  %v6289 = vcombine.low %v3394, %v3398
  %v6290 = vcombine.low %v3402, %v3406
  %v6291 = vcombine.low %v3410, %v3414
  %v6292 = vcombine.low %v3418, %v3422
  %v6294 = vunpack.c.l.s4 1966171168
  %v6295 = vunpack.c.0.s8 %v6294
  %v6296 = vlaneseq
  %v6297 = vshrl.u32 %v6296, 7
  %v6298 = vsub.s32 %v6295, %v6297
  %v6299 = vrot.slane %v6289, %v6298
  %v6301 = vunpack.c.l.s4 1966171168
  %v6302 = vunpack.c.0.s8 %v6301
  %v6303 = vlaneseq
  %v6304 = vshrl.u32 %v6303, 7
  %v6305 = vsub.s32 %v6302, %v6304
  %v6306 = vrot.slane %v6290, %v6305
  %v6308 = vunpack.c.l.s4 1966171168
  %v6309 = vunpack.c.0.s8 %v6308
  %v6310 = vlaneseq
  %v6311 = vshrl.u32 %v6310, 7
  %v6312 = vsub.s32 %v6309, %v6311
  %v6313 = vrot.slane %v6291, %v6312
  %v6315 = vunpack.c.l.s4 1966171168
  %v6316 = vunpack.c.0.s8 %v6315
  %v6317 = vlaneseq
  %v6318 = vshrl.u32 %v6317, 7
  %v6319 = vsub.s32 %v6316, %v6318
  %v6320 = vrot.slane %v6292, %v6319
  %v6321 = vcombine.low %v6299, %v6306
  %v6322 = vcombine.low %v6313, %v6320
  %v6324 = vunpack.c.l.s4 1966171168
  %v6325 = vunpack.c.0.s8 %v6324
  %v6326 = vlaneseq
  %v6327 = vshrl.u32 %v6326, 7
  %v6328 = vsub.s32 %v6325, %v6327
  %v6329 = vrot.slane %v6321, %v6328
  %v6331 = vunpack.c.l.s4 1966171168
  %v6332 = vunpack.c.0.s8 %v6331
  %v6333 = vlaneseq
  %v6334 = vshrl.u32 %v6333, 7
  %v6335 = vsub.s32 %v6332, %v6334
  %v6336 = vrot.slane %v6322, %v6335
  %v6337 = vcombine.low %v6329, %v6336
  %v6338 = vcombine.low %v3426, %v3430
  %v6339 = vcombine.low %v3434, %v3438
  %v6340 = vcombine.low %v3442, %v3446
  %v6341 = vcombine.low %v3450, %v3454
  %v6343 = vunpack.c.l.s4 1966171168
  %v6344 = vunpack.c.0.s8 %v6343
  %v6345 = vlaneseq
  %v6346 = vshrl.u32 %v6345, 7
  %v6347 = vsub.s32 %v6344, %v6346
  %v6348 = vrot.slane %v6338, %v6347
  %v6350 = vunpack.c.l.s4 1966171168
  %v6351 = vunpack.c.0.s8 %v6350
  %v6352 = vlaneseq
  %v6353 = vshrl.u32 %v6352, 7
  %v6354 = vsub.s32 %v6351, %v6353
  %v6355 = vrot.slane %v6339, %v6354
  %v6357 = vunpack.c.l.s4 1966171168
  %v6358 = vunpack.c.0.s8 %v6357
  %v6359 = vlaneseq
  %v6360 = vshrl.u32 %v6359, 7
  %v6361 = vsub.s32 %v6358, %v6360
  %v6362 = vrot.slane %v6340, %v6361
  %v6364 = vunpack.c.l.s4 1966171168
  %v6365 = vunpack.c.0.s8 %v6364
  %v6366 = vlaneseq
  %v6367 = vshrl.u32 %v6366, 7
  %v6368 = vsub.s32 %v6365, %v6367
  %v6369 = vrot.slane %v6341, %v6368
  %v6370 = vcombine.low %v6348, %v6355
  %v6371 = vcombine.low %v6362, %v6369
  %v6373 = vunpack.c.l.s4 1966171168
  %v6374 = vunpack.c.0.s8 %v6373
  %v6375 = vlaneseq
  %v6376 = vshrl.u32 %v6375, 7
  %v6377 = vsub.s32 %v6374, %v6376
  %v6378 = vrot.slane %v6370, %v6377
  %v6380 = vunpack.c.l.s4 1966171168
  %v6381 = vunpack.c.0.s8 %v6380
  %v6382 = vlaneseq
  %v6383 = vshrl.u32 %v6382, 7
  %v6384 = vsub.s32 %v6381, %v6383
  %v6385 = vrot.slane %v6371, %v6384
  %v6386 = vcombine.low %v6378, %v6385
  %v6387 = vcombine.low %v3458, %v3462
  %v6388 = vcombine.low %v3466, %v3470
  %v6389 = vcombine.low %v3474, %v3478
  %v6390 = vcombine.low %v3482, %v3486
  %v6392 = vunpack.c.l.s4 1966171168
  %v6393 = vunpack.c.0.s8 %v6392
  %v6394 = vlaneseq
  %v6395 = vshrl.u32 %v6394, 7
  %v6396 = vsub.s32 %v6393, %v6395
  %v6397 = vrot.slane %v6387, %v6396
  %v6399 = vunpack.c.l.s4 1966171168
  %v6400 = vunpack.c.0.s8 %v6399
  %v6401 = vlaneseq
  %v6402 = vshrl.u32 %v6401, 7
  %v6403 = vsub.s32 %v6400, %v6402
  %v6404 = vrot.slane %v6388, %v6403
  %v6406 = vunpack.c.l.s4 1966171168
  %v6407 = vunpack.c.0.s8 %v6406
  %v6408 = vlaneseq
  %v6409 = vshrl.u32 %v6408, 7
  %v6410 = vsub.s32 %v6407, %v6409
  %v6411 = vrot.slane %v6389, %v6410
  %v6413 = vunpack.c.l.s4 1966171168
  %v6414 = vunpack.c.0.s8 %v6413
  %v6415 = vlaneseq
  %v6416 = vshrl.u32 %v6415, 7
  %v6417 = vsub.s32 %v6414, %v6416
  %v6418 = vrot.slane %v6390, %v6417
  %v6419 = vcombine.low %v6397, %v6404
  %v6420 = vcombine.low %v6411, %v6418
  %v6422 = vunpack.c.l.s4 1966171168
  %v6423 = vunpack.c.0.s8 %v6422
  %v6424 = vlaneseq
  %v6425 = vshrl.u32 %v6424, 7
  %v6426 = vsub.s32 %v6423, %v6425
  %v6427 = vrot.slane %v6419, %v6426
  %v6429 = vunpack.c.l.s4 1966171168
  %v6430 = vunpack.c.0.s8 %v6429
  %v6431 = vlaneseq
  %v6432 = vshrl.u32 %v6431, 7
  %v6433 = vsub.s32 %v6430, %v6432
  %v6434 = vrot.slane %v6420, %v6433
  %v6435 = vcombine.low %v6427, %v6434
  %v6436 = vcombine.low %v3490, %v3494
  %v6437 = vcombine.low %v3498, %v3502
  %v6438 = vcombine.low %v3506, %v3510
  %v6439 = vcombine.low %v3514, %v3518
  %v6441 = vunpack.c.l.s4 1966171168
  %v6442 = vunpack.c.0.s8 %v6441
  %v6443 = vlaneseq
  %v6444 = vshrl.u32 %v6443, 7
  %v6445 = vsub.s32 %v6442, %v6444
  %v6446 = vrot.slane %v6436, %v6445
  %v6448 = vunpack.c.l.s4 1966171168
  %v6449 = vunpack.c.0.s8 %v6448
  %v6450 = vlaneseq
  %v6451 = vshrl.u32 %v6450, 7
  %v6452 = vsub.s32 %v6449, %v6451
  %v6453 = vrot.slane %v6437, %v6452
  %v6455 = vunpack.c.l.s4 1966171168
  %v6456 = vunpack.c.0.s8 %v6455
  %v6457 = vlaneseq
  %v6458 = vshrl.u32 %v6457, 7
  %v6459 = vsub.s32 %v6456, %v6458
  %v6460 = vrot.slane %v6438, %v6459
  %v6462 = vunpack.c.l.s4 1966171168
  %v6463 = vunpack.c.0.s8 %v6462
  %v6464 = vlaneseq
  %v6465 = vshrl.u32 %v6464, 7
  %v6466 = vsub.s32 %v6463, %v6465
  %v6467 = vrot.slane %v6439, %v6466
  %v6468 = vcombine.low %v6446, %v6453
  %v6469 = vcombine.low %v6460, %v6467
  %v6471 = vunpack.c.l.s4 1966171168
  %v6472 = vunpack.c.0.s8 %v6471
  %v6473 = vlaneseq
  %v6474 = vshrl.u32 %v6473, 7
  %v6475 = vsub.s32 %v6472, %v6474
  %v6476 = vrot.slane %v6468, %v6475
  %v6478 = vunpack.c.l.s4 1966171168
  %v6479 = vunpack.c.0.s8 %v6478
  %v6480 = vlaneseq
  %v6481 = vshrl.u32 %v6480, 7
  %v6482 = vsub.s32 %v6479, %v6481
  %v6483 = vrot.slane %v6469, %v6482
  %v6484 = vcombine.low %v6476, %v6483
  %v6485 = vcombine.low %v3522, %v3526
  %v6486 = vcombine.low %v3530, %v3534
  %v6487 = vcombine.low %v3538, %v3542
  %v6488 = vcombine.low %v3546, %v3550
  %v6490 = vunpack.c.l.s4 1966171168
  %v6491 = vunpack.c.0.s8 %v6490
  %v6492 = vlaneseq
  %v6493 = vshrl.u32 %v6492, 7
  %v6494 = vsub.s32 %v6491, %v6493
  %v6495 = vrot.slane %v6485, %v6494
  %v6497 = vunpack.c.l.s4 1966171168
  %v6498 = vunpack.c.0.s8 %v6497
  %v6499 = vlaneseq
  %v6500 = vshrl.u32 %v6499, 7
  %v6501 = vsub.s32 %v6498, %v6500
  %v6502 = vrot.slane %v6486, %v6501
  %v6504 = vunpack.c.l.s4 1966171168
  %v6505 = vunpack.c.0.s8 %v6504
  %v6506 = vlaneseq
  %v6507 = vshrl.u32 %v6506, 7
  %v6508 = vsub.s32 %v6505, %v6507
  %v6509 = vrot.slane %v6487, %v6508
  %v6511 = vunpack.c.l.s4 1966171168
  %v6512 = vunpack.c.0.s8 %v6511
  %v6513 = vlaneseq
  %v6514 = vshrl.u32 %v6513, 7
  %v6515 = vsub.s32 %v6512, %v6514
  %v6516 = vrot.slane %v6488, %v6515
  %v6517 = vcombine.low %v6495, %v6502
  %v6518 = vcombine.low %v6509, %v6516
  %v6520 = vunpack.c.l.s4 1966171168
  %v6521 = vunpack.c.0.s8 %v6520
  %v6522 = vlaneseq
  %v6523 = vshrl.u32 %v6522, 7
  %v6524 = vsub.s32 %v6521, %v6523
  %v6525 = vrot.slane %v6517, %v6524
  %v6527 = vunpack.c.l.s4 1966171168
  %v6528 = vunpack.c.0.s8 %v6527
  %v6529 = vlaneseq
  %v6530 = vshrl.u32 %v6529, 7
  %v6531 = vsub.s32 %v6528, %v6530
  %v6532 = vrot.slane %v6518, %v6531
  %v6533 = vcombine.low %v6525, %v6532
  %v6534 = vcombine.low %v3554, %v3558
  %v6535 = vcombine.low %v3562, %v3566
  %v6536 = vcombine.low %v3570, %v3574
  %v6537 = vcombine.low %v3578, %v3582
  %v6539 = vunpack.c.l.s4 1966171168
  %v6540 = vunpack.c.0.s8 %v6539
  %v6541 = vlaneseq
  %v6542 = vshrl.u32 %v6541, 7
  %v6543 = vsub.s32 %v6540, %v6542
  %v6544 = vrot.slane %v6534, %v6543
  %v6546 = vunpack.c.l.s4 1966171168
  %v6547 = vunpack.c.0.s8 %v6546
  %v6548 = vlaneseq
  %v6549 = vshrl.u32 %v6548, 7
  %v6550 = vsub.s32 %v6547, %v6549
  %v6551 = vrot.slane %v6535, %v6550
  %v6553 = vunpack.c.l.s4 1966171168
  %v6554 = vunpack.c.0.s8 %v6553
  %v6555 = vlaneseq
  %v6556 = vshrl.u32 %v6555, 7
  %v6557 = vsub.s32 %v6554, %v6556
  %v6558 = vrot.slane %v6536, %v6557
  %v6560 = vunpack.c.l.s4 1966171168
  %v6561 = vunpack.c.0.s8 %v6560
  %v6562 = vlaneseq
  %v6563 = vshrl.u32 %v6562, 7
  %v6564 = vsub.s32 %v6561, %v6563
  %v6565 = vrot.slane %v6537, %v6564
  %v6566 = vcombine.low %v6544, %v6551
  %v6567 = vcombine.low %v6558, %v6565
  %v6569 = vunpack.c.l.s4 1966171168
  %v6570 = vunpack.c.0.s8 %v6569
  %v6571 = vlaneseq
  %v6572 = vshrl.u32 %v6571, 7
  %v6573 = vsub.s32 %v6570, %v6572
  %v6574 = vrot.slane %v6566, %v6573
  %v6576 = vunpack.c.l.s4 1966171168
  %v6577 = vunpack.c.0.s8 %v6576
  %v6578 = vlaneseq
  %v6579 = vshrl.u32 %v6578, 7
  %v6580 = vsub.s32 %v6577, %v6579
  %v6581 = vrot.slane %v6567, %v6580
  %v6582 = vcombine.low %v6574, %v6581
  %v6583 = vcombine.low %v3586, %v3590
  %v6584 = vcombine.low %v3594, %v3598
  %v6585 = vcombine.low %v3602, %v3606
  %v6586 = vcombine.low %v3610, %v3614
  %v6588 = vunpack.c.l.s4 1966171168
  %v6589 = vunpack.c.0.s8 %v6588
  %v6590 = vlaneseq
  %v6591 = vshrl.u32 %v6590, 7
  %v6592 = vsub.s32 %v6589, %v6591
  %v6593 = vrot.slane %v6583, %v6592
  %v6595 = vunpack.c.l.s4 1966171168
  %v6596 = vunpack.c.0.s8 %v6595
  %v6597 = vlaneseq
  %v6598 = vshrl.u32 %v6597, 7
  %v6599 = vsub.s32 %v6596, %v6598
  %v6600 = vrot.slane %v6584, %v6599
  %v6602 = vunpack.c.l.s4 1966171168
  %v6603 = vunpack.c.0.s8 %v6602
  %v6604 = vlaneseq
  %v6605 = vshrl.u32 %v6604, 7
  %v6606 = vsub.s32 %v6603, %v6605
  %v6607 = vrot.slane %v6585, %v6606
  %v6609 = vunpack.c.l.s4 1966171168
  %v6610 = vunpack.c.0.s8 %v6609
  %v6611 = vlaneseq
  %v6612 = vshrl.u32 %v6611, 7
  %v6613 = vsub.s32 %v6610, %v6612
  %v6614 = vrot.slane %v6586, %v6613
  %v6615 = vcombine.low %v6593, %v6600
  %v6616 = vcombine.low %v6607, %v6614
  %v6618 = vunpack.c.l.s4 1966171168
  %v6619 = vunpack.c.0.s8 %v6618
  %v6620 = vlaneseq
  %v6621 = vshrl.u32 %v6620, 7
  %v6622 = vsub.s32 %v6619, %v6621
  %v6623 = vrot.slane %v6615, %v6622
  %v6625 = vunpack.c.l.s4 1966171168
  %v6626 = vunpack.c.0.s8 %v6625
  %v6627 = vlaneseq
  %v6628 = vshrl.u32 %v6627, 7
  %v6629 = vsub.s32 %v6626, %v6628
  %v6630 = vrot.slane %v6616, %v6629
  %v6631 = vcombine.low %v6623, %v6630
  %v6632 = vcombine.low %v3618, %v3622
  %v6633 = vcombine.low %v3626, %v3630
  %v6634 = vcombine.low %v3634, %v3638
  %v6635 = vcombine.low %v3642, %v3646
  %v6637 = vunpack.c.l.s4 1966171168
  %v6638 = vunpack.c.0.s8 %v6637
  %v6639 = vlaneseq
  %v6640 = vshrl.u32 %v6639, 7
  %v6641 = vsub.s32 %v6638, %v6640
  %v6642 = vrot.slane %v6632, %v6641
  %v6644 = vunpack.c.l.s4 1966171168
  %v6645 = vunpack.c.0.s8 %v6644
  %v6646 = vlaneseq
  %v6647 = vshrl.u32 %v6646, 7
  %v6648 = vsub.s32 %v6645, %v6647
  %v6649 = vrot.slane %v6633, %v6648
  %v6651 = vunpack.c.l.s4 1966171168
  %v6652 = vunpack.c.0.s8 %v6651
  %v6653 = vlaneseq
  %v6654 = vshrl.u32 %v6653, 7
  %v6655 = vsub.s32 %v6652, %v6654
  %v6656 = vrot.slane %v6634, %v6655
  %v6658 = vunpack.c.l.s4 1966171168
  %v6659 = vunpack.c.0.s8 %v6658
  %v6660 = vlaneseq
  %v6661 = vshrl.u32 %v6660, 7
  %v6662 = vsub.s32 %v6659, %v6661
  %v6663 = vrot.slane %v6635, %v6662
  %v6664 = vcombine.low %v6642, %v6649
  %v6665 = vcombine.low %v6656, %v6663
  %v6667 = vunpack.c.l.s4 1966171168
  %v6668 = vunpack.c.0.s8 %v6667
  %v6669 = vlaneseq
  %v6670 = vshrl.u32 %v6669, 7
  %v6671 = vsub.s32 %v6668, %v6670
  %v6672 = vrot.slane %v6664, %v6671
  %v6674 = vunpack.c.l.s4 1966171168
  %v6675 = vunpack.c.0.s8 %v6674
  %v6676 = vlaneseq
  %v6677 = vshrl.u32 %v6676, 7
  %v6678 = vsub.s32 %v6675, %v6677
  %v6679 = vrot.slane %v6665, %v6678
  %v6680 = vcombine.low %v6672, %v6679
  %v6681 = vcombine.low %v3650, %v3654
  %v6682 = vcombine.low %v3658, %v3662
  %v6683 = vcombine.low %v3666, %v3670
  %v6684 = vcombine.low %v3674, %v3678
  %v6686 = vunpack.c.l.s4 1966171168
  %v6687 = vunpack.c.0.s8 %v6686
  %v6688 = vlaneseq
  %v6689 = vshrl.u32 %v6688, 7
  %v6690 = vsub.s32 %v6687, %v6689
  %v6691 = vrot.slane %v6681, %v6690
  %v6693 = vunpack.c.l.s4 1966171168
  %v6694 = vunpack.c.0.s8 %v6693
  %v6695 = vlaneseq
  %v6696 = vshrl.u32 %v6695, 7
  %v6697 = vsub.s32 %v6694, %v6696
  %v6698 = vrot.slane %v6682, %v6697
  %v6700 = vunpack.c.l.s4 1966171168
  %v6701 = vunpack.c.0.s8 %v6700
  %v6702 = vlaneseq
  %v6703 = vshrl.u32 %v6702, 7
  %v6704 = vsub.s32 %v6701, %v6703
  %v6705 = vrot.slane %v6683, %v6704
  %v6707 = vunpack.c.l.s4 1966171168
  %v6708 = vunpack.c.0.s8 %v6707
  %v6709 = vlaneseq
  %v6710 = vshrl.u32 %v6709, 7
  %v6711 = vsub.s32 %v6708, %v6710
  %v6712 = vrot.slane %v6684, %v6711
  %v6713 = vcombine.low %v6691, %v6698
  %v6714 = vcombine.low %v6705, %v6712
  %v6716 = vunpack.c.l.s4 1966171168
  %v6717 = vunpack.c.0.s8 %v6716
  %v6718 = vlaneseq
  %v6719 = vshrl.u32 %v6718, 7
  %v6720 = vsub.s32 %v6717, %v6719
  %v6721 = vrot.slane %v6713, %v6720
  %v6723 = vunpack.c.l.s4 1966171168
  %v6724 = vunpack.c.0.s8 %v6723
  %v6725 = vlaneseq
  %v6726 = vshrl.u32 %v6725, 7
  %v6727 = vsub.s32 %v6724, %v6726
  %v6728 = vrot.slane %v6714, %v6727
  %v6729 = vcombine.low %v6721, %v6728
  %v6730 = vcombine.low %v3682, %v3686
  %v6731 = vcombine.low %v3690, %v3694
  %v6732 = vcombine.low %v3698, %v3702
  %v6733 = vcombine.low %v3706, %v3710
  %v6735 = vunpack.c.l.s4 1966171168
  %v6736 = vunpack.c.0.s8 %v6735
  %v6737 = vlaneseq
  %v6738 = vshrl.u32 %v6737, 7
  %v6739 = vsub.s32 %v6736, %v6738
  %v6740 = vrot.slane %v6730, %v6739
  %v6742 = vunpack.c.l.s4 1966171168
  %v6743 = vunpack.c.0.s8 %v6742
  %v6744 = vlaneseq
  %v6745 = vshrl.u32 %v6744, 7
  %v6746 = vsub.s32 %v6743, %v6745
  %v6747 = vrot.slane %v6731, %v6746
  %v6749 = vunpack.c.l.s4 1966171168
  %v6750 = vunpack.c.0.s8 %v6749
  %v6751 = vlaneseq
  %v6752 = vshrl.u32 %v6751, 7
  %v6753 = vsub.s32 %v6750, %v6752
  %v6754 = vrot.slane %v6732, %v6753
  %v6756 = vunpack.c.l.s4 1966171168
  %v6757 = vunpack.c.0.s8 %v6756
  %v6758 = vlaneseq
  %v6759 = vshrl.u32 %v6758, 7
  %v6760 = vsub.s32 %v6757, %v6759
  %v6761 = vrot.slane %v6733, %v6760
  %v6762 = vcombine.low %v6740, %v6747
  %v6763 = vcombine.low %v6754, %v6761
  %v6765 = vunpack.c.l.s4 1966171168
  %v6766 = vunpack.c.0.s8 %v6765
  %v6767 = vlaneseq
  %v6768 = vshrl.u32 %v6767, 7
  %v6769 = vsub.s32 %v6766, %v6768
  %v6770 = vrot.slane %v6762, %v6769
  %v6772 = vunpack.c.l.s4 1966171168
  %v6773 = vunpack.c.0.s8 %v6772
  %v6774 = vlaneseq
  %v6775 = vshrl.u32 %v6774, 7
  %v6776 = vsub.s32 %v6773, %v6775
  %v6777 = vrot.slane %v6763, %v6776
  %v6778 = vcombine.low %v6770, %v6777
  %v6779 = vcombine.low %v3714, %v3718
  %v6780 = vcombine.low %v3722, %v3726
  %v6781 = vcombine.low %v3730, %v3734
  %v6782 = vcombine.low %v3738, %v3742
  %v6784 = vunpack.c.l.s4 1966171168
  %v6785 = vunpack.c.0.s8 %v6784
  %v6786 = vlaneseq
  %v6787 = vshrl.u32 %v6786, 7
  %v6788 = vsub.s32 %v6785, %v6787
  %v6789 = vrot.slane %v6779, %v6788
  %v6791 = vunpack.c.l.s4 1966171168
  %v6792 = vunpack.c.0.s8 %v6791
  %v6793 = vlaneseq
  %v6794 = vshrl.u32 %v6793, 7
  %v6795 = vsub.s32 %v6792, %v6794
  %v6796 = vrot.slane %v6780, %v6795
  %v6798 = vunpack.c.l.s4 1966171168
  %v6799 = vunpack.c.0.s8 %v6798
  %v6800 = vlaneseq
  %v6801 = vshrl.u32 %v6800, 7
  %v6802 = vsub.s32 %v6799, %v6801
  %v6803 = vrot.slane %v6781, %v6802
  %v6805 = vunpack.c.l.s4 1966171168
  %v6806 = vunpack.c.0.s8 %v6805
  %v6807 = vlaneseq
  %v6808 = vshrl.u32 %v6807, 7
  %v6809 = vsub.s32 %v6806, %v6808
  %v6810 = vrot.slane %v6782, %v6809
  %v6811 = vcombine.low %v6789, %v6796
  %v6812 = vcombine.low %v6803, %v6810
  %v6814 = vunpack.c.l.s4 1966171168
  %v6815 = vunpack.c.0.s8 %v6814
  %v6816 = vlaneseq
  %v6817 = vshrl.u32 %v6816, 7
  %v6818 = vsub.s32 %v6815, %v6817
  %v6819 = vrot.slane %v6811, %v6818
  %v6821 = vunpack.c.l.s4 1966171168
  %v6822 = vunpack.c.0.s8 %v6821
  %v6823 = vlaneseq
  %v6824 = vshrl.u32 %v6823, 7
  %v6825 = vsub.s32 %v6822, %v6824
  %v6826 = vrot.slane %v6812, %v6825
  %v6827 = vcombine.low %v6819, %v6826
  %v6828 = vcombine.low %v3746, %v3750
  %v6829 = vcombine.low %v3754, %v3758
  %v6830 = vcombine.low %v3762, %v3766
  %v6831 = vcombine.low %v3770, %v3774
  %v6833 = vunpack.c.l.s4 1966171168
  %v6834 = vunpack.c.0.s8 %v6833
  %v6835 = vlaneseq
  %v6836 = vshrl.u32 %v6835, 7
  %v6837 = vsub.s32 %v6834, %v6836
  %v6838 = vrot.slane %v6828, %v6837
  %v6840 = vunpack.c.l.s4 1966171168
  %v6841 = vunpack.c.0.s8 %v6840
  %v6842 = vlaneseq
  %v6843 = vshrl.u32 %v6842, 7
  %v6844 = vsub.s32 %v6841, %v6843
  %v6845 = vrot.slane %v6829, %v6844
  %v6847 = vunpack.c.l.s4 1966171168
  %v6848 = vunpack.c.0.s8 %v6847
  %v6849 = vlaneseq
  %v6850 = vshrl.u32 %v6849, 7
  %v6851 = vsub.s32 %v6848, %v6850
  %v6852 = vrot.slane %v6830, %v6851
  %v6854 = vunpack.c.l.s4 1966171168
  %v6855 = vunpack.c.0.s8 %v6854
  %v6856 = vlaneseq
  %v6857 = vshrl.u32 %v6856, 7
  %v6858 = vsub.s32 %v6855, %v6857
  %v6859 = vrot.slane %v6831, %v6858
  %v6860 = vcombine.low %v6838, %v6845
  %v6861 = vcombine.low %v6852, %v6859
  %v6863 = vunpack.c.l.s4 1966171168
  %v6864 = vunpack.c.0.s8 %v6863
  %v6865 = vlaneseq
  %v6866 = vshrl.u32 %v6865, 7
  %v6867 = vsub.s32 %v6864, %v6866
  %v6868 = vrot.slane %v6860, %v6867
  %v6870 = vunpack.c.l.s4 1966171168
  %v6871 = vunpack.c.0.s8 %v6870
  %v6872 = vlaneseq
  %v6873 = vshrl.u32 %v6872, 7
  %v6874 = vsub.s32 %v6871, %v6873
  %v6875 = vrot.slane %v6861, %v6874
  %v6876 = vcombine.low %v6868, %v6875
  %v6877 = vcombine.low %v3778, %v3782
  %v6878 = vcombine.low %v3786, %v3790
  %v6879 = vcombine.low %v3794, %v3798
  %v6880 = vcombine.low %v3802, %v3806
  %v6882 = vunpack.c.l.s4 1966171168
  %v6883 = vunpack.c.0.s8 %v6882
  %v6884 = vlaneseq
  %v6885 = vshrl.u32 %v6884, 7
  %v6886 = vsub.s32 %v6883, %v6885
  %v6887 = vrot.slane %v6877, %v6886
  %v6889 = vunpack.c.l.s4 1966171168
  %v6890 = vunpack.c.0.s8 %v6889
  %v6891 = vlaneseq
  %v6892 = vshrl.u32 %v6891, 7
  %v6893 = vsub.s32 %v6890, %v6892
  %v6894 = vrot.slane %v6878, %v6893
  %v6896 = vunpack.c.l.s4 1966171168
  %v6897 = vunpack.c.0.s8 %v6896
  %v6898 = vlaneseq
  %v6899 = vshrl.u32 %v6898, 7
  %v6900 = vsub.s32 %v6897, %v6899
  %v6901 = vrot.slane %v6879, %v6900
  %v6903 = vunpack.c.l.s4 1966171168
  %v6904 = vunpack.c.0.s8 %v6903
  %v6905 = vlaneseq
  %v6906 = vshrl.u32 %v6905, 7
  %v6907 = vsub.s32 %v6904, %v6906
  %v6908 = vrot.slane %v6880, %v6907
  %v6909 = vcombine.low %v6887, %v6894
  %v6910 = vcombine.low %v6901, %v6908
  %v6912 = vunpack.c.l.s4 1966171168
  %v6913 = vunpack.c.0.s8 %v6912
  %v6914 = vlaneseq
  %v6915 = vshrl.u32 %v6914, 7
  %v6916 = vsub.s32 %v6913, %v6915
  %v6917 = vrot.slane %v6909, %v6916
  %v6919 = vunpack.c.l.s4 1966171168
  %v6920 = vunpack.c.0.s8 %v6919
  %v6921 = vlaneseq
  %v6922 = vshrl.u32 %v6921, 7
  %v6923 = vsub.s32 %v6920, %v6922
  %v6924 = vrot.slane %v6910, %v6923
  %v6925 = vcombine.low %v6917, %v6924
  %v6926 = vcombine.low %v3810, %v3814
  %v6927 = vcombine.low %v3818, %v3822
  %v6928 = vcombine.low %v3826, %v3830
  %v6929 = vcombine.low %v3834, %v3838
  %v6931 = vunpack.c.l.s4 1966171168
  %v6932 = vunpack.c.0.s8 %v6931
  %v6933 = vlaneseq
  %v6934 = vshrl.u32 %v6933, 7
  %v6935 = vsub.s32 %v6932, %v6934
  %v6936 = vrot.slane %v6926, %v6935
  %v6938 = vunpack.c.l.s4 1966171168
  %v6939 = vunpack.c.0.s8 %v6938
  %v6940 = vlaneseq
  %v6941 = vshrl.u32 %v6940, 7
  %v6942 = vsub.s32 %v6939, %v6941
  %v6943 = vrot.slane %v6927, %v6942
  %v6945 = vunpack.c.l.s4 1966171168
  %v6946 = vunpack.c.0.s8 %v6945
  %v6947 = vlaneseq
  %v6948 = vshrl.u32 %v6947, 7
  %v6949 = vsub.s32 %v6946, %v6948
  %v6950 = vrot.slane %v6928, %v6949
  %v6952 = vunpack.c.l.s4 1966171168
  %v6953 = vunpack.c.0.s8 %v6952
  %v6954 = vlaneseq
  %v6955 = vshrl.u32 %v6954, 7
  %v6956 = vsub.s32 %v6953, %v6955
  %v6957 = vrot.slane %v6929, %v6956
  %v6958 = vcombine.low %v6936, %v6943
  %v6959 = vcombine.low %v6950, %v6957
  %v6961 = vunpack.c.l.s4 1966171168
  %v6962 = vunpack.c.0.s8 %v6961
  %v6963 = vlaneseq
  %v6964 = vshrl.u32 %v6963, 7
  %v6965 = vsub.s32 %v6962, %v6964
  %v6966 = vrot.slane %v6958, %v6965
  %v6968 = vunpack.c.l.s4 1966171168
  %v6969 = vunpack.c.0.s8 %v6968
  %v6970 = vlaneseq
  %v6971 = vshrl.u32 %v6970, 7
  %v6972 = vsub.s32 %v6969, %v6971
  %v6973 = vrot.slane %v6959, %v6972
  %v6974 = vcombine.low %v6966, %v6973
  %6975 = vset.pattern.permute.xlu0 0
  %6976 = vperm.xlu0 %6975, %v3887
  %v6977 = vpop.permute.xlu0 %6976
  %6978 = vset.pattern.permute.xlu0 0
  %6979 = vperm.xlu0 %6978, %v3936
  %v6980 = vpop.permute.xlu0 %6979
  %6981 = vset.pattern.permute.xlu0 0
  %6982 = vperm.xlu0 %6981, %v3985
  %v6983 = vpop.permute.xlu0 %6982
  %6984 = vset.pattern.permute.xlu0 0
  %6985 = vperm.xlu0 %6984, %v4034
  %v6986 = vpop.permute.xlu0 %6985
  %6987 = vset.pattern.permute.xlu0 0
  %6988 = vperm.xlu0 %6987, %v4083
  %v6989 = vpop.permute.xlu0 %6988
  %6990 = vset.pattern.permute.xlu0 0
  %6991 = vperm.xlu0 %6990, %v4132
  %v6992 = vpop.permute.xlu0 %6991
  %6993 = vset.pattern.permute.xlu0 0
  %6994 = vperm.xlu0 %6993, %v4181
  %v6995 = vpop.permute.xlu0 %6994
  %6996 = vset.pattern.permute.xlu0 0
  %6997 = vperm.xlu0 %6996, %v4230
  %v6998 = vpop.permute.xlu0 %6997
  %6999 = vset.pattern.permute.xlu0 0
  %7000 = vperm.xlu0 %6999, %v4279
  %v7001 = vpop.permute.xlu0 %7000
  %7002 = vset.pattern.permute.xlu0 0
  %7003 = vperm.xlu0 %7002, %v4328
  %v7004 = vpop.permute.xlu0 %7003
  %7005 = vset.pattern.permute.xlu0 0
  %7006 = vperm.xlu0 %7005, %v4377
  %v7007 = vpop.permute.xlu0 %7006
  %7008 = vset.pattern.permute.xlu0 0
  %7009 = vperm.xlu0 %7008, %v4426
  %v7010 = vpop.permute.xlu0 %7009
  %7011 = vset.pattern.permute.xlu0 0
  %7012 = vperm.xlu0 %7011, %v4475
  %v7013 = vpop.permute.xlu0 %7012
  %7014 = vset.pattern.permute.xlu0 0
  %7015 = vperm.xlu0 %7014, %v4524
  %v7016 = vpop.permute.xlu0 %7015
  %7017 = vset.pattern.permute.xlu0 0
  %7018 = vperm.xlu0 %7017, %v4573
  %v7019 = vpop.permute.xlu0 %7018
  %7020 = vset.pattern.permute.xlu0 0
  %7021 = vperm.xlu0 %7020, %v4622
  %v7022 = vpop.permute.xlu0 %7021
  %7023 = vset.pattern.permute.xlu0 0
  %7024 = vperm.xlu0 %7023, %v4671
  %v7025 = vpop.permute.xlu0 %7024
  %7026 = vset.pattern.permute.xlu0 0
  %7027 = vperm.xlu0 %7026, %v4720
  %v7028 = vpop.permute.xlu0 %7027
  %7029 = vset.pattern.permute.xlu0 0
  %7030 = vperm.xlu0 %7029, %v4769
  %v7031 = vpop.permute.xlu0 %7030
  %7032 = vset.pattern.permute.xlu0 0
  %7033 = vperm.xlu0 %7032, %v4818
  %v7034 = vpop.permute.xlu0 %7033
  %7035 = vset.pattern.permute.xlu0 0
  %7036 = vperm.xlu0 %7035, %v4867
  %v7037 = vpop.permute.xlu0 %7036
  %7038 = vset.pattern.permute.xlu0 0
  %7039 = vperm.xlu0 %7038, %v4916
  %v7040 = vpop.permute.xlu0 %7039
  %7041 = vset.pattern.permute.xlu0 0
  %7042 = vperm.xlu0 %7041, %v4965
  %v7043 = vpop.permute.xlu0 %7042
  %7044 = vset.pattern.permute.xlu0 0
  %7045 = vperm.xlu0 %7044, %v5014
  %v7046 = vpop.permute.xlu0 %7045
  %7047 = vset.pattern.permute.xlu0 0
  %7048 = vperm.xlu0 %7047, %v5063
  %v7049 = vpop.permute.xlu0 %7048
  %7050 = vset.pattern.permute.xlu0 0
  %7051 = vperm.xlu0 %7050, %v5112
  %v7052 = vpop.permute.xlu0 %7051
  %7053 = vset.pattern.permute.xlu0 0
  %7054 = vperm.xlu0 %7053, %v5161
  %v7055 = vpop.permute.xlu0 %7054
  %7056 = vset.pattern.permute.xlu0 0
  %7057 = vperm.xlu0 %7056, %v5210
  %v7058 = vpop.permute.xlu0 %7057
  %7059 = vset.pattern.permute.xlu0 0
  %7060 = vperm.xlu0 %7059, %v5259
  %v7061 = vpop.permute.xlu0 %7060
  %7062 = vset.pattern.permute.xlu0 0
  %7063 = vperm.xlu0 %7062, %v5308
  %v7064 = vpop.permute.xlu0 %7063
  %7065 = vset.pattern.permute.xlu0 0
  %7066 = vperm.xlu0 %7065, %v5357
  %v7067 = vpop.permute.xlu0 %7066
  %7068 = vset.pattern.permute.xlu0 0
  %7069 = vperm.xlu0 %7068, %v5406
  %v7070 = vpop.permute.xlu0 %7069
  %7071 = vset.pattern.permute.xlu0 0
  %7072 = vperm.xlu0 %7071, %v5455
  %v7073 = vpop.permute.xlu0 %7072
  %7074 = vset.pattern.permute.xlu0 0
  %7075 = vperm.xlu0 %7074, %v5504
  %v7076 = vpop.permute.xlu0 %7075
  %7077 = vset.pattern.permute.xlu0 0
  %7078 = vperm.xlu0 %7077, %v5553
  %v7079 = vpop.permute.xlu0 %7078
  %7080 = vset.pattern.permute.xlu0 0
  %7081 = vperm.xlu0 %7080, %v5602
  %v7082 = vpop.permute.xlu0 %7081
  %7083 = vset.pattern.permute.xlu0 0
  %7084 = vperm.xlu0 %7083, %v5651
  %v7085 = vpop.permute.xlu0 %7084
  %7086 = vset.pattern.permute.xlu0 0
  %7087 = vperm.xlu0 %7086, %v5700
  %v7088 = vpop.permute.xlu0 %7087
  %7089 = vset.pattern.permute.xlu0 0
  %7090 = vperm.xlu0 %7089, %v5749
  %v7091 = vpop.permute.xlu0 %7090
  %7092 = vset.pattern.permute.xlu0 0
  %7093 = vperm.xlu0 %7092, %v5798
  %v7094 = vpop.permute.xlu0 %7093
  %7095 = vset.pattern.permute.xlu0 0
  %7096 = vperm.xlu0 %7095, %v5847
  %v7097 = vpop.permute.xlu0 %7096
  %7098 = vset.pattern.permute.xlu0 0
  %7099 = vperm.xlu0 %7098, %v5896
  %v7100 = vpop.permute.xlu0 %7099
  %7101 = vset.pattern.permute.xlu0 0
  %7102 = vperm.xlu0 %7101, %v5945
  %v7103 = vpop.permute.xlu0 %7102
  %7104 = vset.pattern.permute.xlu0 0
  %7105 = vperm.xlu0 %7104, %v5994
  %v7106 = vpop.permute.xlu0 %7105
  %7107 = vset.pattern.permute.xlu0 0
  %7108 = vperm.xlu0 %7107, %v6043
  %v7109 = vpop.permute.xlu0 %7108
  %7110 = vset.pattern.permute.xlu0 0
  %7111 = vperm.xlu0 %7110, %v6092
  %v7112 = vpop.permute.xlu0 %7111
  %7113 = vset.pattern.permute.xlu0 0
  %7114 = vperm.xlu0 %7113, %v6141
  %v7115 = vpop.permute.xlu0 %7114
  %7116 = vset.pattern.permute.xlu0 0
  %7117 = vperm.xlu0 %7116, %v6190
  %v7118 = vpop.permute.xlu0 %7117
  %7119 = vset.pattern.permute.xlu0 0
  %7120 = vperm.xlu0 %7119, %v6239
  %v7121 = vpop.permute.xlu0 %7120
  %7122 = vset.pattern.permute.xlu0 0
  %7123 = vperm.xlu0 %7122, %v6288
  %v7124 = vpop.permute.xlu0 %7123
  %7125 = vset.pattern.permute.xlu0 0
  %7126 = vperm.xlu0 %7125, %v6337
  %v7127 = vpop.permute.xlu0 %7126
  %7128 = vset.pattern.permute.xlu0 0
  %7129 = vperm.xlu0 %7128, %v6386
  %v7130 = vpop.permute.xlu0 %7129
  %7131 = vset.pattern.permute.xlu0 0
  %7132 = vperm.xlu0 %7131, %v6435
  %v7133 = vpop.permute.xlu0 %7132
  %7134 = vset.pattern.permute.xlu0 0
  %7135 = vperm.xlu0 %7134, %v6484
  %v7136 = vpop.permute.xlu0 %7135
  %7137 = vset.pattern.permute.xlu0 0
  %7138 = vperm.xlu0 %7137, %v6533
  %v7139 = vpop.permute.xlu0 %7138
  %7140 = vset.pattern.permute.xlu0 0
  %7141 = vperm.xlu0 %7140, %v6582
  %v7142 = vpop.permute.xlu0 %7141
  %7143 = vset.pattern.permute.xlu0 0
  %7144 = vperm.xlu0 %7143, %v6631
  %v7145 = vpop.permute.xlu0 %7144
  %7146 = vset.pattern.permute.xlu0 0
  %7147 = vperm.xlu0 %7146, %v6680
  %v7148 = vpop.permute.xlu0 %7147
  %7149 = vset.pattern.permute.xlu0 0
  %7150 = vperm.xlu0 %7149, %v6729
  %v7151 = vpop.permute.xlu0 %7150
  %7152 = vset.pattern.permute.xlu0 0
  %7153 = vperm.xlu0 %7152, %v6778
  %v7154 = vpop.permute.xlu0 %7153
  %7155 = vset.pattern.permute.xlu0 0
  %7156 = vperm.xlu0 %7155, %v6827
  %v7157 = vpop.permute.xlu0 %7156
  %7158 = vset.pattern.permute.xlu0 0
  %7159 = vperm.xlu0 %7158, %v6876
  %v7160 = vpop.permute.xlu0 %7159
  %7161 = vset.pattern.permute.xlu0 0
  %7162 = vperm.xlu0 %7161, %v6925
  %v7163 = vpop.permute.xlu0 %7162
  %7164 = vset.pattern.permute.xlu0 0
  %7165 = vperm.xlu0 %7164, %v6974
  %v7166 = vpop.permute.xlu0 %7165
  %v7167 = vlaneseq
  %v7168 = vand.u32 %v7167, 127
  %v7169 = vlaneseq
  %v7170 = vshrl.u32 %v7169, 7
  %v7171 = vsub.s32 %v7168, %v7170
  %v7172 = vrot.slane %v6977, %v7171
  %v7173 = vadd.s32 %v7168, 4294967288
  %v7174 = vlaneseq
  %v7175 = vshrl.u32 %v7174, 7
  %v7176 = vsub.s32 %v7173, %v7175
  %v7177 = vrot.slane %v6980, %v7176
  %vm7178 = vcmask 130112
  %v7179 = vsel %vm7178, %v7177, %v7172
  %v7180 = vadd.s32 %v7168, 4294967280
  %v7181 = vlaneseq
  %v7182 = vshrl.u32 %v7181, 7
  %v7183 = vsub.s32 %v7180, %v7182
  %v7184 = vrot.slane %v6983, %v7183
  %vm7185 = vcmask 195712
  %v7186 = vsel %vm7185, %v7184, %v7179
  %v7187 = vadd.s32 %v7168, 4294967272
  %v7188 = vlaneseq
  %v7189 = vshrl.u32 %v7188, 7
  %v7190 = vsub.s32 %v7187, %v7189
  %v7191 = vrot.slane %v6986, %v7190
  %vm7192 = vcmask 261312
  %v7193 = vsel %vm7192, %v7191, %v7186
  %v7194 = vadd.s32 %v7168, 4294967264
  %v7195 = vlaneseq
  %v7196 = vshrl.u32 %v7195, 7
  %v7197 = vsub.s32 %v7194, %v7196
  %v7198 = vrot.slane %v6989, %v7197
  %vm7199 = vcmask 326912
  %v7200 = vsel %vm7199, %v7198, %v7193
  %v7201 = vadd.s32 %v7168, 4294967256
  %v7202 = vlaneseq
  %v7203 = vshrl.u32 %v7202, 7
  %v7204 = vsub.s32 %v7201, %v7203
  %v7205 = vrot.slane %v6992, %v7204
  %vm7206 = vcmask 392512
  %v7207 = vsel %vm7206, %v7205, %v7200
  %v7208 = vadd.s32 %v7168, 4294967248
  %v7209 = vlaneseq
  %v7210 = vshrl.u32 %v7209, 7
  %v7211 = vsub.s32 %v7208, %v7210
  %v7212 = vrot.slane %v6995, %v7211
  %vm7213 = vcmask 458112
  %v7214 = vsel %vm7213, %v7212, %v7207
  %v7215 = vadd.s32 %v7168, 4294967240
  %v7216 = vlaneseq
  %v7217 = vshrl.u32 %v7216, 7
  %v7218 = vsub.s32 %v7215, %v7217
  %v7219 = vrot.slane %v6998, %v7218
  %vm7220 = vcmask 523712
  %v7221 = vsel %vm7220, %v7219, %v7214
  %v7222 = vadd.s32 %v7168, 4294967232
  %v7223 = vlaneseq
  %v7224 = vshrl.u32 %v7223, 7
  %v7225 = vsub.s32 %v7222, %v7224
  %v7226 = vrot.slane %v7001, %v7225
  %vm7227 = vcmask 589312
  %v7228 = vsel %vm7227, %v7226, %v7221
  %v7229 = vadd.s32 %v7168, 4294967224
  %v7230 = vlaneseq
  %v7231 = vshrl.u32 %v7230, 7
  %v7232 = vsub.s32 %v7229, %v7231
  %v7233 = vrot.slane %v7004, %v7232
  %vm7234 = vcmask 654912
  %v7235 = vsel %vm7234, %v7233, %v7228
  %v7236 = vadd.s32 %v7168, 4294967216
  %v7237 = vlaneseq
  %v7238 = vshrl.u32 %v7237, 7
  %v7239 = vsub.s32 %v7236, %v7238
  %v7240 = vrot.slane %v7007, %v7239
  %vm7241 = vcmask 720512
  %v7242 = vsel %vm7241, %v7240, %v7235
  %v7243 = vadd.s32 %v7168, 4294967208
  %v7244 = vlaneseq
  %v7245 = vshrl.u32 %v7244, 7
  %v7246 = vsub.s32 %v7243, %v7245
  %v7247 = vrot.slane %v7010, %v7246
  %vm7248 = vcmask 786112
  %v7249 = vsel %vm7248, %v7247, %v7242
  %v7250 = vadd.s32 %v7168, 4294967200
  %v7251 = vlaneseq
  %v7252 = vshrl.u32 %v7251, 7
  %v7253 = vsub.s32 %v7250, %v7252
  %v7254 = vrot.slane %v7013, %v7253
  %vm7255 = vcmask 851712
  %v7256 = vsel %vm7255, %v7254, %v7249
  %v7257 = vadd.s32 %v7168, 4294967192
  %v7258 = vlaneseq
  %v7259 = vshrl.u32 %v7258, 7
  %v7260 = vsub.s32 %v7257, %v7259
  %v7261 = vrot.slane %v7016, %v7260
  %vm7262 = vcmask 917312
  %v7263 = vsel %vm7262, %v7261, %v7256
  %v7264 = vadd.s32 %v7168, 4294967184
  %v7265 = vlaneseq
  %v7266 = vshrl.u32 %v7265, 7
  %v7267 = vsub.s32 %v7264, %v7266
  %v7268 = vrot.slane %v7019, %v7267
  %vm7269 = vcmask 982912
  %v7270 = vsel %vm7269, %v7268, %v7263
  %v7271 = vadd.s32 %v7168, 4294967176
  %v7272 = vlaneseq
  %v7273 = vshrl.u32 %v7272, 7
  %v7274 = vsub.s32 %v7271, %v7273
  %v7275 = vrot.slane %v7022, %v7274
  %vm7276 = vcmask 1048512
  %v7277 = vsel %vm7276, %v7275, %v7270
  %v7278 = vlaneseq
  %v7279 = vshrl.u32 %v7278, 7
  %v7280 = vsub.s32 %v7168, %v7279
  %v7281 = vrot.slane %v7025, %v7280
  %v7282 = vlaneseq
  %v7283 = vshrl.u32 %v7282, 7
  %v7284 = vsub.s32 %v7173, %v7283
  %v7285 = vrot.slane %v7028, %v7284
  %v7286 = vsel %vm7178, %v7285, %v7281
  %v7287 = vlaneseq
  %v7288 = vshrl.u32 %v7287, 7
  %v7289 = vsub.s32 %v7180, %v7288
  %v7290 = vrot.slane %v7031, %v7289
  %v7291 = vsel %vm7185, %v7290, %v7286
  %v7292 = vlaneseq
  %v7293 = vshrl.u32 %v7292, 7
  %v7294 = vsub.s32 %v7187, %v7293
  %v7295 = vrot.slane %v7034, %v7294
  %v7296 = vsel %vm7192, %v7295, %v7291
  %v7297 = vlaneseq
  %v7298 = vshrl.u32 %v7297, 7
  %v7299 = vsub.s32 %v7194, %v7298
  %v7300 = vrot.slane %v7037, %v7299
  %v7301 = vsel %vm7199, %v7300, %v7296
  %v7302 = vlaneseq
  %v7303 = vshrl.u32 %v7302, 7
  %v7304 = vsub.s32 %v7201, %v7303
  %v7305 = vrot.slane %v7040, %v7304
  %v7306 = vsel %vm7206, %v7305, %v7301
  %v7307 = vlaneseq
  %v7308 = vshrl.u32 %v7307, 7
  %v7309 = vsub.s32 %v7208, %v7308
  %v7310 = vrot.slane %v7043, %v7309
  %v7311 = vsel %vm7213, %v7310, %v7306
  %v7312 = vlaneseq
  %v7313 = vshrl.u32 %v7312, 7
  %v7314 = vsub.s32 %v7215, %v7313
  %v7315 = vrot.slane %v7046, %v7314
  %v7316 = vsel %vm7220, %v7315, %v7311
  %v7317 = vlaneseq
  %v7318 = vshrl.u32 %v7317, 7
  %v7319 = vsub.s32 %v7222, %v7318
  %v7320 = vrot.slane %v7049, %v7319
  %v7321 = vsel %vm7227, %v7320, %v7316
  %v7322 = vlaneseq
  %v7323 = vshrl.u32 %v7322, 7
  %v7324 = vsub.s32 %v7229, %v7323
  %v7325 = vrot.slane %v7052, %v7324
  %v7326 = vsel %vm7234, %v7325, %v7321
  %v7327 = vlaneseq
  %v7328 = vshrl.u32 %v7327, 7
  %v7329 = vsub.s32 %v7236, %v7328
  %v7330 = vrot.slane %v7055, %v7329
  %v7331 = vsel %vm7241, %v7330, %v7326
  %v7332 = vlaneseq
  %v7333 = vshrl.u32 %v7332, 7
  %v7334 = vsub.s32 %v7243, %v7333
  %v7335 = vrot.slane %v7058, %v7334
  %v7336 = vsel %vm7248, %v7335, %v7331
  %v7337 = vlaneseq
  %v7338 = vshrl.u32 %v7337, 7
  %v7339 = vsub.s32 %v7250, %v7338
  %v7340 = vrot.slane %v7061, %v7339
  %v7341 = vsel %vm7255, %v7340, %v7336
  %v7342 = vlaneseq
  %v7343 = vshrl.u32 %v7342, 7
  %v7344 = vsub.s32 %v7257, %v7343
  %v7345 = vrot.slane %v7064, %v7344
  %v7346 = vsel %vm7262, %v7345, %v7341
  %v7347 = vlaneseq
  %v7348 = vshrl.u32 %v7347, 7
  %v7349 = vsub.s32 %v7264, %v7348
  %v7350 = vrot.slane %v7067, %v7349
  %v7351 = vsel %vm7269, %v7350, %v7346
  %v7352 = vlaneseq
  %v7353 = vshrl.u32 %v7352, 7
  %v7354 = vsub.s32 %v7271, %v7353
  %v7355 = vrot.slane %v7070, %v7354
  %v7356 = vsel %vm7276, %v7355, %v7351
  %v7357 = vlaneseq
  %v7358 = vshrl.u32 %v7357, 7
  %v7359 = vsub.s32 %v7168, %v7358
  %v7360 = vrot.slane %v7073, %v7359
  %v7361 = vlaneseq
  %v7362 = vshrl.u32 %v7361, 7
  %v7363 = vsub.s32 %v7173, %v7362
  %v7364 = vrot.slane %v7076, %v7363
  %v7365 = vsel %vm7178, %v7364, %v7360
  %v7366 = vlaneseq
  %v7367 = vshrl.u32 %v7366, 7
  %v7368 = vsub.s32 %v7180, %v7367
  %v7369 = vrot.slane %v7079, %v7368
  %v7370 = vsel %vm7185, %v7369, %v7365
  %v7371 = vlaneseq
  %v7372 = vshrl.u32 %v7371, 7
  %v7373 = vsub.s32 %v7187, %v7372
  %v7374 = vrot.slane %v7082, %v7373
  %v7375 = vsel %vm7192, %v7374, %v7370
  %v7376 = vlaneseq
  %v7377 = vshrl.u32 %v7376, 7
  %v7378 = vsub.s32 %v7194, %v7377
  %v7379 = vrot.slane %v7085, %v7378
  %v7380 = vsel %vm7199, %v7379, %v7375
  %v7381 = vlaneseq
  %v7382 = vshrl.u32 %v7381, 7
  %v7383 = vsub.s32 %v7201, %v7382
  %v7384 = vrot.slane %v7088, %v7383
  %v7385 = vsel %vm7206, %v7384, %v7380
  %v7386 = vlaneseq
  %v7387 = vshrl.u32 %v7386, 7
  %v7388 = vsub.s32 %v7208, %v7387
  %v7389 = vrot.slane %v7091, %v7388
  %v7390 = vsel %vm7213, %v7389, %v7385
  %v7391 = vlaneseq
  %v7392 = vshrl.u32 %v7391, 7
  %v7393 = vsub.s32 %v7215, %v7392
  %v7394 = vrot.slane %v7094, %v7393
  %v7395 = vsel %vm7220, %v7394, %v7390
  %v7396 = vlaneseq
  %v7397 = vshrl.u32 %v7396, 7
  %v7398 = vsub.s32 %v7222, %v7397
  %v7399 = vrot.slane %v7097, %v7398
  %v7400 = vsel %vm7227, %v7399, %v7395
  %v7401 = vlaneseq
  %v7402 = vshrl.u32 %v7401, 7
  %v7403 = vsub.s32 %v7229, %v7402
  %v7404 = vrot.slane %v7100, %v7403
  %v7405 = vsel %vm7234, %v7404, %v7400
  %v7406 = vlaneseq
  %v7407 = vshrl.u32 %v7406, 7
  %v7408 = vsub.s32 %v7236, %v7407
  %v7409 = vrot.slane %v7103, %v7408
  %v7410 = vsel %vm7241, %v7409, %v7405
  %v7411 = vlaneseq
  %v7412 = vshrl.u32 %v7411, 7
  %v7413 = vsub.s32 %v7243, %v7412
  %v7414 = vrot.slane %v7106, %v7413
  %v7415 = vsel %vm7248, %v7414, %v7410
  %v7416 = vlaneseq
  %v7417 = vshrl.u32 %v7416, 7
  %v7418 = vsub.s32 %v7250, %v7417
  %v7419 = vrot.slane %v7109, %v7418
  %v7420 = vsel %vm7255, %v7419, %v7415
  %v7421 = vlaneseq
  %v7422 = vshrl.u32 %v7421, 7
  %v7423 = vsub.s32 %v7257, %v7422
  %v7424 = vrot.slane %v7112, %v7423
  %v7425 = vsel %vm7262, %v7424, %v7420
  %v7426 = vlaneseq
  %v7427 = vshrl.u32 %v7426, 7
  %v7428 = vsub.s32 %v7264, %v7427
  %v7429 = vrot.slane %v7115, %v7428
  %v7430 = vsel %vm7269, %v7429, %v7425
  %v7431 = vlaneseq
  %v7432 = vshrl.u32 %v7431, 7
  %v7433 = vsub.s32 %v7271, %v7432
  %v7434 = vrot.slane %v7118, %v7433
  %v7435 = vsel %vm7276, %v7434, %v7430
  %v7436 = vlaneseq
  %v7437 = vshrl.u32 %v7436, 7
  %v7438 = vsub.s32 %v7168, %v7437
  %v7439 = vrot.slane %v7121, %v7438
  %v7440 = vlaneseq
  %v7441 = vshrl.u32 %v7440, 7
  %v7442 = vsub.s32 %v7173, %v7441
  %v7443 = vrot.slane %v7124, %v7442
  %v7444 = vsel %vm7178, %v7443, %v7439
  %v7445 = vlaneseq
  %v7446 = vshrl.u32 %v7445, 7
  %v7447 = vsub.s32 %v7180, %v7446
  %v7448 = vrot.slane %v7127, %v7447
  %v7449 = vsel %vm7185, %v7448, %v7444
  %v7450 = vlaneseq
  %v7451 = vshrl.u32 %v7450, 7
  %v7452 = vsub.s32 %v7187, %v7451
  %v7453 = vrot.slane %v7130, %v7452
  %v7454 = vsel %vm7192, %v7453, %v7449
  %v7455 = vlaneseq
  %v7456 = vshrl.u32 %v7455, 7
  %v7457 = vsub.s32 %v7194, %v7456
  %v7458 = vrot.slane %v7133, %v7457
  %v7459 = vsel %vm7199, %v7458, %v7454
  %v7460 = vlaneseq
  %v7461 = vshrl.u32 %v7460, 7
  %v7462 = vsub.s32 %v7201, %v7461
  %v7463 = vrot.slane %v7136, %v7462
  %v7464 = vsel %vm7206, %v7463, %v7459
  %v7465 = vlaneseq
  %v7466 = vshrl.u32 %v7465, 7
  %v7467 = vsub.s32 %v7208, %v7466
  %v7468 = vrot.slane %v7139, %v7467
  %v7469 = vsel %vm7213, %v7468, %v7464
  %v7470 = vlaneseq
  %v7471 = vshrl.u32 %v7470, 7
  %v7472 = vsub.s32 %v7215, %v7471
  %v7473 = vrot.slane %v7142, %v7472
  %v7474 = vsel %vm7220, %v7473, %v7469
  %v7475 = vlaneseq
  %v7476 = vshrl.u32 %v7475, 7
  %v7477 = vsub.s32 %v7222, %v7476
  %v7478 = vrot.slane %v7145, %v7477
  %v7479 = vsel %vm7227, %v7478, %v7474
  %v7480 = vlaneseq
  %v7481 = vshrl.u32 %v7480, 7
  %v7482 = vsub.s32 %v7229, %v7481
  %v7483 = vrot.slane %v7148, %v7482
  %v7484 = vsel %vm7234, %v7483, %v7479
  %v7485 = vlaneseq
  %v7486 = vshrl.u32 %v7485, 7
  %v7487 = vsub.s32 %v7236, %v7486
  %v7488 = vrot.slane %v7151, %v7487
  %v7489 = vsel %vm7241, %v7488, %v7484
  %v7490 = vlaneseq
  %v7491 = vshrl.u32 %v7490, 7
  %v7492 = vsub.s32 %v7243, %v7491
  %v7493 = vrot.slane %v7154, %v7492
  %v7494 = vsel %vm7248, %v7493, %v7489
  %v7495 = vlaneseq
  %v7496 = vshrl.u32 %v7495, 7
  %v7497 = vsub.s32 %v7250, %v7496
  %v7498 = vrot.slane %v7157, %v7497
  %v7499 = vsel %vm7255, %v7498, %v7494
  %v7500 = vlaneseq
  %v7501 = vshrl.u32 %v7500, 7
  %v7502 = vsub.s32 %v7257, %v7501
  %v7503 = vrot.slane %v7160, %v7502
  %v7504 = vsel %vm7262, %v7503, %v7499
  %v7505 = vlaneseq
  %v7506 = vshrl.u32 %v7505, 7
  %v7507 = vsub.s32 %v7264, %v7506
  %v7508 = vrot.slane %v7163, %v7507
  %v7509 = vsel %vm7269, %v7508, %v7504
  %v7510 = vlaneseq
  %v7511 = vshrl.u32 %v7510, 7
  %v7512 = vsub.s32 %v7271, %v7511
  %v7513 = vrot.slane %v7166, %v7512
  %v7514 = vsel %vm7276, %v7513, %v7509
  %v7515 = vcombine.low %v7277, %v7356
  %v7516 = vcombine.low %v7435, %v7514
  %v7518 = vunpack.c.l.s4 1966171168
  %v7519 = vunpack.c.0.s8 %v7518
  %v7520 = vlaneseq
  %v7521 = vshrl.u32 %v7520, 7
  %v7522 = vsub.s32 %v7519, %v7521
  %v7523 = vrot.slane %v7515, %v7522
  %v7525 = vunpack.c.l.s4 1966171168
  %v7526 = vunpack.c.0.s8 %v7525
  %v7527 = vlaneseq
  %v7528 = vshrl.u32 %v7527, 7
  %v7529 = vsub.s32 %v7526, %v7528
  %v7530 = vrot.slane %v7516, %v7529
  %v7531 = vcombine.low %v7523, %v7530
  %v7533 = vunpack.c.l.s4 1966171168
  %v7534 = vunpack.c.0.s8 %v7533
  %v7535 = vlaneseq
  %v7536 = vshrl.u32 %v7535, 7
  %v7537 = vsub.s32 %v7534, %v7536
  %v7538 = vrot.slane %v7531, %v7537
  %v7540 = vlaneseq
  %vm7541 = vcmp.ge.s32.totalorder %v7540, 0
  %vm7542 = vcmp.lt.s32.totalorder %v7540, 512
  %vm7543 = vmand %vm7541, %vm7542
  %7544 = vst.msk [vmem:[%s7] sm:$0xf] %vm7543, %v7538
  // Predicated region
  $region30: #{critic_forward.1} parent=0 // pred_check
    _
  $region31: #{critic_forward.1} parent=0 // pred_check_branch
    %7546 = sbr.rel (0) target = $region33
  $region32: #{critic_forward.1} parent=0 // pred_region
    _
  $region33: #{critic_forward.1} parent=0 // pred_fallthru
    _
  // Predicated region
  $region34: #{critic_forward.1} parent=0 // pred_check
    _
  $region35: #{critic_forward.1} parent=0 // pred_check_branch
    %7548 = sbr.rel (0) target = $region37
  $region36: #{critic_forward.1} parent=0 // pred_region
    _
  $region37: #{critic_forward.1} parent=0 // pred_fallthru
    _

</llo_original>
